<compile_context>
chip_gen: v5e
topology: v5e:2x2
jax: 0.10.0
libtpu: 0.0.40
codegen_flags: <defaults>
</compile_context>

<pallas_src>
import jax
import jax.numpy as jnp
from jax import lax
from jax.experimental import pallas as pl
from jax.experimental.pallas import tpu as pltpu

_R = 2        # radius of each cascaded 5x5 "same" max pool
_STAGES = 3   # cascade of 5x5 pools -> effective windows 5, 9, 13


def _spp_kernel(x_ref, o5_ref, o9_ref, o13_ref, vpad_ref, hpad_ref):
    """One (batch, channel-tile) grid step.

    x_ref   : (1, H, W, ct)     NHWC input tile (lanes = channels)
    o*_ref  : (1, H, W, ct)     pooled outputs for windows 5 / 9 / 13
    vpad_ref: (H + 2R, W, ct)   scratch, -inf rows top/bottom (vertical pass)
    hpad_ref: (H, W + 2R, ct)   scratch, -inf cols left/right (horizontal pass)
    """
    _, H, W, ct = x_ref.shape
    dtype = x_ref.dtype
    if jnp.issubdtype(dtype, jnp.floating):
        neg = -jnp.inf
    else:
        # TODO(synk): integer inputs use iinfo.min instead of -inf padding.
        neg = jnp.iinfo(dtype).min

    # -inf borders: centers are rewritten every stage, borders never are.
    vpad_ref[pl.ds(0, _R), :, :] = jnp.full((_R, W, ct), neg, dtype)
    vpad_ref[pl.ds(_R + H, _R), :, :] = jnp.full((_R, W, ct), neg, dtype)
    hpad_ref[:, pl.ds(0, _R), :] = jnp.full((H, _R, ct), neg, dtype)
    hpad_ref[:, pl.ds(_R + W, _R), :] = jnp.full((H, _R, ct), neg, dtype)

    cur = x_ref[0]                                  # (H, W, ct)
    for o_ref in (o5_ref, o9_ref, o13_ref):         # cascaded 5x5 "same" pools
        # ---- vertical (H) max pass: H is a major axis -> cheap offset reads.
        vpad_ref[pl.ds(_R, H), :, :] = cur
        v = vpad_ref[pl.ds(0, H), :, :]
        for i in range(1, 2 * _R + 1):
            v = jnp.maximum(v, vpad_ref[pl.ds(i, H), :, :])
        # ---- horizontal (W) max pass: W is the sublane axis.
        hpad_ref[:, pl.ds(_R, W), :] = v
        p = hpad_ref[:, pl.ds(0, W), :]
        for j in range(1, 2 * _R + 1):
            p = jnp.maximum(p, hpad_ref[:, pl.ds(j, W), :])
        o_ref[0] = p                                # direct slab write, no concat temp
        cur = p


def _channel_tile(C, H, W, itemsize, budget_bytes=6 * 1024 * 1024):
    """Largest channel tile whose per-grid-step VMEM footprint fits the budget."""
    # double-buffered input + 3 double-buffered outputs + the two scratch pads
    per_ch = (2 * H * W + 3 * 2 * H * W
              + (H + 2 * _R) * W + H * (W + 2 * _R)) * itemsize
    max_ct = max(1, budget_bytes // per_ch)
    if C <= max_ct:
        return C
    if C % 128 == 0 and max_ct >= 128:
        return int(min(C, (max_ct // 128) * 128))
    return C  # keep the lane dim equal to full C so the block layout stays legal


def spp(x):
    """SPP forward: x (N, C, H, W) -> (N, 4C, H, W)."""
    N, C, H, W = x.shape
    dtype = x.dtype
    ct = _channel_tile(C, H, W, jnp.dtype(dtype).itemsize)

    # Lane-dense compute layout: NHWC (channels -> lanes).
    x_nhwc = jnp.transpose(x, (0, 2, 3, 1))                      # (N, H, W, C)

    pool_shape = jax.ShapeDtypeStruct((N, H, W, C), dtype)
    spec = pl.BlockSpec((1, H, W, ct), lambda n, c: (n, 0, 0, c))

    p5, p9, p13 = pl.pallas_call(
        _spp_kernel,
        out_shape=(pool_shape, pool_shape, pool_shape),
        grid_spec=pltpu.PrefetchScalarGridSpec(
            num_scalar_prefetch=0,
            grid=(N, pl.cdiv(C, ct)),
            in_specs=[spec],
            out_specs=[spec, spec, spec],
            scratch_shapes=[
                pltpu.VMEM((H + 2 * _R, W, ct), dtype),
                pltpu.VMEM((H, W + 2 * _R, ct), dtype),
            ],
        ),
        compiler_params=pltpu.CompilerParams(
            dimension_semantics=("parallel", "parallel")),
    )(x_nhwc)

    # Identity slab comes straight from the input (never re-written by the
    # kernel); concat along channels and return to NCHW for the module contract.
    out_nhwc = jnp.concatenate([x_nhwc, p5, p9, p13], axis=-1)   # (N, H, W, 4C)
    return jnp.transpose(out_nhwc, (0, 3, 1, 2))                 # (N, 4C, H, W)


def _spp_reference(x):
    """Plain-JAX reference using lax.reduce_window (matches PyTorch MaxPool2d)."""
    def pool(x, k):
        return lax.reduce_window(
            x, -jnp.inf, lax.max,
            window_dimensions=(1, 1, k, k),
            window_strides=(1, 1, 1, 1),
            padding="SAME")
    return jnp.concatenate([x, pool(x, 5), pool(x, 9), pool(x, 13)], axis=1)


if __name__ == "__main__":
    key = jax.random.PRNGKey(0)
    x = jax.random.normal(key, (2, 4, 16, 16), dtype=jnp.float32)

    spp_jit = jax.jit(spp)
    out = jax.block_until_ready(spp_jit(x))

    ref = _spp_reference(x)
    assert out.shape == (2, 16, 16, 16), out.shape
    assert jnp.array_equal(out, ref), "mismatch vs reference"

    print("KERNEL_OK")
</pallas_src>

<mosaic_0001>
module attributes {stable_mosaic.version = 11 : i64} {
  func.func @_spp_kernel(%arg0: i32, %arg1: i32, %arg2: memref<1x16x16x4xf32, #tpu.memory_space<vmem>>, %arg3: memref<1x16x16x4xf32, #tpu.memory_space<vmem>>, %arg4: memref<1x16x16x4xf32, #tpu.memory_space<vmem>>, %arg5: memref<1x16x16x4xf32, #tpu.memory_space<vmem>>, %arg6: memref<20x16x4xf32, #tpu.memory_space<vmem>>, %arg7: memref<16x20x4xf32, #tpu.memory_space<vmem>>) attributes {dimension_semantics = [#tpu.dimension_semantics<parallel>, #tpu.dimension_semantics<parallel>], iteration_bounds = array<i64: 2, 1>, scalar_prefetch = 0 : i64, scratch_operands = 2 : i64, tpu.core_type = #tpu.core_type<tc>, window_params = [{transform_indices = @transform_0, window_bounds = array<i64: 1, 16, 16, 4>}, {transform_indices = @transform_1, window_bounds = array<i64: 1, 16, 16, 4>}, {transform_indices = @transform_2, window_bounds = array<i64: 1, 16, 16, 4>}, {transform_indices = @transform_3, window_bounds = array<i64: 1, 16, 16, 4>}]} {
    %cst = arith.constant 0xFF800000 : f32
    %0 = vector.broadcast %cst : f32 to vector<2x16x4xf32>
    %c0 = arith.constant 0 : index
    %c0_0 = arith.constant 0 : index
    %c0_1 = arith.constant 0 : index
    %1 = vector.load %arg6[%c0, %c0_0, %c0_1] : memref<20x16x4xf32, #tpu.memory_space<vmem>>, vector<2x16x4xf32>
    tpu.vector_store %arg6[%c0, %c0_0, %c0_1], %0 {strides = array<i32>} : memref<20x16x4xf32, #tpu.memory_space<vmem>>, vector<2x16x4xf32>,
    %cst_2 = arith.constant 0xFF800000 : f32
    %2 = vector.broadcast %cst_2 : f32 to vector<2x16x4xf32>
    %c18 = arith.constant 18 : index
    %c0_3 = arith.constant 0 : index
    %c0_4 = arith.constant 0 : index
    %3 = vector.load %arg6[%c18, %c0_3, %c0_4] : memref<20x16x4xf32, #tpu.memory_space<vmem>>, vector<2x16x4xf32>
    tpu.vector_store %arg6[%c18, %c0_3, %c0_4], %2 {strides = array<i32>} : memref<20x16x4xf32, #tpu.memory_space<vmem>>, vector<2x16x4xf32>,
    %cst_5 = arith.constant 0xFF800000 : f32
    %4 = vector.broadcast %cst_5 : f32 to vector<16x2x4xf32>
    %c0_6 = arith.constant 0 : index
    %c0_7 = arith.constant 0 : index
    %c0_8 = arith.constant 0 : index
    %5 = vector.load %arg7[%c0_6, %c0_7, %c0_8] : memref<16x20x4xf32, #tpu.memory_space<vmem>>, vector<16x2x4xf32>
    tpu.vector_store %arg7[%c0_6, %c0_7, %c0_8], %4 {strides = array<i32>} : memref<16x20x4xf32, #tpu.memory_space<vmem>>, vector<16x2x4xf32>,
    %cst_9 = arith.constant 0xFF800000 : f32
    %6 = vector.broadcast %cst_9 : f32 to vector<16x2x4xf32>
    %c0_10 = arith.constant 0 : index
    %c18_11 = arith.constant 18 : index
    %c0_12 = arith.constant 0 : index
    %7 = vector.load %arg7[%c0_10, %c18_11, %c0_12] : memref<16x20x4xf32, #tpu.memory_space<vmem>>, vector<16x2x4xf32>
    tpu.vector_store %arg7[%c0_10, %c18_11, %c0_12], %6 {strides = array<i32>} : memref<16x20x4xf32, #tpu.memory_space<vmem>>, vector<16x2x4xf32>,
    %c0_13 = arith.constant 0 : index
    %c0_14 = arith.constant 0 : index
    %c0_15 = arith.constant 0 : index
    %c0_16 = arith.constant 0 : index
    %8 = vector.load %arg2[%c0_13, %c0_14, %c0_15, %c0_16] : memref<1x16x16x4xf32, #tpu.memory_space<vmem>>, vector<1x16x16x4xf32>
    %9 = vector.shape_cast %8 : vector<1x16x16x4xf32> to vector<16x16x4xf32>
    %c2 = arith.constant 2 : index
    %c0_17 = arith.constant 0 : index
    %c0_18 = arith.constant 0 : index
    %10 = vector.load %arg6[%c2, %c0_17, %c0_18] : memref<20x16x4xf32, #tpu.memory_space<vmem>>, vector<16x16x4xf32>
    tpu.vector_store %arg6[%c2, %c0_17, %c0_18], %9 {strides = array<i32>} : memref<20x16x4xf32, #tpu.memory_space<vmem>>, vector<16x16x4xf32>,
    %c0_19 = arith.constant 0 : index
    %c0_20 = arith.constant 0 : index
    %c0_21 = arith.constant 0 : index
    %11 = vector.load %arg6[%c0_19, %c0_20, %c0_21] : memref<20x16x4xf32, #tpu.memory_space<vmem>>, vector<16x16x4xf32>
    %c1 = arith.constant 1 : index
    %c0_22 = arith.constant 0 : index
    %c0_23 = arith.constant 0 : index
    %12 = vector.load %arg6[%c1, %c0_22, %c0_23] : memref<20x16x4xf32, #tpu.memory_space<vmem>>, vector<16x16x4xf32>
    %13 = arith.maximumf %11, %12 : vector<16x16x4xf32>
    %c2_24 = arith.constant 2 : index
    %c0_25 = arith.constant 0 : index
    %c0_26 = arith.constant 0 : index
    %14 = vector.load %arg6[%c2_24, %c0_25, %c0_26] : memref<20x16x4xf32, #tpu.memory_space<vmem>>, vector<16x16x4xf32>
    %15 = arith.maximumf %13, %14 : vector<16x16x4xf32>
    %c3 = arith.constant 3 : index
    %c0_27 = arith.constant 0 : index
    %c0_28 = arith.constant 0 : index
    %16 = vector.load %arg6[%c3, %c0_27, %c0_28] : memref<20x16x4xf32, #tpu.memory_space<vmem>>, vector<16x16x4xf32>
    %17 = arith.maximumf %15, %16 : vector<16x16x4xf32>
    %c4 = arith.constant 4 : index
    %c0_29 = arith.constant 0 : index
    %c0_30 = arith.constant 0 : index
    %18 = vector.load %arg6[%c4, %c0_29, %c0_30] : memref<20x16x4xf32, #tpu.memory_space<vmem>>, vector<16x16x4xf32>
    %19 = arith.maximumf %17, %18 : vector<16x16x4xf32>
    %c0_31 = arith.constant 0 : index
    %c2_32 = arith.constant 2 : index
    %c0_33 = arith.constant 0 : index
    %20 = vector.load %arg7[%c0_31, %c2_32, %c0_33] : memref<16x20x4xf32, #tpu.memory_space<vmem>>, vector<16x16x4xf32>
    tpu.vector_store %arg7[%c0_31, %c2_32, %c0_33], %19 {strides = array<i32>} : memref<16x20x4xf32, #tpu.memory_space<vmem>>, vector<16x16x4xf32>,
    %c0_34 = arith.constant 0 : index
    %c0_35 = arith.constant 0 : index
    %c0_36 = arith.constant 0 : index
    %21 = vector.load %arg7[%c0_34, %c0_35, %c0_36] : memref<16x20x4xf32, #tpu.memory_space<vmem>>, vector<16x16x4xf32>
    %c0_37 = arith.constant 0 : index
    %c1_38 = arith.constant 1 : index
    %c0_39 = arith.constant 0 : index
    %22 = vector.load %arg7[%c0_37, %c1_38, %c0_39] : memref<16x20x4xf32, #tpu.memory_space<vmem>>, vector<16x16x4xf32>
    %23 = arith.maximumf %21, %22 : vector<16x16x4xf32>
    %c0_40 = arith.constant 0 : index
    %c2_41 = arith.constant 2 : index
    %c0_42 = arith.constant 0 : index
    %24 = vector.load %arg7[%c0_40, %c2_41, %c0_42] : memref<16x20x4xf32, #tpu.memory_space<vmem>>, vector<16x16x4xf32>
    %25 = arith.maximumf %23, %24 : vector<16x16x4xf32>
    %c0_43 = arith.constant 0 : index
    %c3_44 = arith.constant 3 : index
    %c0_45 = arith.constant 0 : index
    %26 = vector.load %arg7[%c0_43, %c3_44, %c0_45] : memref<16x20x4xf32, #tpu.memory_space<vmem>>, vector<16x16x4xf32>
    %27 = arith.maximumf %25, %26 : vector<16x16x4xf32>
    %c0_46 = arith.constant 0 : index
    %c4_47 = arith.constant 4 : index
    %c0_48 = arith.constant 0 : index
    %28 = vector.load %arg7[%c0_46, %c4_47, %c0_48] : memref<16x20x4xf32, #tpu.memory_space<vmem>>, vector<16x16x4xf32>
    %29 = arith.maximumf %27, %28 : vector<16x16x4xf32>
    %c0_49 = arith.constant 0 : index
    %c0_50 = arith.constant 0 : index
    %c0_51 = arith.constant 0 : index
    %c0_52 = arith.constant 0 : index
    %30 = vector.load %arg3[%c0_49, %c0_50, %c0_51, %c0_52] : memref<1x16x16x4xf32, #tpu.memory_space<vmem>>, vector<1x16x16x4xf32>
    %31 = vector.shape_cast %30 : vector<1x16x16x4xf32> to vector<16x16x4xf32>
    %32 = vector.shape_cast %29 : vector<16x16x4xf32> to vector<1x16x16x4xf32>
    tpu.vector_store %arg3[%c0_49, %c0_50, %c0_51, %c0_52], %32 {strides = array<i32>} : memref<1x16x16x4xf32, #tpu.memory_space<vmem>>, vector<1x16x16x4xf32>,
    %c2_53 = arith.constant 2 : index
    %c0_54 = arith.constant 0 : index
    %c0_55 = arith.constant 0 : index
    %33 = vector.load %arg6[%c2_53, %c0_54, %c0_55] : memref<20x16x4xf32, #tpu.memory_space<vmem>>, vector<16x16x4xf32>
    tpu.vector_store %arg6[%c2_53, %c0_54, %c0_55], %29 {strides = array<i32>} : memref<20x16x4xf32, #tpu.memory_space<vmem>>, vector<16x16x4xf32>,
    %c0_56 = arith.constant 0 : index
    %c0_57 = arith.constant 0 : index
    %c0_58 = arith.constant 0 : index
    %34 = vector.load %arg6[%c0_56, %c0_57, %c0_58] : memref<20x16x4xf32, #tpu.memory_space<vmem>>, vector<16x16x4xf32>
    %c1_59 = arith.constant 1 : index
    %c0_60 = arith.constant 0 : index
    %c0_61 = arith.constant 0 : index
    %35 = vector.load %arg6[%c1_59, %c0_60, %c0_61] : memref<20x16x4xf32, #tpu.memory_space<vmem>>, vector<16x16x4xf32>
    %36 = arith.maximumf %34, %35 : vector<16x16x4xf32>
    %c2_62 = arith.constant 2 : index
    %c0_63 = arith.constant 0 : index
    %c0_64 = arith.constant 0 : index
    %37 = vector.load %arg6[%c2_62, %c0_63, %c0_64] : memref<20x16x4xf32, #tpu.memory_space<vmem>>, vector<16x16x4xf32>
    %38 = arith.maximumf %36, %37 : vector<16x16x4xf32>
    %c3_65 = arith.constant 3 : index
    %c0_66 = arith.constant 0 : index
    %c0_67 = arith.constant 0 : index
    %39 = vector.load %arg6[%c3_65, %c0_66, %c0_67] : memref<20x16x4xf32, #tpu.memory_space<vmem>>, vector<16x16x4xf32>
    %40 = arith.maximumf %38, %39 : vector<16x16x4xf32>
    %c4_68 = arith.constant 4 : index
    %c0_69 = arith.constant 0 : index
    %c0_70 = arith.constant 0 : index
    %41 = vector.load %arg6[%c4_68, %c0_69, %c0_70] : memref<20x16x4xf32, #tpu.memory_space<vmem>>, vector<16x16x4xf32>
    %42 = arith.maximumf %40, %41 : vector<16x16x4xf32>
    %c0_71 = arith.constant 0 : index
    %c2_72 = arith.constant 2 : index
    %c0_73 = arith.constant 0 : index
    %43 = vector.load %arg7[%c0_71, %c2_72, %c0_73] : memref<16x20x4xf32, #tpu.memory_space<vmem>>, vector<16x16x4xf32>
    tpu.vector_store %arg7[%c0_71, %c2_72, %c0_73], %42 {strides = array<i32>} : memref<16x20x4xf32, #tpu.memory_space<vmem>>, vector<16x16x4xf32>,
    %c0_74 = arith.constant 0 : index
    %c0_75 = arith.constant 0 : index
    %c0_76 = arith.constant 0 : index
    %44 = vector.load %arg7[%c0_74, %c0_75, %c0_76] : memref<16x20x4xf32, #tpu.memory_space<vmem>>, vector<16x16x4xf32>
    %c0_77 = arith.constant 0 : index
    %c1_78 = arith.constant 1 : index
    %c0_79 = arith.constant 0 : index
    %45 = vector.load %arg7[%c0_77, %c1_78, %c0_79] : memref<16x20x4xf32, #tpu.memory_space<vmem>>, vector<16x16x4xf32>
    %46 = arith.maximumf %44, %45 : vector<16x16x4xf32>
    %c0_80 = arith.constant 0 : index
    %c2_81 = arith.constant 2 : index
    %c0_82 = arith.constant 0 : index
    %47 = vector.load %arg7[%c0_80, %c2_81, %c0_82] : memref<16x20x4xf32, #tpu.memory_space<vmem>>, vector<16x16x4xf32>
    %48 = arith.maximumf %46, %47 : vector<16x16x4xf32>
    %c0_83 = arith.constant 0 : index
    %c3_84 = arith.constant 3 : index
    %c0_85 = arith.constant 0 : index
    %49 = vector.load %arg7[%c0_83, %c3_84, %c0_85] : memref<16x20x4xf32, #tpu.memory_space<vmem>>, vector<16x16x4xf32>
    %50 = arith.maximumf %48, %49 : vector<16x16x4xf32>
    %c0_86 = arith.constant 0 : index
    %c4_87 = arith.constant 4 : index
    %c0_88 = arith.constant 0 : index
    %51 = vector.load %arg7[%c0_86, %c4_87, %c0_88] : memref<16x20x4xf32, #tpu.memory_space<vmem>>, vector<16x16x4xf32>
    %52 = arith.maximumf %50, %51 : vector<16x16x4xf32>
    %c0_89 = arith.constant 0 : index
    %c0_90 = arith.constant 0 : index
    %c0_91 = arith.constant 0 : index
    %c0_92 = arith.constant 0 : index
    %53 = vector.load %arg4[%c0_89, %c0_90, %c0_91, %c0_92] : memref<1x16x16x4xf32, #tpu.memory_space<vmem>>, vector<1x16x16x4xf32>
    %54 = vector.shape_cast %53 : vector<1x16x16x4xf32> to vector<16x16x4xf32>
    %55 = vector.shape_cast %52 : vector<16x16x4xf32> to vector<1x16x16x4xf32>
    tpu.vector_store %arg4[%c0_89, %c0_90, %c0_91, %c0_92], %55 {strides = array<i32>} : memref<1x16x16x4xf32, #tpu.memory_space<vmem>>, vector<1x16x16x4xf32>,
    %c2_93 = arith.constant 2 : index
    %c0_94 = arith.constant 0 : index
    %c0_95 = arith.constant 0 : index
    %56 = vector.load %arg6[%c2_93, %c0_94, %c0_95] : memref<20x16x4xf32, #tpu.memory_space<vmem>>, vector<16x16x4xf32>
    tpu.vector_store %arg6[%c2_93, %c0_94, %c0_95], %52 {strides = array<i32>} : memref<20x16x4xf32, #tpu.memory_space<vmem>>, vector<16x16x4xf32>,
    %c0_96 = arith.constant 0 : index
    %c0_97 = arith.constant 0 : index
    %c0_98 = arith.constant 0 : index
    %57 = vector.load %arg6[%c0_96, %c0_97, %c0_98] : memref<20x16x4xf32, #tpu.memory_space<vmem>>, vector<16x16x4xf32>
    %c1_99 = arith.constant 1 : index
    %c0_100 = arith.constant 0 : index
    %c0_101 = arith.constant 0 : index
    %58 = vector.load %arg6[%c1_99, %c0_100, %c0_101] : memref<20x16x4xf32, #tpu.memory_space<vmem>>, vector<16x16x4xf32>
    %59 = arith.maximumf %57, %58 : vector<16x16x4xf32>
    %c2_102 = arith.constant 2 : index
    %c0_103 = arith.constant 0 : index
    %c0_104 = arith.constant 0 : index
    %60 = vector.load %arg6[%c2_102, %c0_103, %c0_104] : memref<20x16x4xf32, #tpu.memory_space<vmem>>, vector<16x16x4xf32>
    %61 = arith.maximumf %59, %60 : vector<16x16x4xf32>
    %c3_105 = arith.constant 3 : index
    %c0_106 = arith.constant 0 : index
    %c0_107 = arith.constant 0 : index
    %62 = vector.load %arg6[%c3_105, %c0_106, %c0_107] : memref<20x16x4xf32, #tpu.memory_space<vmem>>, vector<16x16x4xf32>
    %63 = arith.maximumf %61, %62 : vector<16x16x4xf32>
    %c4_108 = arith.constant 4 : index
    %c0_109 = arith.constant 0 : index
    %c0_110 = arith.constant 0 : index
    %64 = vector.load %arg6[%c4_108, %c0_109, %c0_110] : memref<20x16x4xf32, #tpu.memory_space<vmem>>, vector<16x16x4xf32>
    %65 = arith.maximumf %63, %64 : vector<16x16x4xf32>
    %c0_111 = arith.constant 0 : index
    %c2_112 = arith.constant 2 : index
    %c0_113 = arith.constant 0 : index
    %66 = vector.load %arg7[%c0_111, %c2_112, %c0_113] : memref<16x20x4xf32, #tpu.memory_space<vmem>>, vector<16x16x4xf32>
    tpu.vector_store %arg7[%c0_111, %c2_112, %c0_113], %65 {strides = array<i32>} : memref<16x20x4xf32, #tpu.memory_space<vmem>>, vector<16x16x4xf32>,
    %c0_114 = arith.constant 0 : index
    %c0_115 = arith.constant 0 : index
    %c0_116 = arith.constant 0 : index
    %67 = vector.load %arg7[%c0_114, %c0_115, %c0_116] : memref<16x20x4xf32, #tpu.memory_space<vmem>>, vector<16x16x4xf32>
    %c0_117 = arith.constant 0 : index
    %c1_118 = arith.constant 1 : index
    %c0_119 = arith.constant 0 : index
    %68 = vector.load %arg7[%c0_117, %c1_118, %c0_119] : memref<16x20x4xf32, #tpu.memory_space<vmem>>, vector<16x16x4xf32>
    %69 = arith.maximumf %67, %68 : vector<16x16x4xf32>
    %c0_120 = arith.constant 0 : index
    %c2_121 = arith.constant 2 : index
    %c0_122 = arith.constant 0 : index
    %70 = vector.load %arg7[%c0_120, %c2_121, %c0_122] : memref<16x20x4xf32, #tpu.memory_space<vmem>>, vector<16x16x4xf32>
    %71 = arith.maximumf %69, %70 : vector<16x16x4xf32>
    %c0_123 = arith.constant 0 : index
    %c3_124 = arith.constant 3 : index
    %c0_125 = arith.constant 0 : index
    %72 = vector.load %arg7[%c0_123, %c3_124, %c0_125] : memref<16x20x4xf32, #tpu.memory_space<vmem>>, vector<16x16x4xf32>
    %73 = arith.maximumf %71, %72 : vector<16x16x4xf32>
    %c0_126 = arith.constant 0 : index
    %c4_127 = arith.constant 4 : index
    %c0_128 = arith.constant 0 : index
    %74 = vector.load %arg7[%c0_126, %c4_127, %c0_128] : memref<16x20x4xf32, #tpu.memory_space<vmem>>, vector<16x16x4xf32>
    %75 = arith.maximumf %73, %74 : vector<16x16x4xf32>
    %c0_129 = arith.constant 0 : index
    %c0_130 = arith.constant 0 : index
    %c0_131 = arith.constant 0 : index
    %c0_132 = arith.constant 0 : index
    %76 = vector.load %arg5[%c0_129, %c0_130, %c0_131, %c0_132] : memref<1x16x16x4xf32, #tpu.memory_space<vmem>>, vector<1x16x16x4xf32>
    %77 = vector.shape_cast %76 : vector<1x16x16x4xf32> to vector<16x16x4xf32>
    %78 = vector.shape_cast %75 : vector<16x16x4xf32> to vector<1x16x16x4xf32>
    tpu.vector_store %arg5[%c0_129, %c0_130, %c0_131, %c0_132], %78 {strides = array<i32>} : memref<1x16x16x4xf32, #tpu.memory_space<vmem>>, vector<1x16x16x4xf32>,
    return
  }
  func.func @transform_0(%arg0: i32, %arg1: i32) -> (i32, i32, i32, i32) {
    %c0_i32 = arith.constant 0 : i32
    %c0_i32_0 = arith.constant 0 : i32
    %c0_i32_1 = arith.constant 0 : i32
    return %arg0, %c0_i32, %c0_i32_0, %arg1 : i32, i32, i32, i32
  }
  func.func @transform_1(%arg0: i32, %arg1: i32) -> (i32, i32, i32, i32) {
    %c0_i32 = arith.constant 0 : i32
    %c0_i32_0 = arith.constant 0 : i32
    %c0_i32_1 = arith.constant 0 : i32
    return %arg0, %c0_i32, %c0_i32_0, %arg1 : i32, i32, i32, i32
  }
  func.func @transform_2(%arg0: i32, %arg1: i32) -> (i32, i32, i32, i32) {
    %c0_i32 = arith.constant 0 : i32
    %c0_i32_0 = arith.constant 0 : i32
    %c0_i32_1 = arith.constant 0 : i32
    return %arg0, %c0_i32, %c0_i32_0, %arg1 : i32, i32, i32, i32
  }
  func.func @transform_3(%arg0: i32, %arg1: i32) -> (i32, i32, i32, i32) {
    %c0_i32 = arith.constant 0 : i32
    %c0_i32_0 = arith.constant 0 : i32
    %c0_i32_1 = arith.constant 0 : i32
    return %arg0, %c0_i32, %c0_i32_0, %arg1 : i32, i32, i32, i32
  }
}

</mosaic_0001>

<llo_original>
// kernel: spp.1
$region0: #{spp.1}
  #allocation0 [shape = 'u32[]', space=smem, size = 0x4, offset = 0x4, fixed_abs, tag = 'smem constant byte address 0x4 - core index']
  #allocation1 [shape = 'u32[72,128]{1,0:T(1,128)}', space=vmem, size = 0x9000, scoped, tag = 'internal scratch']
  #allocation2 [shape = 'f32[20,16,4]{2,1,0:T(8,128)}', space=vmem, size = 0x28000, scoped, tag = 'scratch operand']
  #allocation3 [shape = 'f32[16,20,4]{2,1,0:T(8,128)}', space=vmem, size = 0x30000, scoped, tag = 'scratch operand']
  %s0 = inlined_call_operand.vmem [shape: f32[2,16,16,4], index: 0, kind: input, shape index: {}]
  %s1 = inlined_call_operand.vmem [shape: f32[2,16,16,4], index: 1, kind: output, shape index: {0}]
  %s2 = inlined_call_operand.vmem [shape: f32[2,16,16,4], index: 2, kind: output, shape index: {1}]
  %s3 = inlined_call_operand.vmem [shape: f32[2,16,16,4], index: 3, kind: output, shape index: {2}]
  %4 = xla_tuple %s1, %s2, %s3
  %s5 = sld [smem:[#allocation0]]
  $region53: #{spp.1} parent=0
    _
  %s7 = ssub.s32 1, %s5
  %s8 = scalar_select 0, %s7, %s5
  loop: start=0, step=1, limit=4
  $region2: #{spp.1} parent=0 // loop_pre_header
    _
  $region3: #{spp.1} parent=0 // loop_header
    %s10 = sphi 0, %s14
    %p11 = scmp.ge.s32.totalorder %s10, 4
    %s17 = sphi 0, %s29
    %s18 = sphi 0, %s25
    %s19 = sphi 0, %s17
    %s20 = sphi 0, %s18
    %s21 = sphi 0, %s19
    %s22 = sphi 0, %s20
    %s34 = sphi 0, %s36
    %s37 = sphi 0, %s34
    %s38 = sphi 0, %s37
    %s54 = sphi 0, %s38
    %s62 = sphi 0, %s64
    %s65 = sphi 0, %s62
    %s66 = sphi 0, %s65
    %s82 = sphi 0, %s66
    %s90 = sphi 0, %s92
    %s93 = sphi 0, %s90
    %s94 = sphi 0, %s93
    %s110 = sphi 0, %s94
    %s118 = sphi 0, %s120
    %s121 = sphi 0, %s118
    %s122 = sphi 0, %s121
    %s138 = sphi 0, %s122
  $region4: #{spp.1} parent=0 // loop_header_branch
    %13 = sbr.rel (%p11) target = $region8
  $region5: #{spp.1} parent=0 // loop_body
    %s15 = ssub.s32 %s10, 1
    %s16 = ssub.s32 %s10, 2
    %s23 = sadd.s32 1, %s18
    %p24 = scmp.ge.s32.totalorder %s23, 1
    %s25 = scalar_select %p24, 0, %s23
    %s26 = sadd.s32 1, %s17
    %s27 = scalar_select %p24, %s26, %s17
    %p28 = scmp.ge.s32.totalorder %s27, 2
    %s29 = scalar_select %p28, 0, %s27
    %s30 = ssub.s32 %s17, %s29
    %s31 = ssub.s32 %s18, %s25
    %s32 = sor.u32 %s30, %s31
    %p33 = scmp.eq.s32.totalorder %s32, 0
    %s35 = sadd.s32 %s34, 1
    %s36 = scalar_select %p33, %s34, %s35
    %p39 = pneg %p33
    %p40 = scmp.eq.s32.totalorder %s10, 1
    %p41 = por %p39, %p40
    %p42 = scmp.ne.s32.totalorder %s34, %s37
    %p43 = scmp.eq.s32.totalorder %s10, 0
    %p44 = por %p42, %p43
    %p45 = scmp.ne.s32.totalorder %s34, %s37
    %p46 = scmp.eq.s32.totalorder %s15, 1
    %p47 = por %p45, %p46
    %p48 = scmp.ne.s32.totalorder %s37, %s38
    %p49 = scmp.eq.s32.totalorder %s15, 0
    %p50 = por %p48, %p49
    %p51 = scmp.ne.s32.totalorder %s37, %s38
    %p52 = scmp.eq.s32.totalorder %s16, 1
    %p53 = por %p51, %p52
    %p55 = scmp.ne.s32.totalorder %s38, %s54
    %p56 = scmp.eq.s32.totalorder %s16, 0
    %p57 = por %p55, %p56
    %s58 = ssub.s32 %s17, %s29
    %s59 = ssub.s32 %s18, %s25
    %s60 = sor.u32 %s58, %s59
    %p61 = scmp.eq.s32.totalorder %s60, 0
    %s63 = sadd.s32 %s62, 1
    %s64 = scalar_select %p61, %s62, %s63
    %p67 = pneg %p61
    %p68 = scmp.eq.s32.totalorder %s10, 1
    %p69 = por %p67, %p68
    %p70 = scmp.ne.s32.totalorder %s62, %s65
    %p71 = scmp.eq.s32.totalorder %s10, 0
    %p72 = por %p70, %p71
    %p73 = scmp.ne.s32.totalorder %s62, %s65
    %p74 = scmp.eq.s32.totalorder %s15, 1
    %p75 = por %p73, %p74
    %p76 = scmp.ne.s32.totalorder %s65, %s66
    %p77 = scmp.eq.s32.totalorder %s15, 0
    %p78 = por %p76, %p77
    %p79 = scmp.ne.s32.totalorder %s65, %s66
    %p80 = scmp.eq.s32.totalorder %s16, 1
    %p81 = por %p79, %p80
    %p83 = scmp.ne.s32.totalorder %s66, %s82
    %p84 = scmp.eq.s32.totalorder %s16, 0
    %p85 = por %p83, %p84
    %s86 = ssub.s32 %s17, %s29
    %s87 = ssub.s32 %s18, %s25
    %s88 = sor.u32 %s86, %s87
    %p89 = scmp.eq.s32.totalorder %s88, 0
    %s91 = sadd.s32 %s90, 1
    %s92 = scalar_select %p89, %s90, %s91
    %p95 = pneg %p89
    %p96 = scmp.eq.s32.totalorder %s10, 1
    %p97 = por %p95, %p96
    %p98 = scmp.ne.s32.totalorder %s90, %s93
    %p99 = scmp.eq.s32.totalorder %s10, 0
    %p100 = por %p98, %p99
    %p101 = scmp.ne.s32.totalorder %s90, %s93
    %p102 = scmp.eq.s32.totalorder %s15, 1
    %p103 = por %p101, %p102
    %p104 = scmp.ne.s32.totalorder %s93, %s94
    %p105 = scmp.eq.s32.totalorder %s15, 0
    %p106 = por %p104, %p105
    %p107 = scmp.ne.s32.totalorder %s93, %s94
    %p108 = scmp.eq.s32.totalorder %s16, 1
    %p109 = por %p107, %p108
    %p111 = scmp.ne.s32.totalorder %s94, %s110
    %p112 = scmp.eq.s32.totalorder %s16, 0
    %p113 = por %p111, %p112
    %s114 = ssub.s32 %s17, %s29
    %s115 = ssub.s32 %s18, %s25
    %s116 = sor.u32 %s114, %s115
    %p117 = scmp.eq.s32.totalorder %s116, 0
    %s119 = sadd.s32 %s118, 1
    %s120 = scalar_select %p117, %s118, %s119
    %p123 = pneg %p117
    %p124 = scmp.eq.s32.totalorder %s10, 1
    %p125 = por %p123, %p124
    %p126 = scmp.ne.s32.totalorder %s118, %s121
    %p127 = scmp.eq.s32.totalorder %s10, 0
    %p128 = por %p126, %p127
    %p129 = scmp.ne.s32.totalorder %s118, %s121
    %p130 = scmp.eq.s32.totalorder %s15, 1
    %p131 = por %p129, %p130
    %p132 = scmp.ne.s32.totalorder %s121, %s122
    %p133 = scmp.eq.s32.totalorder %s15, 0
    %p134 = por %p132, %p133
    %p135 = scmp.ne.s32.totalorder %s121, %s122
    %p136 = scmp.eq.s32.totalorder %s16, 1
    %p137 = por %p135, %p136
    %p139 = scmp.ne.s32.totalorder %s122, %s138
    %p140 = scmp.eq.s32.totalorder %s16, 0
    %p141 = por %p139, %p140
    %p142 = scmp.le.s32.totalorder 1, %s10
    %p143 = scmp.lt.s32.totalorder %s10, 3
    %p144 = pnand %p142, %p143
    %p145 = pneg %p144
    // Predicated region
    $region9: #{spp.1} parent=5 // pred_check
      _
    $region10: #{spp.1} parent=5 // pred_check_branch
      %147 = sbr.rel (%p144) target = $region12
    $region11: #{spp.1} parent=5 // pred_region
      %s148 = ssub.s32 %s10, 1
    $region12: #{spp.1} parent=5 // pred_fallthru
      _
    %p149 = scmp.lt.s32.totalorder %s10, 2
    // Predicated region
    $region13: #{spp.1} parent=5 // pred_check
      %p150 = pneg %p149
    $region14: #{spp.1} parent=5 // pred_check_branch
      %152 = sbr.rel (%p150) target = $region16
    $region15: #{spp.1} parent=5 // pred_region
      // Predicated region
      $region17: #{spp.1} parent=15 // pred_check
        %p153 = pneg %p44
      $region18: #{spp.1} parent=15 // pred_check_branch
        %155 = sbr.rel (%p153) target = $region20
      $region19: #{spp.1} parent=15 // pred_region
        %p156 = scmp.lt.s32.totalorder %s17, 1
        %s157 = scalar_select %p156, %s17, 1
        %p158 = scmp.lt.s32.totalorder %s18, 0
        %s159 = scalar_select %p158, %s18, 0
        %s160 = smul.addr %s157, 32
        %s161 = sadd.s32 %s159, %s160
        %s162 = smul.addr %s161, 8
        %s163 = scalar_lea.vmem %s0, %s162
      $region20: #{spp.1} parent=15 // pred_fallthru
        _
    $region16: #{spp.1} parent=5 // pred_fallthru
      _
    %p164 = scmp.le.s32.totalorder 1, %s10
    %p165 = scmp.lt.s32.totalorder %s10, 3
    %p166 = pnand %p164, %p165
    %p167 = pneg %p166
    // Predicated region
    $region21: #{spp.1} parent=5 // pred_check
      _
    $region22: #{spp.1} parent=5 // pred_check_branch
      %169 = sbr.rel (%p166) target = $region24
    $region23: #{spp.1} parent=5 // pred_region
      %s170 = ssub.s32 %s10, 1
      %p171 = scmp.lt.s32.totalorder %s19, 1
      %s172 = scalar_select %p171, %s19, 1
      %p173 = scmp.lt.s32.totalorder %s20, 0
      %s174 = scalar_select %p173, %s20, 0
      %s175 = smul.addr %s172, 32
      %s176 = sadd.s32 %s174, %s175
      %s177 = smul.addr %s176, 8
      %s178 = scalar_lea.vmem %s0, %s177
      %p179 = pneg %p50
      %p180 = pneg %p47
      %p181 = pneg %p78
      %p182 = pneg %p75
      %p183 = scmp.lt.s32.totalorder %s19, 1
      %s184 = scalar_select %p183, %s19, 1
      %p185 = scmp.lt.s32.totalorder %s20, 0
      %s186 = scalar_select %p185, %s20, 0
      %s187 = smul.addr %s184, 32
      %s188 = sadd.s32 %s186, %s187
      %s189 = smul.addr %s188, 8
      %s190 = scalar_lea.vmem %s1, %s189
      %p191 = pneg %p106
      %p192 = pneg %p103
      %p193 = scmp.lt.s32.totalorder %s19, 1
      %s194 = scalar_select %p193, %s19, 1
      %p195 = scmp.lt.s32.totalorder %s20, 0
      %s196 = scalar_select %p195, %s20, 0
      %s197 = smul.addr %s194, 32
      %s198 = sadd.s32 %s196, %s197
      %s199 = smul.addr %s198, 8
      %s200 = scalar_lea.vmem %s2, %s199
      %p201 = pneg %p134
      %p202 = pneg %p131
      %p203 = scmp.lt.s32.totalorder %s19, 1
      %s204 = scalar_select %p203, %s19, 1
      %p205 = scmp.lt.s32.totalorder %s20, 0
      %s206 = scalar_select %p205, %s20, 0
      %s207 = smul.addr %s204, 32
      %s208 = sadd.s32 %s206, %s207
      %s209 = smul.addr %s208, 8
      %s210 = scalar_lea.vmem %s3, %s209
      %p211 = scmp.lt.s32.totalorder %s19, 1
      %s212 = scalar_select %p211, %s19, 1
      %p213 = scmp.lt.s32.totalorder %s20, 0
      %s214 = scalar_select %p213, %s20, 0
      %s215 = smul.addr %s212, 32
      %s216 = sadd.s32 %s214, %s215
      %s217 = smul.addr %s216, 8
      %s218 = scalar_lea.vmem %s0, %s217
      %p219 = scmp.lt.s32.totalorder %s19, 1
      %s220 = scalar_select %p219, %s19, 1
      %p221 = scmp.lt.s32.totalorder %s20, 0
      %s222 = scalar_select %p221, %s20, 0
      %s223 = smul.addr %s220, 32
      %s224 = sadd.s32 %s222, %s223
      %s225 = smul.addr %s224, 8
      %s226 = scalar_lea.vmem %s1, %s225
      %p227 = scmp.lt.s32.totalorder %s19, 1
      %s228 = scalar_select %p227, %s19, 1
      %p229 = scmp.lt.s32.totalorder %s20, 0
      %s230 = scalar_select %p229, %s20, 0
      %s231 = smul.addr %s228, 32
      %s232 = sadd.s32 %s230, %s231
      %s233 = smul.addr %s232, 8
      %s234 = scalar_lea.vmem %s2, %s233
      %p235 = scmp.lt.s32.totalorder %s19, 1
      %s236 = scalar_select %p235, %s19, 1
      %p237 = scmp.lt.s32.totalorder %s20, 0
      %s238 = scalar_select %p237, %s20, 0
      %s239 = smul.addr %s236, 32
      %s240 = sadd.s32 %s238, %s239
      %s241 = smul.addr %s240, 8
      %s242 = scalar_lea.vmem %s3, %s241
      %vm243 = vcmask 31744
      %244 = vst.msk [vmem:[#allocation2] sm:$0xff] %vm243, -inf
      %245 = vst.msk [vmem:[#allocation2 + $0x8] sm:$0xff] %vm243, -inf
      %246 = vst.msk [vmem:[#allocation2 + $0x10] sm:$0xff] %vm243, -inf
      %247 = vst.msk [vmem:[#allocation2 + $0x18] sm:$0xff] %vm243, -inf
      %s248 = scalar_lea.vmem [#allocation2], 288
      %249 = vst.msk [vmem:[%s248] sm:$0xff] %vm243, -inf
      %250 = vst.msk [vmem:[%s248 + $0x8] sm:$0xff] %vm243, -inf
      %251 = vst.msk [vmem:[%s248 + $0x10] sm:$0xff] %vm243, -inf
      %252 = vst.msk [vmem:[%s248 + $0x18] sm:$0xff] %vm243, -inf
      %vm253 = vcmask 25600
      %254 = vst.msk [vmem:[#allocation3] sm:$0x3] %vm253, -inf
      %255 = vst.msk [vmem:[#allocation3 + $0x18] sm:$0x3] %vm253, -inf
      %256 = vst.msk [vmem:[#allocation3 + $0x30] sm:$0x3] %vm253, -inf
      %257 = vst.msk [vmem:[#allocation3 + $0x48] sm:$0x3] %vm253, -inf
      %258 = vst.msk [vmem:[#allocation3 + $0x60] sm:$0x3] %vm253, -inf
      %259 = vst.msk [vmem:[#allocation3 + $0x78] sm:$0x3] %vm253, -inf
      %260 = vst.msk [vmem:[#allocation3 + $0x90] sm:$0x3] %vm253, -inf
      %261 = vst.msk [vmem:[#allocation3 + $0xa8] sm:$0x3] %vm253, -inf
      %262 = vst.msk [vmem:[#allocation3 + $0xc0] sm:$0x3] %vm253, -inf
      %263 = vst.msk [vmem:[#allocation3 + $0xd8] sm:$0x3] %vm253, -inf
      %264 = vst.msk [vmem:[#allocation3 + $0xf0] sm:$0x3] %vm253, -inf
      %265 = vst.msk [vmem:[#allocation3 + $0x108] sm:$0x3] %vm253, -inf
      %266 = vst.msk [vmem:[#allocation3 + $0x120] sm:$0x3] %vm253, -inf
      %267 = vst.msk [vmem:[#allocation3 + $0x138] sm:$0x3] %vm253, -inf
      %268 = vst.msk [vmem:[#allocation3 + $0x150] sm:$0x3] %vm253, -inf
      %269 = vst.msk [vmem:[#allocation3 + $0x168] sm:$0x3] %vm253, -inf
      %270 = vst.msk [vmem:[#allocation3 + $0x12] sm:$0x3] %vm253, -inf
      %271 = vst.msk [vmem:[#allocation3 + $0x2a] sm:$0x3] %vm253, -inf
      %272 = vst.msk [vmem:[#allocation3 + $0x42] sm:$0x3] %vm253, -inf
      %273 = vst.msk [vmem:[#allocation3 + $0x5a] sm:$0x3] %vm253, -inf
      %274 = vst.msk [vmem:[#allocation3 + $0x72] sm:$0x3] %vm253, -inf
      %275 = vst.msk [vmem:[#allocation3 + $0x8a] sm:$0x3] %vm253, -inf
      %276 = vst.msk [vmem:[#allocation3 + $0xa2] sm:$0x3] %vm253, -inf
      %277 = vst.msk [vmem:[#allocation3 + $0xba] sm:$0x3] %vm253, -inf
      %278 = vst.msk [vmem:[#allocation3 + $0xd2] sm:$0x3] %vm253, -inf
      %279 = vst.msk [vmem:[#allocation3 + $0xea] sm:$0x3] %vm253, -inf
      %280 = vst.msk [vmem:[#allocation3 + $0x102] sm:$0x3] %vm253, -inf
      %281 = vst.msk [vmem:[#allocation3 + $0x11a] sm:$0x3] %vm253, -inf
      %282 = vst.msk [vmem:[#allocation3 + $0x132] sm:$0x3] %vm253, -inf
      %283 = vst.msk [vmem:[#allocation3 + $0x14a] sm:$0x3] %vm253, -inf
      %284 = vst.msk [vmem:[#allocation3 + $0x162] sm:$0x3] %vm253, -inf
      %285 = vst.msk [vmem:[#allocation3 + $0x17a] sm:$0x3] %vm253, -inf
      %v286 = vld [vmem:[%s218] sm:$0xff]
      %v287 = vld [vmem:[%s218 + $0x8] sm:$0xff]
      %v288 = vld [vmem:[%s218 + $0x10] sm:$0xff]
      %v289 = vld [vmem:[%s218 + $0x18] sm:$0xff]
      %v290 = vld [vmem:[%s218 + $0x20] sm:$0xff]
      %v291 = vld [vmem:[%s218 + $0x28] sm:$0xff]
      %v292 = vld [vmem:[%s218 + $0x30] sm:$0xff]
      %v293 = vld [vmem:[%s218 + $0x38] sm:$0xff]
      %v294 = vld [vmem:[%s218 + $0x40] sm:$0xff]
      %v295 = vld [vmem:[%s218 + $0x48] sm:$0xff]
      %v296 = vld [vmem:[%s218 + $0x50] sm:$0xff]
      %v297 = vld [vmem:[%s218 + $0x58] sm:$0xff]
      %v298 = vld [vmem:[%s218 + $0x60] sm:$0xff]
      %v299 = vld [vmem:[%s218 + $0x68] sm:$0xff]
      %v300 = vld [vmem:[%s218 + $0x70] sm:$0xff]
      %v301 = vld [vmem:[%s218 + $0x78] sm:$0xff]
      %v302 = vld [vmem:[%s218 + $0x80] sm:$0xff]
      %v303 = vld [vmem:[%s218 + $0x88] sm:$0xff]
      %v304 = vld [vmem:[%s218 + $0x90] sm:$0xff]
      %v305 = vld [vmem:[%s218 + $0x98] sm:$0xff]
      %v306 = vld [vmem:[%s218 + $0xa0] sm:$0xff]
      %v307 = vld [vmem:[%s218 + $0xa8] sm:$0xff]
      %v308 = vld [vmem:[%s218 + $0xb0] sm:$0xff]
      %v309 = vld [vmem:[%s218 + $0xb8] sm:$0xff]
      %v310 = vld [vmem:[%s218 + $0xc0] sm:$0xff]
      %v311 = vld [vmem:[%s218 + $0xc8] sm:$0xff]
      %v312 = vld [vmem:[%s218 + $0xd0] sm:$0xff]
      %v313 = vld [vmem:[%s218 + $0xd8] sm:$0xff]
      %v314 = vld [vmem:[%s218 + $0xe0] sm:$0xff]
      %v315 = vld [vmem:[%s218 + $0xe8] sm:$0xff]
      %v316 = vld [vmem:[%s218 + $0xf0] sm:$0xff]
      %v317 = vld [vmem:[%s218 + $0xf8] sm:$0xff]
      %s318 = scalar_lea.vmem [#allocation2], 32
      %319 = vst.msk [vmem:[%s318] sm:$0xff] %vm243, %v286
      %320 = vst.msk [vmem:[%s318 + $0x8] sm:$0xff] %vm243, %v287
      %321 = vst.msk [vmem:[%s318 + $0x10] sm:$0xff] %vm243, %v288
      %322 = vst.msk [vmem:[%s318 + $0x18] sm:$0xff] %vm243, %v289
      %323 = vst.msk [vmem:[%s318 + $0x20] sm:$0xff] %vm243, %v290
      %324 = vst.msk [vmem:[%s318 + $0x28] sm:$0xff] %vm243, %v291
      %325 = vst.msk [vmem:[%s318 + $0x30] sm:$0xff] %vm243, %v292
      %326 = vst.msk [vmem:[%s318 + $0x38] sm:$0xff] %vm243, %v293
      %327 = vst.msk [vmem:[%s318 + $0x40] sm:$0xff] %vm243, %v294
      %328 = vst.msk [vmem:[%s318 + $0x48] sm:$0xff] %vm243, %v295
      %329 = vst.msk [vmem:[%s318 + $0x50] sm:$0xff] %vm243, %v296
      %330 = vst.msk [vmem:[%s318 + $0x58] sm:$0xff] %vm243, %v297
      %331 = vst.msk [vmem:[%s318 + $0x60] sm:$0xff] %vm243, %v298
      %332 = vst.msk [vmem:[%s318 + $0x68] sm:$0xff] %vm243, %v299
      %333 = vst.msk [vmem:[%s318 + $0x70] sm:$0xff] %vm243, %v300
      %334 = vst.msk [vmem:[%s318 + $0x78] sm:$0xff] %vm243, %v301
      %335 = vst.msk [vmem:[%s318 + $0x80] sm:$0xff] %vm243, %v302
      %336 = vst.msk [vmem:[%s318 + $0x88] sm:$0xff] %vm243, %v303
      %337 = vst.msk [vmem:[%s318 + $0x90] sm:$0xff] %vm243, %v304
      %338 = vst.msk [vmem:[%s318 + $0x98] sm:$0xff] %vm243, %v305
      %339 = vst.msk [vmem:[%s318 + $0xa0] sm:$0xff] %vm243, %v306
      %340 = vst.msk [vmem:[%s318 + $0xa8] sm:$0xff] %vm243, %v307
      %341 = vst.msk [vmem:[%s318 + $0xb0] sm:$0xff] %vm243, %v308
      %342 = vst.msk [vmem:[%s318 + $0xb8] sm:$0xff] %vm243, %v309
      %343 = vst.msk [vmem:[%s318 + $0xc0] sm:$0xff] %vm243, %v310
      %344 = vst.msk [vmem:[%s318 + $0xc8] sm:$0xff] %vm243, %v311
      %345 = vst.msk [vmem:[%s318 + $0xd0] sm:$0xff] %vm243, %v312
      %346 = vst.msk [vmem:[%s318 + $0xd8] sm:$0xff] %vm243, %v313
      %347 = vst.msk [vmem:[%s318 + $0xe0] sm:$0xff] %vm243, %v314
      %348 = vst.msk [vmem:[%s318 + $0xe8] sm:$0xff] %vm243, %v315
      %349 = vst.msk [vmem:[%s318 + $0xf0] sm:$0xff] %vm243, %v316
      %350 = vst.msk [vmem:[%s318 + $0xf8] sm:$0xff] %vm243, %v317
      %v351 = vld [vmem:[#allocation2] sm:$0xff]
      %v352 = vld [vmem:[#allocation2 + $0x8] sm:$0xff]
      %v353 = vld [vmem:[#allocation2 + $0x10] sm:$0xff]
      %v354 = vld [vmem:[#allocation2 + $0x18] sm:$0xff]
      %v355 = vld [vmem:[#allocation2 + $0x20] sm:$0xff]
      %v356 = vld [vmem:[#allocation2 + $0x28] sm:$0xff]
      %v357 = vld [vmem:[#allocation2 + $0x30] sm:$0xff]
      %v358 = vld [vmem:[#allocation2 + $0x38] sm:$0xff]
      %v359 = vld [vmem:[#allocation2 + $0x40] sm:$0xff]
      %v360 = vld [vmem:[#allocation2 + $0x48] sm:$0xff]
      %v361 = vld [vmem:[#allocation2 + $0x50] sm:$0xff]
      %v362 = vld [vmem:[#allocation2 + $0x58] sm:$0xff]
      %v363 = vld [vmem:[#allocation2 + $0x60] sm:$0xff]
      %v364 = vld [vmem:[#allocation2 + $0x68] sm:$0xff]
      %v365 = vld [vmem:[#allocation2 + $0x70] sm:$0xff]
      %v366 = vld [vmem:[#allocation2 + $0x78] sm:$0xff]
      %v367 = vld [vmem:[#allocation2 + $0x80] sm:$0xff]
      %v368 = vld [vmem:[#allocation2 + $0x88] sm:$0xff]
      %v369 = vld [vmem:[#allocation2 + $0x90] sm:$0xff]
      %v370 = vld [vmem:[#allocation2 + $0x98] sm:$0xff]
      %v371 = vld [vmem:[#allocation2 + $0xa0] sm:$0xff]
      %v372 = vld [vmem:[#allocation2 + $0xa8] sm:$0xff]
      %v373 = vld [vmem:[#allocation2 + $0xb0] sm:$0xff]
      %v374 = vld [vmem:[#allocation2 + $0xb8] sm:$0xff]
      %v375 = vld [vmem:[#allocation2 + $0xc0] sm:$0xff]
      %v376 = vld [vmem:[#allocation2 + $0xc8] sm:$0xff]
      %v377 = vld [vmem:[#allocation2 + $0xd0] sm:$0xff]
      %v378 = vld [vmem:[#allocation2 + $0xd8] sm:$0xff]
      %v379 = vld [vmem:[#allocation2 + $0xe0] sm:$0xff]
      %v380 = vld [vmem:[#allocation2 + $0xe8] sm:$0xff]
      %v381 = vld [vmem:[#allocation2 + $0xf0] sm:$0xff]
      %v382 = vld [vmem:[#allocation2 + $0xf8] sm:$0xff]
      %s383 = scalar_lea.vmem [#allocation2], 16
      %v384 = vld [vmem:[%s383] sm:$0xff]
      %v385 = vld [vmem:[%s383 + $0x8] sm:$0xff]
      %v386 = vld [vmem:[%s383 + $0x10] sm:$0xff]
      %v387 = vld [vmem:[%s383 + $0x18] sm:$0xff]
      %v388 = vld [vmem:[%s383 + $0x20] sm:$0xff]
      %v389 = vld [vmem:[%s383 + $0x28] sm:$0xff]
      %v390 = vld [vmem:[%s383 + $0x30] sm:$0xff]
      %v391 = vld [vmem:[%s383 + $0x38] sm:$0xff]
      %v392 = vld [vmem:[%s383 + $0x40] sm:$0xff]
      %v393 = vld [vmem:[%s383 + $0x48] sm:$0xff]
      %v394 = vld [vmem:[%s383 + $0x50] sm:$0xff]
      %v395 = vld [vmem:[%s383 + $0x58] sm:$0xff]
      %v396 = vld [vmem:[%s383 + $0x60] sm:$0xff]
      %v397 = vld [vmem:[%s383 + $0x68] sm:$0xff]
      %v398 = vld [vmem:[%s383 + $0x70] sm:$0xff]
      %v399 = vld [vmem:[%s383 + $0x78] sm:$0xff]
      %v400 = vld [vmem:[%s383 + $0x80] sm:$0xff]
      %v401 = vld [vmem:[%s383 + $0x88] sm:$0xff]
      %v402 = vld [vmem:[%s383 + $0x90] sm:$0xff]
      %v403 = vld [vmem:[%s383 + $0x98] sm:$0xff]
      %v404 = vld [vmem:[%s383 + $0xa0] sm:$0xff]
      %v405 = vld [vmem:[%s383 + $0xa8] sm:$0xff]
      %v406 = vld [vmem:[%s383 + $0xb0] sm:$0xff]
      %v407 = vld [vmem:[%s383 + $0xb8] sm:$0xff]
      %v408 = vld [vmem:[%s383 + $0xc0] sm:$0xff]
      %v409 = vld [vmem:[%s383 + $0xc8] sm:$0xff]
      %v410 = vld [vmem:[%s383 + $0xd0] sm:$0xff]
      %v411 = vld [vmem:[%s383 + $0xd8] sm:$0xff]
      %v412 = vld [vmem:[%s383 + $0xe0] sm:$0xff]
      %v413 = vld [vmem:[%s383 + $0xe8] sm:$0xff]
      %v414 = vld [vmem:[%s383 + $0xf0] sm:$0xff]
      %v415 = vld [vmem:[%s383 + $0xf8] sm:$0xff]
      %v416 = vmax.f32 %v351, %v384
      %v417 = vmax.f32 %v352, %v385
      %v418 = vmax.f32 %v353, %v386
      %v419 = vmax.f32 %v354, %v387
      %v420 = vmax.f32 %v355, %v388
      %v421 = vmax.f32 %v356, %v389
      %v422 = vmax.f32 %v357, %v390
      %v423 = vmax.f32 %v358, %v391
      %v424 = vmax.f32 %v359, %v392
      %v425 = vmax.f32 %v360, %v393
      %v426 = vmax.f32 %v361, %v394
      %v427 = vmax.f32 %v362, %v395
      %v428 = vmax.f32 %v363, %v396
      %v429 = vmax.f32 %v364, %v397
      %v430 = vmax.f32 %v365, %v398
      %v431 = vmax.f32 %v366, %v399
      %v432 = vmax.f32 %v367, %v400
      %v433 = vmax.f32 %v368, %v401
      %v434 = vmax.f32 %v369, %v402
      %v435 = vmax.f32 %v370, %v403
      %v436 = vmax.f32 %v371, %v404
      %v437 = vmax.f32 %v372, %v405
      %v438 = vmax.f32 %v373, %v406
      %v439 = vmax.f32 %v374, %v407
      %v440 = vmax.f32 %v375, %v408
      %v441 = vmax.f32 %v376, %v409
      %v442 = vmax.f32 %v377, %v410
      %v443 = vmax.f32 %v378, %v411
      %v444 = vmax.f32 %v379, %v412
      %v445 = vmax.f32 %v380, %v413
      %v446 = vmax.f32 %v381, %v414
      %v447 = vmax.f32 %v382, %v415
      %v448 = vld [vmem:[%s318] sm:$0xff]
      %v449 = vld [vmem:[%s318 + $0x8] sm:$0xff]
      %v450 = vld [vmem:[%s318 + $0x10] sm:$0xff]
      %v451 = vld [vmem:[%s318 + $0x18] sm:$0xff]
      %v452 = vld [vmem:[%s318 + $0x20] sm:$0xff]
      %v453 = vld [vmem:[%s318 + $0x28] sm:$0xff]
      %v454 = vld [vmem:[%s318 + $0x30] sm:$0xff]
      %v455 = vld [vmem:[%s318 + $0x38] sm:$0xff]
      %v456 = vld [vmem:[%s318 + $0x40] sm:$0xff]
      %v457 = vld [vmem:[%s318 + $0x48] sm:$0xff]
      %v458 = vld [vmem:[%s318 + $0x50] sm:$0xff]
      %v459 = vld [vmem:[%s318 + $0x58] sm:$0xff]
      %v460 = vld [vmem:[%s318 + $0x60] sm:$0xff]
      %v461 = vld [vmem:[%s318 + $0x68] sm:$0xff]
      %v462 = vld [vmem:[%s318 + $0x70] sm:$0xff]
      %v463 = vld [vmem:[%s318 + $0x78] sm:$0xff]
      %v464 = vld [vmem:[%s318 + $0x80] sm:$0xff]
      %v465 = vld [vmem:[%s318 + $0x88] sm:$0xff]
      %v466 = vld [vmem:[%s318 + $0x90] sm:$0xff]
      %v467 = vld [vmem:[%s318 + $0x98] sm:$0xff]
      %v468 = vld [vmem:[%s318 + $0xa0] sm:$0xff]
      %v469 = vld [vmem:[%s318 + $0xa8] sm:$0xff]
      %v470 = vld [vmem:[%s318 + $0xb0] sm:$0xff]
      %v471 = vld [vmem:[%s318 + $0xb8] sm:$0xff]
      %v472 = vld [vmem:[%s318 + $0xc0] sm:$0xff]
      %v473 = vld [vmem:[%s318 + $0xc8] sm:$0xff]
      %v474 = vld [vmem:[%s318 + $0xd0] sm:$0xff]
      %v475 = vld [vmem:[%s318 + $0xd8] sm:$0xff]
      %v476 = vld [vmem:[%s318 + $0xe0] sm:$0xff]
      %v477 = vld [vmem:[%s318 + $0xe8] sm:$0xff]
      %v478 = vld [vmem:[%s318 + $0xf0] sm:$0xff]
      %v479 = vld [vmem:[%s318 + $0xf8] sm:$0xff]
      %v480 = vmax.f32 %v416, %v448
      %v481 = vmax.f32 %v417, %v449
      %v482 = vmax.f32 %v418, %v450
      %v483 = vmax.f32 %v419, %v451
      %v484 = vmax.f32 %v420, %v452
      %v485 = vmax.f32 %v421, %v453
      %v486 = vmax.f32 %v422, %v454
      %v487 = vmax.f32 %v423, %v455
      %v488 = vmax.f32 %v424, %v456
      %v489 = vmax.f32 %v425, %v457
      %v490 = vmax.f32 %v426, %v458
      %v491 = vmax.f32 %v427, %v459
      %v492 = vmax.f32 %v428, %v460
      %v493 = vmax.f32 %v429, %v461
      %v494 = vmax.f32 %v430, %v462
      %v495 = vmax.f32 %v431, %v463
      %v496 = vmax.f32 %v432, %v464
      %v497 = vmax.f32 %v433, %v465
      %v498 = vmax.f32 %v434, %v466
      %v499 = vmax.f32 %v435, %v467
      %v500 = vmax.f32 %v436, %v468
      %v501 = vmax.f32 %v437, %v469
      %v502 = vmax.f32 %v438, %v470
      %v503 = vmax.f32 %v439, %v471
      %v504 = vmax.f32 %v440, %v472
      %v505 = vmax.f32 %v441, %v473
      %v506 = vmax.f32 %v442, %v474
      %v507 = vmax.f32 %v443, %v475
      %v508 = vmax.f32 %v444, %v476
      %v509 = vmax.f32 %v445, %v477
      %v510 = vmax.f32 %v446, %v478
      %v511 = vmax.f32 %v447, %v479
      %s512 = scalar_lea.vmem [#allocation2], 48
      %v513 = vld [vmem:[%s512] sm:$0xff]
      %v514 = vld [vmem:[%s512 + $0x8] sm:$0xff]
      %v515 = vld [vmem:[%s512 + $0x10] sm:$0xff]
      %v516 = vld [vmem:[%s512 + $0x18] sm:$0xff]
      %v517 = vld [vmem:[%s512 + $0x20] sm:$0xff]
      %v518 = vld [vmem:[%s512 + $0x28] sm:$0xff]
      %v519 = vld [vmem:[%s512 + $0x30] sm:$0xff]
      %v520 = vld [vmem:[%s512 + $0x38] sm:$0xff]
      %v521 = vld [vmem:[%s512 + $0x40] sm:$0xff]
      %v522 = vld [vmem:[%s512 + $0x48] sm:$0xff]
      %v523 = vld [vmem:[%s512 + $0x50] sm:$0xff]
      %v524 = vld [vmem:[%s512 + $0x58] sm:$0xff]
      %v525 = vld [vmem:[%s512 + $0x60] sm:$0xff]
      %v526 = vld [vmem:[%s512 + $0x68] sm:$0xff]
      %v527 = vld [vmem:[%s512 + $0x70] sm:$0xff]
      %v528 = vld [vmem:[%s512 + $0x78] sm:$0xff]
      %v529 = vld [vmem:[%s512 + $0x80] sm:$0xff]
      %v530 = vld [vmem:[%s512 + $0x88] sm:$0xff]
      %v531 = vld [vmem:[%s512 + $0x90] sm:$0xff]
      %v532 = vld [vmem:[%s512 + $0x98] sm:$0xff]
      %v533 = vld [vmem:[%s512 + $0xa0] sm:$0xff]
      %v534 = vld [vmem:[%s512 + $0xa8] sm:$0xff]
      %v535 = vld [vmem:[%s512 + $0xb0] sm:$0xff]
      %v536 = vld [vmem:[%s512 + $0xb8] sm:$0xff]
      %v537 = vld [vmem:[%s512 + $0xc0] sm:$0xff]
      %v538 = vld [vmem:[%s512 + $0xc8] sm:$0xff]
      %v539 = vld [vmem:[%s512 + $0xd0] sm:$0xff]
      %v540 = vld [vmem:[%s512 + $0xd8] sm:$0xff]
      %v541 = vld [vmem:[%s512 + $0xe0] sm:$0xff]
      %v542 = vld [vmem:[%s512 + $0xe8] sm:$0xff]
      %v543 = vld [vmem:[%s512 + $0xf0] sm:$0xff]
      %v544 = vld [vmem:[%s512 + $0xf8] sm:$0xff]
      %v545 = vmax.f32 %v480, %v513
      %v546 = vmax.f32 %v481, %v514
      %v547 = vmax.f32 %v482, %v515
      %v548 = vmax.f32 %v483, %v516
      %v549 = vmax.f32 %v484, %v517
      %v550 = vmax.f32 %v485, %v518
      %v551 = vmax.f32 %v486, %v519
      %v552 = vmax.f32 %v487, %v520
      %v553 = vmax.f32 %v488, %v521
      %v554 = vmax.f32 %v489, %v522
      %v555 = vmax.f32 %v490, %v523
      %v556 = vmax.f32 %v491, %v524
      %v557 = vmax.f32 %v492, %v525
      %v558 = vmax.f32 %v493, %v526
      %v559 = vmax.f32 %v494, %v527
      %v560 = vmax.f32 %v495, %v528
      %v561 = vmax.f32 %v496, %v529
      %v562 = vmax.f32 %v497, %v530
      %v563 = vmax.f32 %v498, %v531
      %v564 = vmax.f32 %v499, %v532
      %v565 = vmax.f32 %v500, %v533
      %v566 = vmax.f32 %v501, %v534
      %v567 = vmax.f32 %v502, %v535
      %v568 = vmax.f32 %v503, %v536
      %v569 = vmax.f32 %v504, %v537
      %v570 = vmax.f32 %v505, %v538
      %v571 = vmax.f32 %v506, %v539
      %v572 = vmax.f32 %v507, %v540
      %v573 = vmax.f32 %v508, %v541
      %v574 = vmax.f32 %v509, %v542
      %v575 = vmax.f32 %v510, %v543
      %v576 = vmax.f32 %v511, %v544
      %s577 = scalar_lea.vmem [#allocation2], 64
      %v578 = vld [vmem:[%s577] sm:$0xff]
      %v579 = vld [vmem:[%s577 + $0x8] sm:$0xff]
      %v580 = vld [vmem:[%s577 + $0x10] sm:$0xff]
      %v581 = vld [vmem:[%s577 + $0x18] sm:$0xff]
      %v582 = vld [vmem:[%s577 + $0x20] sm:$0xff]
      %v583 = vld [vmem:[%s577 + $0x28] sm:$0xff]
      %v584 = vld [vmem:[%s577 + $0x30] sm:$0xff]
      %v585 = vld [vmem:[%s577 + $0x38] sm:$0xff]
      %v586 = vld [vmem:[%s577 + $0x40] sm:$0xff]
      %v587 = vld [vmem:[%s577 + $0x48] sm:$0xff]
      %v588 = vld [vmem:[%s577 + $0x50] sm:$0xff]
      %v589 = vld [vmem:[%s577 + $0x58] sm:$0xff]
      %v590 = vld [vmem:[%s577 + $0x60] sm:$0xff]
      %v591 = vld [vmem:[%s577 + $0x68] sm:$0xff]
      %v592 = vld [vmem:[%s577 + $0x70] sm:$0xff]
      %v593 = vld [vmem:[%s577 + $0x78] sm:$0xff]
      %v594 = vld [vmem:[%s577 + $0x80] sm:$0xff]
      %v595 = vld [vmem:[%s577 + $0x88] sm:$0xff]
      %v596 = vld [vmem:[%s577 + $0x90] sm:$0xff]
      %v597 = vld [vmem:[%s577 + $0x98] sm:$0xff]
      %v598 = vld [vmem:[%s577 + $0xa0] sm:$0xff]
      %v599 = vld [vmem:[%s577 + $0xa8] sm:$0xff]
      %v600 = vld [vmem:[%s577 + $0xb0] sm:$0xff]
      %v601 = vld [vmem:[%s577 + $0xb8] sm:$0xff]
      %v602 = vld [vmem:[%s577 + $0xc0] sm:$0xff]
      %v603 = vld [vmem:[%s577 + $0xc8] sm:$0xff]
      %v604 = vld [vmem:[%s577 + $0xd0] sm:$0xff]
      %v605 = vld [vmem:[%s577 + $0xd8] sm:$0xff]
      %v606 = vld [vmem:[%s577 + $0xe0] sm:$0xff]
      %v607 = vld [vmem:[%s577 + $0xe8] sm:$0xff]
      %v608 = vld [vmem:[%s577 + $0xf0] sm:$0xff]
      %v609 = vld [vmem:[%s577 + $0xf8] sm:$0xff]
      %v610 = vmax.f32 %v545, %v578
      %v611 = vmax.f32 %v546, %v579
      %v612 = vmax.f32 %v547, %v580
      %v613 = vmax.f32 %v548, %v581
      %v614 = vmax.f32 %v549, %v582
      %v615 = vmax.f32 %v550, %v583
      %v616 = vmax.f32 %v551, %v584
      %v617 = vmax.f32 %v552, %v585
      %v618 = vmax.f32 %v553, %v586
      %v619 = vmax.f32 %v554, %v587
      %v620 = vmax.f32 %v555, %v588
      %v621 = vmax.f32 %v556, %v589
      %v622 = vmax.f32 %v557, %v590
      %v623 = vmax.f32 %v558, %v591
      %v624 = vmax.f32 %v559, %v592
      %v625 = vmax.f32 %v560, %v593
      %v626 = vmax.f32 %v561, %v594
      %v627 = vmax.f32 %v562, %v595
      %v628 = vmax.f32 %v563, %v596
      %v629 = vmax.f32 %v564, %v597
      %v630 = vmax.f32 %v565, %v598
      %v631 = vmax.f32 %v566, %v599
      %v632 = vmax.f32 %v567, %v600
      %v633 = vmax.f32 %v568, %v601
      %v634 = vmax.f32 %v569, %v602
      %v635 = vmax.f32 %v570, %v603
      %v636 = vmax.f32 %v571, %v604
      %v637 = vmax.f32 %v572, %v605
      %v638 = vmax.f32 %v573, %v606
      %v639 = vmax.f32 %v574, %v607
      %v640 = vmax.f32 %v575, %v608
      %v641 = vmax.f32 %v576, %v609
      %642 = vst.msk [vmem:[#allocation3 + $0x2] sm:$0xff] %vm243, %v610
      %643 = vst.msk [vmem:[#allocation3 + $0xa] sm:$0xff] %vm243, %v611
      %644 = vst.msk [vmem:[#allocation3 + $0x1a] sm:$0xff] %vm243, %v612
      %645 = vst.msk [vmem:[#allocation3 + $0x22] sm:$0xff] %vm243, %v613
      %646 = vst.msk [vmem:[#allocation3 + $0x32] sm:$0xff] %vm243, %v614
      %647 = vst.msk [vmem:[#allocation3 + $0x3a] sm:$0xff] %vm243, %v615
      %648 = vst.msk [vmem:[#allocation3 + $0x4a] sm:$0xff] %vm243, %v616
      %649 = vst.msk [vmem:[#allocation3 + $0x52] sm:$0xff] %vm243, %v617
      %650 = vst.msk [vmem:[#allocation3 + $0x62] sm:$0xff] %vm243, %v618
      %651 = vst.msk [vmem:[#allocation3 + $0x6a] sm:$0xff] %vm243, %v619
      %652 = vst.msk [vmem:[#allocation3 + $0x7a] sm:$0xff] %vm243, %v620
      %653 = vst.msk [vmem:[#allocation3 + $0x82] sm:$0xff] %vm243, %v621
      %654 = vst.msk [vmem:[#allocation3 + $0x92] sm:$0xff] %vm243, %v622
      %655 = vst.msk [vmem:[#allocation3 + $0x9a] sm:$0xff] %vm243, %v623
      %656 = vst.msk [vmem:[#allocation3 + $0xaa] sm:$0xff] %vm243, %v624
      %657 = vst.msk [vmem:[#allocation3 + $0xb2] sm:$0xff] %vm243, %v625
      %658 = vst.msk [vmem:[#allocation3 + $0xc2] sm:$0xff] %vm243, %v626
      %659 = vst.msk [vmem:[#allocation3 + $0xca] sm:$0xff] %vm243, %v627
      %660 = vst.msk [vmem:[#allocation3 + $0xda] sm:$0xff] %vm243, %v628
      %661 = vst.msk [vmem:[#allocation3 + $0xe2] sm:$0xff] %vm243, %v629
      %662 = vst.msk [vmem:[#allocation3 + $0xf2] sm:$0xff] %vm243, %v630
      %663 = vst.msk [vmem:[#allocation3 + $0xfa] sm:$0xff] %vm243, %v631
      %664 = vst.msk [vmem:[#allocation3 + $0x10a] sm:$0xff] %vm243, %v632
      %665 = vst.msk [vmem:[#allocation3 + $0x112] sm:$0xff] %vm243, %v633
      %666 = vst.msk [vmem:[#allocation3 + $0x122] sm:$0xff] %vm243, %v634
      %667 = vst.msk [vmem:[#allocation3 + $0x12a] sm:$0xff] %vm243, %v635
      %668 = vst.msk [vmem:[#allocation3 + $0x13a] sm:$0xff] %vm243, %v636
      %669 = vst.msk [vmem:[#allocation3 + $0x142] sm:$0xff] %vm243, %v637
      %670 = vst.msk [vmem:[#allocation3 + $0x152] sm:$0xff] %vm243, %v638
      %671 = vst.msk [vmem:[#allocation3 + $0x15a] sm:$0xff] %vm243, %v639
      %672 = vst.msk [vmem:[#allocation3 + $0x16a] sm:$0xff] %vm243, %v640
      %673 = vst.msk [vmem:[#allocation3 + $0x172] sm:$0xff] %vm243, %v641
      %v674 = vld [vmem:[#allocation3] sm:$0xff]
      %v675 = vld [vmem:[#allocation3 + $0x8] sm:$0xff]
      %v676 = vld [vmem:[#allocation3 + $0x18] sm:$0xff]
      %v677 = vld [vmem:[#allocation3 + $0x20] sm:$0xff]
      %v678 = vld [vmem:[#allocation3 + $0x30] sm:$0xff]
      %v679 = vld [vmem:[#allocation3 + $0x38] sm:$0xff]
      %v680 = vld [vmem:[#allocation3 + $0x48] sm:$0xff]
      %v681 = vld [vmem:[#allocation3 + $0x50] sm:$0xff]
      %v682 = vld [vmem:[#allocation3 + $0x60] sm:$0xff]
      %v683 = vld [vmem:[#allocation3 + $0x68] sm:$0xff]
      %v684 = vld [vmem:[#allocation3 + $0x78] sm:$0xff]
      %v685 = vld [vmem:[#allocation3 + $0x80] sm:$0xff]
      %v686 = vld [vmem:[#allocation3 + $0x90] sm:$0xff]
      %v687 = vld [vmem:[#allocation3 + $0x98] sm:$0xff]
      %v688 = vld [vmem:[#allocation3 + $0xa8] sm:$0xff]
      %v689 = vld [vmem:[#allocation3 + $0xb0] sm:$0xff]
      %v690 = vld [vmem:[#allocation3 + $0xc0] sm:$0xff]
      %v691 = vld [vmem:[#allocation3 + $0xc8] sm:$0xff]
      %v692 = vld [vmem:[#allocation3 + $0xd8] sm:$0xff]
      %v693 = vld [vmem:[#allocation3 + $0xe0] sm:$0xff]
      %v694 = vld [vmem:[#allocation3 + $0xf0] sm:$0xff]
      %v695 = vld [vmem:[#allocation3 + $0xf8] sm:$0xff]
      %v696 = vld [vmem:[#allocation3 + $0x108] sm:$0xff]
      %v697 = vld [vmem:[#allocation3 + $0x110] sm:$0xff]
      %v698 = vld [vmem:[#allocation3 + $0x120] sm:$0xff]
      %v699 = vld [vmem:[#allocation3 + $0x128] sm:$0xff]
      %v700 = vld [vmem:[#allocation3 + $0x138] sm:$0xff]
      %v701 = vld [vmem:[#allocation3 + $0x140] sm:$0xff]
      %v702 = vld [vmem:[#allocation3 + $0x150] sm:$0xff]
      %v703 = vld [vmem:[#allocation3 + $0x158] sm:$0xff]
      %v704 = vld [vmem:[#allocation3 + $0x168] sm:$0xff]
      %v705 = vld [vmem:[#allocation3 + $0x170] sm:$0xff]
      %v706 = vld [vmem:[#allocation3 + $0x1] sm:$0xff]
      %v707 = vld [vmem:[#allocation3 + $0x9] sm:$0xff]
      %v708 = vld [vmem:[#allocation3 + $0x19] sm:$0xff]
      %v709 = vld [vmem:[#allocation3 + $0x21] sm:$0xff]
      %v710 = vld [vmem:[#allocation3 + $0x31] sm:$0xff]
      %v711 = vld [vmem:[#allocation3 + $0x39] sm:$0xff]
      %v712 = vld [vmem:[#allocation3 + $0x49] sm:$0xff]
      %v713 = vld [vmem:[#allocation3 + $0x51] sm:$0xff]
      %v714 = vld [vmem:[#allocation3 + $0x61] sm:$0xff]
      %v715 = vld [vmem:[#allocation3 + $0x69] sm:$0xff]
      %v716 = vld [vmem:[#allocation3 + $0x79] sm:$0xff]
      %v717 = vld [vmem:[#allocation3 + $0x81] sm:$0xff]
      %v718 = vld [vmem:[#allocation3 + $0x91] sm:$0xff]
      %v719 = vld [vmem:[#allocation3 + $0x99] sm:$0xff]
      %v720 = vld [vmem:[#allocation3 + $0xa9] sm:$0xff]
      %v721 = vld [vmem:[#allocation3 + $0xb1] sm:$0xff]
      %v722 = vld [vmem:[#allocation3 + $0xc1] sm:$0xff]
      %v723 = vld [vmem:[#allocation3 + $0xc9] sm:$0xff]
      %v724 = vld [vmem:[#allocation3 + $0xd9] sm:$0xff]
      %v725 = vld [vmem:[#allocation3 + $0xe1] sm:$0xff]
      %v726 = vld [vmem:[#allocation3 + $0xf1] sm:$0xff]
      %v727 = vld [vmem:[#allocation3 + $0xf9] sm:$0xff]
      %v728 = vld [vmem:[#allocation3 + $0x109] sm:$0xff]
      %v729 = vld [vmem:[#allocation3 + $0x111] sm:$0xff]
      %v730 = vld [vmem:[#allocation3 + $0x121] sm:$0xff]
      %v731 = vld [vmem:[#allocation3 + $0x129] sm:$0xff]
      %v732 = vld [vmem:[#allocation3 + $0x139] sm:$0xff]
      %v733 = vld [vmem:[#allocation3 + $0x141] sm:$0xff]
      %v734 = vld [vmem:[#allocation3 + $0x151] sm:$0xff]
      %v735 = vld [vmem:[#allocation3 + $0x159] sm:$0xff]
      %v736 = vld [vmem:[#allocation3 + $0x169] sm:$0xff]
      %v737 = vld [vmem:[#allocation3 + $0x171] sm:$0xff]
      %v738 = vmax.f32 %v674, %v706
      %v739 = vmax.f32 %v675, %v707
      %v740 = vmax.f32 %v676, %v708
      %v741 = vmax.f32 %v677, %v709
      %v742 = vmax.f32 %v678, %v710
      %v743 = vmax.f32 %v679, %v711
      %v744 = vmax.f32 %v680, %v712
      %v745 = vmax.f32 %v681, %v713
      %v746 = vmax.f32 %v682, %v714
      %v747 = vmax.f32 %v683, %v715
      %v748 = vmax.f32 %v684, %v716
      %v749 = vmax.f32 %v685, %v717
      %v750 = vmax.f32 %v686, %v718
      %v751 = vmax.f32 %v687, %v719
      %v752 = vmax.f32 %v688, %v720
      %v753 = vmax.f32 %v689, %v721
      %v754 = vmax.f32 %v690, %v722
      %v755 = vmax.f32 %v691, %v723
      %v756 = vmax.f32 %v692, %v724
      %v757 = vmax.f32 %v693, %v725
      %v758 = vmax.f32 %v694, %v726
      %v759 = vmax.f32 %v695, %v727
      %v760 = vmax.f32 %v696, %v728
      %v761 = vmax.f32 %v697, %v729
      %v762 = vmax.f32 %v698, %v730
      %v763 = vmax.f32 %v699, %v731
      %v764 = vmax.f32 %v700, %v732
      %v765 = vmax.f32 %v701, %v733
      %v766 = vmax.f32 %v702, %v734
      %v767 = vmax.f32 %v703, %v735
      %v768 = vmax.f32 %v704, %v736
      %v769 = vmax.f32 %v705, %v737
      %v770 = vld [vmem:[#allocation3 + $0x2] sm:$0xff]
      %v771 = vld [vmem:[#allocation3 + $0xa] sm:$0xff]
      %v772 = vld [vmem:[#allocation3 + $0x1a] sm:$0xff]
      %v773 = vld [vmem:[#allocation3 + $0x22] sm:$0xff]
      %v774 = vld [vmem:[#allocation3 + $0x32] sm:$0xff]
      %v775 = vld [vmem:[#allocation3 + $0x3a] sm:$0xff]
      %v776 = vld [vmem:[#allocation3 + $0x4a] sm:$0xff]
      %v777 = vld [vmem:[#allocation3 + $0x52] sm:$0xff]
      %v778 = vld [vmem:[#allocation3 + $0x62] sm:$0xff]
      %v779 = vld [vmem:[#allocation3 + $0x6a] sm:$0xff]
      %v780 = vld [vmem:[#allocation3 + $0x7a] sm:$0xff]
      %v781 = vld [vmem:[#allocation3 + $0x82] sm:$0xff]
      %v782 = vld [vmem:[#allocation3 + $0x92] sm:$0xff]
      %v783 = vld [vmem:[#allocation3 + $0x9a] sm:$0xff]
      %v784 = vld [vmem:[#allocation3 + $0xaa] sm:$0xff]
      %v785 = vld [vmem:[#allocation3 + $0xb2] sm:$0xff]
      %v786 = vld [vmem:[#allocation3 + $0xc2] sm:$0xff]
      %v787 = vld [vmem:[#allocation3 + $0xca] sm:$0xff]
      %v788 = vld [vmem:[#allocation3 + $0xda] sm:$0xff]
      %v789 = vld [vmem:[#allocation3 + $0xe2] sm:$0xff]
      %v790 = vld [vmem:[#allocation3 + $0xf2] sm:$0xff]
      %v791 = vld [vmem:[#allocation3 + $0xfa] sm:$0xff]
      %v792 = vld [vmem:[#allocation3 + $0x10a] sm:$0xff]
      %v793 = vld [vmem:[#allocation3 + $0x112] sm:$0xff]
      %v794 = vld [vmem:[#allocation3 + $0x122] sm:$0xff]
      %v795 = vld [vmem:[#allocation3 + $0x12a] sm:$0xff]
      %v796 = vld [vmem:[#allocation3 + $0x13a] sm:$0xff]
      %v797 = vld [vmem:[#allocation3 + $0x142] sm:$0xff]
      %v798 = vld [vmem:[#allocation3 + $0x152] sm:$0xff]
      %v799 = vld [vmem:[#allocation3 + $0x15a] sm:$0xff]
      %v800 = vld [vmem:[#allocation3 + $0x16a] sm:$0xff]
      %v801 = vld [vmem:[#allocation3 + $0x172] sm:$0xff]
      %v802 = vmax.f32 %v738, %v770
      %v803 = vmax.f32 %v739, %v771
      %v804 = vmax.f32 %v740, %v772
      %v805 = vmax.f32 %v741, %v773
      %v806 = vmax.f32 %v742, %v774
      %v807 = vmax.f32 %v743, %v775
      %v808 = vmax.f32 %v744, %v776
      %v809 = vmax.f32 %v745, %v777
      %v810 = vmax.f32 %v746, %v778
      %v811 = vmax.f32 %v747, %v779
      %v812 = vmax.f32 %v748, %v780
      %v813 = vmax.f32 %v749, %v781
      %v814 = vmax.f32 %v750, %v782
      %v815 = vmax.f32 %v751, %v783
      %v816 = vmax.f32 %v752, %v784
      %v817 = vmax.f32 %v753, %v785
      %v818 = vmax.f32 %v754, %v786
      %v819 = vmax.f32 %v755, %v787
      %v820 = vmax.f32 %v756, %v788
      %v821 = vmax.f32 %v757, %v789
      %v822 = vmax.f32 %v758, %v790
      %v823 = vmax.f32 %v759, %v791
      %v824 = vmax.f32 %v760, %v792
      %v825 = vmax.f32 %v761, %v793
      %v826 = vmax.f32 %v762, %v794
      %v827 = vmax.f32 %v763, %v795
      %v828 = vmax.f32 %v764, %v796
      %v829 = vmax.f32 %v765, %v797
      %v830 = vmax.f32 %v766, %v798
      %v831 = vmax.f32 %v767, %v799
      %v832 = vmax.f32 %v768, %v800
      %v833 = vmax.f32 %v769, %v801
      %v834 = vld [vmem:[#allocation3 + $0x3] sm:$0xff]
      %v835 = vld [vmem:[#allocation3 + $0xb] sm:$0xff]
      %v836 = vld [vmem:[#allocation3 + $0x1b] sm:$0xff]
      %v837 = vld [vmem:[#allocation3 + $0x23] sm:$0xff]
      %v838 = vld [vmem:[#allocation3 + $0x33] sm:$0xff]
      %v839 = vld [vmem:[#allocation3 + $0x3b] sm:$0xff]
      %v840 = vld [vmem:[#allocation3 + $0x4b] sm:$0xff]
      %v841 = vld [vmem:[#allocation3 + $0x53] sm:$0xff]
      %v842 = vld [vmem:[#allocation3 + $0x63] sm:$0xff]
      %v843 = vld [vmem:[#allocation3 + $0x6b] sm:$0xff]
      %v844 = vld [vmem:[#allocation3 + $0x7b] sm:$0xff]
      %v845 = vld [vmem:[#allocation3 + $0x83] sm:$0xff]
      %v846 = vld [vmem:[#allocation3 + $0x93] sm:$0xff]
      %v847 = vld [vmem:[#allocation3 + $0x9b] sm:$0xff]
      %v848 = vld [vmem:[#allocation3 + $0xab] sm:$0xff]
      %v849 = vld [vmem:[#allocation3 + $0xb3] sm:$0xff]
      %v850 = vld [vmem:[#allocation3 + $0xc3] sm:$0xff]
      %v851 = vld [vmem:[#allocation3 + $0xcb] sm:$0xff]
      %v852 = vld [vmem:[#allocation3 + $0xdb] sm:$0xff]
      %v853 = vld [vmem:[#allocation3 + $0xe3] sm:$0xff]
      %v854 = vld [vmem:[#allocation3 + $0xf3] sm:$0xff]
      %v855 = vld [vmem:[#allocation3 + $0xfb] sm:$0xff]
      %v856 = vld [vmem:[#allocation3 + $0x10b] sm:$0xff]
      %v857 = vld [vmem:[#allocation3 + $0x113] sm:$0xff]
      %v858 = vld [vmem:[#allocation3 + $0x123] sm:$0xff]
      %v859 = vld [vmem:[#allocation3 + $0x12b] sm:$0xff]
      %v860 = vld [vmem:[#allocation3 + $0x13b] sm:$0xff]
      %v861 = vld [vmem:[#allocation3 + $0x143] sm:$0xff]
      %v862 = vld [vmem:[#allocation3 + $0x153] sm:$0xff]
      %v863 = vld [vmem:[#allocation3 + $0x15b] sm:$0xff]
      %v864 = vld [vmem:[#allocation3 + $0x16b] sm:$0xff]
      %v865 = vld [vmem:[#allocation3 + $0x173] sm:$0xff]
      %v866 = vmax.f32 %v802, %v834
      %v867 = vmax.f32 %v803, %v835
      %v868 = vmax.f32 %v804, %v836
      %v869 = vmax.f32 %v805, %v837
      %v870 = vmax.f32 %v806, %v838
      %v871 = vmax.f32 %v807, %v839
      %v872 = vmax.f32 %v808, %v840
      %v873 = vmax.f32 %v809, %v841
      %v874 = vmax.f32 %v810, %v842
      %v875 = vmax.f32 %v811, %v843
      %v876 = vmax.f32 %v812, %v844
      %v877 = vmax.f32 %v813, %v845
      %v878 = vmax.f32 %v814, %v846
      %v879 = vmax.f32 %v815, %v847
      %v880 = vmax.f32 %v816, %v848
      %v881 = vmax.f32 %v817, %v849
      %v882 = vmax.f32 %v818, %v850
      %v883 = vmax.f32 %v819, %v851
      %v884 = vmax.f32 %v820, %v852
      %v885 = vmax.f32 %v821, %v853
      %v886 = vmax.f32 %v822, %v854
      %v887 = vmax.f32 %v823, %v855
      %v888 = vmax.f32 %v824, %v856
      %v889 = vmax.f32 %v825, %v857
      %v890 = vmax.f32 %v826, %v858
      %v891 = vmax.f32 %v827, %v859
      %v892 = vmax.f32 %v828, %v860
      %v893 = vmax.f32 %v829, %v861
      %v894 = vmax.f32 %v830, %v862
      %v895 = vmax.f32 %v831, %v863
      %v896 = vmax.f32 %v832, %v864
      %v897 = vmax.f32 %v833, %v865
      %v898 = vld [vmem:[#allocation3 + $0x4] sm:$0xff]
      %v899 = vld [vmem:[#allocation3 + $0xc] sm:$0xff]
      %v900 = vld [vmem:[#allocation3 + $0x1c] sm:$0xff]
      %v901 = vld [vmem:[#allocation3 + $0x24] sm:$0xff]
      %v902 = vld [vmem:[#allocation3 + $0x34] sm:$0xff]
      %v903 = vld [vmem:[#allocation3 + $0x3c] sm:$0xff]
      %v904 = vld [vmem:[#allocation3 + $0x4c] sm:$0xff]
      %v905 = vld [vmem:[#allocation3 + $0x54] sm:$0xff]
      %v906 = vld [vmem:[#allocation3 + $0x64] sm:$0xff]
      %v907 = vld [vmem:[#allocation3 + $0x6c] sm:$0xff]
      %v908 = vld [vmem:[#allocation3 + $0x7c] sm:$0xff]
      %v909 = vld [vmem:[#allocation3 + $0x84] sm:$0xff]
      %v910 = vld [vmem:[#allocation3 + $0x94] sm:$0xff]
      %v911 = vld [vmem:[#allocation3 + $0x9c] sm:$0xff]
      %v912 = vld [vmem:[#allocation3 + $0xac] sm:$0xff]
      %v913 = vld [vmem:[#allocation3 + $0xb4] sm:$0xff]
      %v914 = vld [vmem:[#allocation3 + $0xc4] sm:$0xff]
      %v915 = vld [vmem:[#allocation3 + $0xcc] sm:$0xff]
      %v916 = vld [vmem:[#allocation3 + $0xdc] sm:$0xff]
      %v917 = vld [vmem:[#allocation3 + $0xe4] sm:$0xff]
      %v918 = vld [vmem:[#allocation3 + $0xf4] sm:$0xff]
      %v919 = vld [vmem:[#allocation3 + $0xfc] sm:$0xff]
      %v920 = vld [vmem:[#allocation3 + $0x10c] sm:$0xff]
      %v921 = vld [vmem:[#allocation3 + $0x114] sm:$0xff]
      %v922 = vld [vmem:[#allocation3 + $0x124] sm:$0xff]
      %v923 = vld [vmem:[#allocation3 + $0x12c] sm:$0xff]
      %v924 = vld [vmem:[#allocation3 + $0x13c] sm:$0xff]
      %v925 = vld [vmem:[#allocation3 + $0x144] sm:$0xff]
      %v926 = vld [vmem:[#allocation3 + $0x154] sm:$0xff]
      %v927 = vld [vmem:[#allocation3 + $0x15c] sm:$0xff]
      %v928 = vld [vmem:[#allocation3 + $0x16c] sm:$0xff]
      %v929 = vld [vmem:[#allocation3 + $0x174] sm:$0xff]
      %v930 = vmax.f32 %v866, %v898
      %v931 = vmax.f32 %v867, %v899
      %v932 = vmax.f32 %v868, %v900
      %v933 = vmax.f32 %v869, %v901
      %v934 = vmax.f32 %v870, %v902
      %v935 = vmax.f32 %v871, %v903
      %v936 = vmax.f32 %v872, %v904
      %v937 = vmax.f32 %v873, %v905
      %v938 = vmax.f32 %v874, %v906
      %v939 = vmax.f32 %v875, %v907
      %v940 = vmax.f32 %v876, %v908
      %v941 = vmax.f32 %v877, %v909
      %v942 = vmax.f32 %v878, %v910
      %v943 = vmax.f32 %v879, %v911
      %v944 = vmax.f32 %v880, %v912
      %v945 = vmax.f32 %v881, %v913
      %v946 = vmax.f32 %v882, %v914
      %v947 = vmax.f32 %v883, %v915
      %v948 = vmax.f32 %v884, %v916
      %v949 = vmax.f32 %v885, %v917
      %v950 = vmax.f32 %v886, %v918
      %v951 = vmax.f32 %v887, %v919
      %v952 = vmax.f32 %v888, %v920
      %v953 = vmax.f32 %v889, %v921
      %v954 = vmax.f32 %v890, %v922
      %v955 = vmax.f32 %v891, %v923
      %v956 = vmax.f32 %v892, %v924
      %v957 = vmax.f32 %v893, %v925
      %v958 = vmax.f32 %v894, %v926
      %v959 = vmax.f32 %v895, %v927
      %v960 = vmax.f32 %v896, %v928
      %v961 = vmax.f32 %v897, %v929
      %962 = vst.msk [vmem:[%s226] sm:$0xff] %vm243, %v930
      %963 = vst.msk [vmem:[%s226 + $0x8] sm:$0xff] %vm243, %v931
      %964 = vst.msk [vmem:[%s226 + $0x10] sm:$0xff] %vm243, %v932
      %965 = vst.msk [vmem:[%s226 + $0x18] sm:$0xff] %vm243, %v933
      %966 = vst.msk [vmem:[%s226 + $0x20] sm:$0xff] %vm243, %v934
      %967 = vst.msk [vmem:[%s226 + $0x28] sm:$0xff] %vm243, %v935
      %968 = vst.msk [vmem:[%s226 + $0x30] sm:$0xff] %vm243, %v936
      %969 = vst.msk [vmem:[%s226 + $0x38] sm:$0xff] %vm243, %v937
      %970 = vst.msk [vmem:[%s226 + $0x40] sm:$0xff] %vm243, %v938
      %971 = vst.msk [vmem:[%s226 + $0x48] sm:$0xff] %vm243, %v939
      %972 = vst.msk [vmem:[%s226 + $0x50] sm:$0xff] %vm243, %v940
      %973 = vst.msk [vmem:[%s226 + $0x58] sm:$0xff] %vm243, %v941
      %974 = vst.msk [vmem:[%s226 + $0x60] sm:$0xff] %vm243, %v942
      %975 = vst.msk [vmem:[%s226 + $0x68] sm:$0xff] %vm243, %v943
      %976 = vst.msk [vmem:[%s226 + $0x70] sm:$0xff] %vm243, %v944
      %977 = vst.msk [vmem:[%s226 + $0x78] sm:$0xff] %vm243, %v945
      %978 = vst.msk [vmem:[%s226 + $0x80] sm:$0xff] %vm243, %v946
      %979 = vst.msk [vmem:[%s226 + $0x88] sm:$0xff] %vm243, %v947
      %980 = vst.msk [vmem:[%s226 + $0x90] sm:$0xff] %vm243, %v948
      %981 = vst.msk [vmem:[%s226 + $0x98] sm:$0xff] %vm243, %v949
      %982 = vst.msk [vmem:[%s226 + $0xa0] sm:$0xff] %vm243, %v950
      %983 = vst.msk [vmem:[%s226 + $0xa8] sm:$0xff] %vm243, %v951
      %984 = vst.msk [vmem:[%s226 + $0xb0] sm:$0xff] %vm243, %v952
      %985 = vst.msk [vmem:[%s226 + $0xb8] sm:$0xff] %vm243, %v953
      %986 = vst.msk [vmem:[%s226 + $0xc0] sm:$0xff] %vm243, %v954
      %987 = vst.msk [vmem:[%s226 + $0xc8] sm:$0xff] %vm243, %v955
      %988 = vst.msk [vmem:[%s226 + $0xd0] sm:$0xff] %vm243, %v956
      %989 = vst.msk [vmem:[%s226 + $0xd8] sm:$0xff] %vm243, %v957
      %990 = vst.msk [vmem:[%s226 + $0xe0] sm:$0xff] %vm243, %v958
      %991 = vst.msk [vmem:[%s226 + $0xe8] sm:$0xff] %vm243, %v959
      %992 = vst.msk [vmem:[%s226 + $0xf0] sm:$0xff] %vm243, %v960
      %993 = vst.msk [vmem:[%s226 + $0xf8] sm:$0xff] %vm243, %v961
      %994 = vst.msk [vmem:[%s318] sm:$0xff] %vm243, %v930
      %995 = vst.msk [vmem:[%s318 + $0x8] sm:$0xff] %vm243, %v931
      %996 = vst.msk [vmem:[%s318 + $0x10] sm:$0xff] %vm243, %v932
      %997 = vst.msk [vmem:[%s318 + $0x18] sm:$0xff] %vm243, %v933
      %998 = vst.msk [vmem:[%s318 + $0x20] sm:$0xff] %vm243, %v934
      %999 = vst.msk [vmem:[%s318 + $0x28] sm:$0xff] %vm243, %v935
      %1000 = vst.msk [vmem:[%s318 + $0x30] sm:$0xff] %vm243, %v936
      %1001 = vst.msk [vmem:[%s318 + $0x38] sm:$0xff] %vm243, %v937
      %1002 = vst.msk [vmem:[%s318 + $0x40] sm:$0xff] %vm243, %v938
      %1003 = vst.msk [vmem:[%s318 + $0x48] sm:$0xff] %vm243, %v939
      %1004 = vst.msk [vmem:[%s318 + $0x50] sm:$0xff] %vm243, %v940
      %1005 = vst.msk [vmem:[%s318 + $0x58] sm:$0xff] %vm243, %v941
      %1006 = vst.msk [vmem:[%s318 + $0x60] sm:$0xff] %vm243, %v942
      %1007 = vst.msk [vmem:[%s318 + $0x68] sm:$0xff] %vm243, %v943
      %1008 = vst.msk [vmem:[%s318 + $0x70] sm:$0xff] %vm243, %v944
      %1009 = vst.msk [vmem:[%s318 + $0x78] sm:$0xff] %vm243, %v945
      %1010 = vst.msk [vmem:[%s318 + $0x80] sm:$0xff] %vm243, %v946
      %1011 = vst.msk [vmem:[%s318 + $0x88] sm:$0xff] %vm243, %v947
      %1012 = vst.msk [vmem:[%s318 + $0x90] sm:$0xff] %vm243, %v948
      %1013 = vst.msk [vmem:[%s318 + $0x98] sm:$0xff] %vm243, %v949
      %1014 = vst.msk [vmem:[%s318 + $0xa0] sm:$0xff] %vm243, %v950
      %1015 = vst.msk [vmem:[%s318 + $0xa8] sm:$0xff] %vm243, %v951
      %1016 = vst.msk [vmem:[%s318 + $0xb0] sm:$0xff] %vm243, %v952
      %1017 = vst.msk [vmem:[%s318 + $0xb8] sm:$0xff] %vm243, %v953
      %1018 = vst.msk [vmem:[%s318 + $0xc0] sm:$0xff] %vm243, %v954
      %1019 = vst.msk [vmem:[%s318 + $0xc8] sm:$0xff] %vm243, %v955
      %1020 = vst.msk [vmem:[%s318 + $0xd0] sm:$0xff] %vm243, %v956
      %1021 = vst.msk [vmem:[%s318 + $0xd8] sm:$0xff] %vm243, %v957
      %1022 = vst.msk [vmem:[%s318 + $0xe0] sm:$0xff] %vm243, %v958
      %1023 = vst.msk [vmem:[%s318 + $0xe8] sm:$0xff] %vm243, %v959
      %1024 = vst.msk [vmem:[%s318 + $0xf0] sm:$0xff] %vm243, %v960
      %1025 = vst.msk [vmem:[%s318 + $0xf8] sm:$0xff] %vm243, %v961
      %v1026 = vld [vmem:[#allocation2] sm:$0xff]
      %v1027 = vld [vmem:[#allocation2 + $0x8] sm:$0xff]
      %v1028 = vld [vmem:[#allocation2 + $0x10] sm:$0xff]
      %v1029 = vld [vmem:[#allocation2 + $0x18] sm:$0xff]
      %v1030 = vld [vmem:[#allocation2 + $0x20] sm:$0xff]
      %v1031 = vld [vmem:[#allocation2 + $0x28] sm:$0xff]
      %v1032 = vld [vmem:[#allocation2 + $0x30] sm:$0xff]
      %v1033 = vld [vmem:[#allocation2 + $0x38] sm:$0xff]
      %v1034 = vld [vmem:[#allocation2 + $0x40] sm:$0xff]
      %v1035 = vld [vmem:[#allocation2 + $0x48] sm:$0xff]
      %v1036 = vld [vmem:[#allocation2 + $0x50] sm:$0xff]
      %v1037 = vld [vmem:[#allocation2 + $0x58] sm:$0xff]
      %v1038 = vld [vmem:[#allocation2 + $0x60] sm:$0xff]
      %v1039 = vld [vmem:[#allocation2 + $0x68] sm:$0xff]
      %v1040 = vld [vmem:[#allocation2 + $0x70] sm:$0xff]
      %v1041 = vld [vmem:[#allocation2 + $0x78] sm:$0xff]
      %v1042 = vld [vmem:[#allocation2 + $0x80] sm:$0xff]
      %v1043 = vld [vmem:[#allocation2 + $0x88] sm:$0xff]
      %v1044 = vld [vmem:[#allocation2 + $0x90] sm:$0xff]
      %v1045 = vld [vmem:[#allocation2 + $0x98] sm:$0xff]
      %v1046 = vld [vmem:[#allocation2 + $0xa0] sm:$0xff]
      %v1047 = vld [vmem:[#allocation2 + $0xa8] sm:$0xff]
      %v1048 = vld [vmem:[#allocation2 + $0xb0] sm:$0xff]
      %v1049 = vld [vmem:[#allocation2 + $0xb8] sm:$0xff]
      %v1050 = vld [vmem:[#allocation2 + $0xc0] sm:$0xff]
      %v1051 = vld [vmem:[#allocation2 + $0xc8] sm:$0xff]
      %v1052 = vld [vmem:[#allocation2 + $0xd0] sm:$0xff]
      %v1053 = vld [vmem:[#allocation2 + $0xd8] sm:$0xff]
      %v1054 = vld [vmem:[#allocation2 + $0xe0] sm:$0xff]
      %v1055 = vld [vmem:[#allocation2 + $0xe8] sm:$0xff]
      %v1056 = vld [vmem:[#allocation2 + $0xf0] sm:$0xff]
      %v1057 = vld [vmem:[#allocation2 + $0xf8] sm:$0xff]
      %v1058 = vld [vmem:[%s383] sm:$0xff]
      %v1059 = vld [vmem:[%s383 + $0x8] sm:$0xff]
      %v1060 = vld [vmem:[%s383 + $0x10] sm:$0xff]
      %v1061 = vld [vmem:[%s383 + $0x18] sm:$0xff]
      %v1062 = vld [vmem:[%s383 + $0x20] sm:$0xff]
      %v1063 = vld [vmem:[%s383 + $0x28] sm:$0xff]
      %v1064 = vld [vmem:[%s383 + $0x30] sm:$0xff]
      %v1065 = vld [vmem:[%s383 + $0x38] sm:$0xff]
      %v1066 = vld [vmem:[%s383 + $0x40] sm:$0xff]
      %v1067 = vld [vmem:[%s383 + $0x48] sm:$0xff]
      %v1068 = vld [vmem:[%s383 + $0x50] sm:$0xff]
      %v1069 = vld [vmem:[%s383 + $0x58] sm:$0xff]
      %v1070 = vld [vmem:[%s383 + $0x60] sm:$0xff]
      %v1071 = vld [vmem:[%s383 + $0x68] sm:$0xff]
      %v1072 = vld [vmem:[%s383 + $0x70] sm:$0xff]
      %v1073 = vld [vmem:[%s383 + $0x78] sm:$0xff]
      %v1074 = vld [vmem:[%s383 + $0x80] sm:$0xff]
      %v1075 = vld [vmem:[%s383 + $0x88] sm:$0xff]
      %v1076 = vld [vmem:[%s383 + $0x90] sm:$0xff]
      %v1077 = vld [vmem:[%s383 + $0x98] sm:$0xff]
      %v1078 = vld [vmem:[%s383 + $0xa0] sm:$0xff]
      %v1079 = vld [vmem:[%s383 + $0xa8] sm:$0xff]
      %v1080 = vld [vmem:[%s383 + $0xb0] sm:$0xff]
      %v1081 = vld [vmem:[%s383 + $0xb8] sm:$0xff]
      %v1082 = vld [vmem:[%s383 + $0xc0] sm:$0xff]
      %v1083 = vld [vmem:[%s383 + $0xc8] sm:$0xff]
      %v1084 = vld [vmem:[%s383 + $0xd0] sm:$0xff]
      %v1085 = vld [vmem:[%s383 + $0xd8] sm:$0xff]
      %v1086 = vld [vmem:[%s383 + $0xe0] sm:$0xff]
      %v1087 = vld [vmem:[%s383 + $0xe8] sm:$0xff]
      %v1088 = vld [vmem:[%s383 + $0xf0] sm:$0xff]
      %v1089 = vld [vmem:[%s383 + $0xf8] sm:$0xff]
      %v1090 = vmax.f32 %v1026, %v1058
      %v1091 = vmax.f32 %v1027, %v1059
      %v1092 = vmax.f32 %v1028, %v1060
      %v1093 = vmax.f32 %v1029, %v1061
      %v1094 = vmax.f32 %v1030, %v1062
      %v1095 = vmax.f32 %v1031, %v1063
      %v1096 = vmax.f32 %v1032, %v1064
      %v1097 = vmax.f32 %v1033, %v1065
      %v1098 = vmax.f32 %v1034, %v1066
      %v1099 = vmax.f32 %v1035, %v1067
      %v1100 = vmax.f32 %v1036, %v1068
      %v1101 = vmax.f32 %v1037, %v1069
      %v1102 = vmax.f32 %v1038, %v1070
      %v1103 = vmax.f32 %v1039, %v1071
      %v1104 = vmax.f32 %v1040, %v1072
      %v1105 = vmax.f32 %v1041, %v1073
      %v1106 = vmax.f32 %v1042, %v1074
      %v1107 = vmax.f32 %v1043, %v1075
      %v1108 = vmax.f32 %v1044, %v1076
      %v1109 = vmax.f32 %v1045, %v1077
      %v1110 = vmax.f32 %v1046, %v1078
      %v1111 = vmax.f32 %v1047, %v1079
      %v1112 = vmax.f32 %v1048, %v1080
      %v1113 = vmax.f32 %v1049, %v1081
      %v1114 = vmax.f32 %v1050, %v1082
      %v1115 = vmax.f32 %v1051, %v1083
      %v1116 = vmax.f32 %v1052, %v1084
      %v1117 = vmax.f32 %v1053, %v1085
      %v1118 = vmax.f32 %v1054, %v1086
      %v1119 = vmax.f32 %v1055, %v1087
      %v1120 = vmax.f32 %v1056, %v1088
      %v1121 = vmax.f32 %v1057, %v1089
      %v1122 = vld [vmem:[%s318] sm:$0xff]
      %v1123 = vld [vmem:[%s318 + $0x8] sm:$0xff]
      %v1124 = vld [vmem:[%s318 + $0x10] sm:$0xff]
      %v1125 = vld [vmem:[%s318 + $0x18] sm:$0xff]
      %v1126 = vld [vmem:[%s318 + $0x20] sm:$0xff]
      %v1127 = vld [vmem:[%s318 + $0x28] sm:$0xff]
      %v1128 = vld [vmem:[%s318 + $0x30] sm:$0xff]
      %v1129 = vld [vmem:[%s318 + $0x38] sm:$0xff]
      %v1130 = vld [vmem:[%s318 + $0x40] sm:$0xff]
      %v1131 = vld [vmem:[%s318 + $0x48] sm:$0xff]
      %v1132 = vld [vmem:[%s318 + $0x50] sm:$0xff]
      %v1133 = vld [vmem:[%s318 + $0x58] sm:$0xff]
      %v1134 = vld [vmem:[%s318 + $0x60] sm:$0xff]
      %v1135 = vld [vmem:[%s318 + $0x68] sm:$0xff]
      %v1136 = vld [vmem:[%s318 + $0x70] sm:$0xff]
      %v1137 = vld [vmem:[%s318 + $0x78] sm:$0xff]
      %v1138 = vld [vmem:[%s318 + $0x80] sm:$0xff]
      %v1139 = vld [vmem:[%s318 + $0x88] sm:$0xff]
      %v1140 = vld [vmem:[%s318 + $0x90] sm:$0xff]
      %v1141 = vld [vmem:[%s318 + $0x98] sm:$0xff]
      %v1142 = vld [vmem:[%s318 + $0xa0] sm:$0xff]
      %v1143 = vld [vmem:[%s318 + $0xa8] sm:$0xff]
      %v1144 = vld [vmem:[%s318 + $0xb0] sm:$0xff]
      %v1145 = vld [vmem:[%s318 + $0xb8] sm:$0xff]
      %v1146 = vld [vmem:[%s318 + $0xc0] sm:$0xff]
      %v1147 = vld [vmem:[%s318 + $0xc8] sm:$0xff]
      %v1148 = vld [vmem:[%s318 + $0xd0] sm:$0xff]
      %v1149 = vld [vmem:[%s318 + $0xd8] sm:$0xff]
      %v1150 = vld [vmem:[%s318 + $0xe0] sm:$0xff]
      %v1151 = vld [vmem:[%s318 + $0xe8] sm:$0xff]
      %v1152 = vld [vmem:[%s318 + $0xf0] sm:$0xff]
      %v1153 = vld [vmem:[%s318 + $0xf8] sm:$0xff]
      %v1154 = vmax.f32 %v1090, %v1122
      %v1155 = vmax.f32 %v1091, %v1123
      %v1156 = vmax.f32 %v1092, %v1124
      %v1157 = vmax.f32 %v1093, %v1125
      %v1158 = vmax.f32 %v1094, %v1126
      %v1159 = vmax.f32 %v1095, %v1127
      %v1160 = vmax.f32 %v1096, %v1128
      %v1161 = vmax.f32 %v1097, %v1129
      %v1162 = vmax.f32 %v1098, %v1130
      %v1163 = vmax.f32 %v1099, %v1131
      %v1164 = vmax.f32 %v1100, %v1132
      %v1165 = vmax.f32 %v1101, %v1133
      %v1166 = vmax.f32 %v1102, %v1134
      %v1167 = vmax.f32 %v1103, %v1135
      %v1168 = vmax.f32 %v1104, %v1136
      %v1169 = vmax.f32 %v1105, %v1137
      %v1170 = vmax.f32 %v1106, %v1138
      %v1171 = vmax.f32 %v1107, %v1139
      %v1172 = vmax.f32 %v1108, %v1140
      %v1173 = vmax.f32 %v1109, %v1141
      %v1174 = vmax.f32 %v1110, %v1142
      %v1175 = vmax.f32 %v1111, %v1143
      %v1176 = vmax.f32 %v1112, %v1144
      %v1177 = vmax.f32 %v1113, %v1145
      %v1178 = vmax.f32 %v1114, %v1146
      %v1179 = vmax.f32 %v1115, %v1147
      %v1180 = vmax.f32 %v1116, %v1148
      %v1181 = vmax.f32 %v1117, %v1149
      %v1182 = vmax.f32 %v1118, %v1150
      %v1183 = vmax.f32 %v1119, %v1151
      %v1184 = vmax.f32 %v1120, %v1152
      %v1185 = vmax.f32 %v1121, %v1153
      %v1186 = vld [vmem:[%s512] sm:$0xff]
      %v1187 = vld [vmem:[%s512 + $0x8] sm:$0xff]
      %v1188 = vld [vmem:[%s512 + $0x10] sm:$0xff]
      %v1189 = vld [vmem:[%s512 + $0x18] sm:$0xff]
      %v1190 = vld [vmem:[%s512 + $0x20] sm:$0xff]
      %v1191 = vld [vmem:[%s512 + $0x28] sm:$0xff]
      %v1192 = vld [vmem:[%s512 + $0x30] sm:$0xff]
      %v1193 = vld [vmem:[%s512 + $0x38] sm:$0xff]
      %v1194 = vld [vmem:[%s512 + $0x40] sm:$0xff]
      %v1195 = vld [vmem:[%s512 + $0x48] sm:$0xff]
      %v1196 = vld [vmem:[%s512 + $0x50] sm:$0xff]
      %v1197 = vld [vmem:[%s512 + $0x58] sm:$0xff]
      %v1198 = vld [vmem:[%s512 + $0x60] sm:$0xff]
      %v1199 = vld [vmem:[%s512 + $0x68] sm:$0xff]
      %v1200 = vld [vmem:[%s512 + $0x70] sm:$0xff]
      %v1201 = vld [vmem:[%s512 + $0x78] sm:$0xff]
      %v1202 = vld [vmem:[%s512 + $0x80] sm:$0xff]
      %v1203 = vld [vmem:[%s512 + $0x88] sm:$0xff]
      %v1204 = vld [vmem:[%s512 + $0x90] sm:$0xff]
      %v1205 = vld [vmem:[%s512 + $0x98] sm:$0xff]
      %v1206 = vld [vmem:[%s512 + $0xa0] sm:$0xff]
      %v1207 = vld [vmem:[%s512 + $0xa8] sm:$0xff]
      %v1208 = vld [vmem:[%s512 + $0xb0] sm:$0xff]
      %v1209 = vld [vmem:[%s512 + $0xb8] sm:$0xff]
      %v1210 = vld [vmem:[%s512 + $0xc0] sm:$0xff]
      %v1211 = vld [vmem:[%s512 + $0xc8] sm:$0xff]
      %v1212 = vld [vmem:[%s512 + $0xd0] sm:$0xff]
      %v1213 = vld [vmem:[%s512 + $0xd8] sm:$0xff]
      %v1214 = vld [vmem:[%s512 + $0xe0] sm:$0xff]
      %v1215 = vld [vmem:[%s512 + $0xe8] sm:$0xff]
      %v1216 = vld [vmem:[%s512 + $0xf0] sm:$0xff]
      %v1217 = vld [vmem:[%s512 + $0xf8] sm:$0xff]
      %v1218 = vmax.f32 %v1154, %v1186
      %v1219 = vmax.f32 %v1155, %v1187
      %v1220 = vmax.f32 %v1156, %v1188
      %v1221 = vmax.f32 %v1157, %v1189
      %v1222 = vmax.f32 %v1158, %v1190
      %v1223 = vmax.f32 %v1159, %v1191
      %v1224 = vmax.f32 %v1160, %v1192
      %v1225 = vmax.f32 %v1161, %v1193
      %v1226 = vmax.f32 %v1162, %v1194
      %v1227 = vmax.f32 %v1163, %v1195
      %v1228 = vmax.f32 %v1164, %v1196
      %v1229 = vmax.f32 %v1165, %v1197
      %v1230 = vmax.f32 %v1166, %v1198
      %v1231 = vmax.f32 %v1167, %v1199
      %v1232 = vmax.f32 %v1168, %v1200
      %v1233 = vmax.f32 %v1169, %v1201
      %v1234 = vmax.f32 %v1170, %v1202
      %v1235 = vmax.f32 %v1171, %v1203
      %v1236 = vmax.f32 %v1172, %v1204
      %v1237 = vmax.f32 %v1173, %v1205
      %v1238 = vmax.f32 %v1174, %v1206
      %v1239 = vmax.f32 %v1175, %v1207
      %v1240 = vmax.f32 %v1176, %v1208
      %v1241 = vmax.f32 %v1177, %v1209
      %v1242 = vmax.f32 %v1178, %v1210
      %v1243 = vmax.f32 %v1179, %v1211
      %v1244 = vmax.f32 %v1180, %v1212
      %v1245 = vmax.f32 %v1181, %v1213
      %v1246 = vmax.f32 %v1182, %v1214
      %v1247 = vmax.f32 %v1183, %v1215
      %v1248 = vmax.f32 %v1184, %v1216
      %v1249 = vmax.f32 %v1185, %v1217
      %v1250 = vld [vmem:[%s577] sm:$0xff]
      %v1251 = vld [vmem:[%s577 + $0x8] sm:$0xff]
      %v1252 = vld [vmem:[%s577 + $0x10] sm:$0xff]
      %v1253 = vld [vmem:[%s577 + $0x18] sm:$0xff]
      %v1254 = vld [vmem:[%s577 + $0x20] sm:$0xff]
      %v1255 = vld [vmem:[%s577 + $0x28] sm:$0xff]
      %v1256 = vld [vmem:[%s577 + $0x30] sm:$0xff]
      %v1257 = vld [vmem:[%s577 + $0x38] sm:$0xff]
      %v1258 = vld [vmem:[%s577 + $0x40] sm:$0xff]
      %v1259 = vld [vmem:[%s577 + $0x48] sm:$0xff]
      %v1260 = vld [vmem:[%s577 + $0x50] sm:$0xff]
      %v1261 = vld [vmem:[%s577 + $0x58] sm:$0xff]
      %v1262 = vld [vmem:[%s577 + $0x60] sm:$0xff]
      %v1263 = vld [vmem:[%s577 + $0x68] sm:$0xff]
      %v1264 = vld [vmem:[%s577 + $0x70] sm:$0xff]
      %v1265 = vld [vmem:[%s577 + $0x78] sm:$0xff]
      %v1266 = vld [vmem:[%s577 + $0x80] sm:$0xff]
      %v1267 = vld [vmem:[%s577 + $0x88] sm:$0xff]
      %v1268 = vld [vmem:[%s577 + $0x90] sm:$0xff]
      %v1269 = vld [vmem:[%s577 + $0x98] sm:$0xff]
      %v1270 = vld [vmem:[%s577 + $0xa0] sm:$0xff]
      %v1271 = vld [vmem:[%s577 + $0xa8] sm:$0xff]
      %v1272 = vld [vmem:[%s577 + $0xb0] sm:$0xff]
      %v1273 = vld [vmem:[%s577 + $0xb8] sm:$0xff]
      %v1274 = vld [vmem:[%s577 + $0xc0] sm:$0xff]
      %v1275 = vld [vmem:[%s577 + $0xc8] sm:$0xff]
      %v1276 = vld [vmem:[%s577 + $0xd0] sm:$0xff]
      %v1277 = vld [vmem:[%s577 + $0xd8] sm:$0xff]
      %v1278 = vld [vmem:[%s577 + $0xe0] sm:$0xff]
      %v1279 = vld [vmem:[%s577 + $0xe8] sm:$0xff]
      %v1280 = vld [vmem:[%s577 + $0xf0] sm:$0xff]
      %v1281 = vld [vmem:[%s577 + $0xf8] sm:$0xff]
      %v1282 = vmax.f32 %v1218, %v1250
      %v1283 = vmax.f32 %v1219, %v1251
      %v1284 = vmax.f32 %v1220, %v1252
      %v1285 = vmax.f32 %v1221, %v1253
      %v1286 = vmax.f32 %v1222, %v1254
      %v1287 = vmax.f32 %v1223, %v1255
      %v1288 = vmax.f32 %v1224, %v1256
      %v1289 = vmax.f32 %v1225, %v1257
      %v1290 = vmax.f32 %v1226, %v1258
      %v1291 = vmax.f32 %v1227, %v1259
      %v1292 = vmax.f32 %v1228, %v1260
      %v1293 = vmax.f32 %v1229, %v1261
      %v1294 = vmax.f32 %v1230, %v1262
      %v1295 = vmax.f32 %v1231, %v1263
      %v1296 = vmax.f32 %v1232, %v1264
      %v1297 = vmax.f32 %v1233, %v1265
      %v1298 = vmax.f32 %v1234, %v1266
      %v1299 = vmax.f32 %v1235, %v1267
      %v1300 = vmax.f32 %v1236, %v1268
      %v1301 = vmax.f32 %v1237, %v1269
      %v1302 = vmax.f32 %v1238, %v1270
      %v1303 = vmax.f32 %v1239, %v1271
      %v1304 = vmax.f32 %v1240, %v1272
      %v1305 = vmax.f32 %v1241, %v1273
      %v1306 = vmax.f32 %v1242, %v1274
      %v1307 = vmax.f32 %v1243, %v1275
      %v1308 = vmax.f32 %v1244, %v1276
      %v1309 = vmax.f32 %v1245, %v1277
      %v1310 = vmax.f32 %v1246, %v1278
      %v1311 = vmax.f32 %v1247, %v1279
      %v1312 = vmax.f32 %v1248, %v1280
      %v1313 = vmax.f32 %v1249, %v1281
      %1314 = vst.msk [vmem:[#allocation3 + $0x2] sm:$0xff] %vm243, %v1282
      %1315 = vst.msk [vmem:[#allocation3 + $0xa] sm:$0xff] %vm243, %v1283
      %1316 = vst.msk [vmem:[#allocation3 + $0x1a] sm:$0xff] %vm243, %v1284
      %1317 = vst.msk [vmem:[#allocation3 + $0x22] sm:$0xff] %vm243, %v1285
      %1318 = vst.msk [vmem:[#allocation3 + $0x32] sm:$0xff] %vm243, %v1286
      %1319 = vst.msk [vmem:[#allocation3 + $0x3a] sm:$0xff] %vm243, %v1287
      %1320 = vst.msk [vmem:[#allocation3 + $0x4a] sm:$0xff] %vm243, %v1288
      %1321 = vst.msk [vmem:[#allocation3 + $0x52] sm:$0xff] %vm243, %v1289
      %1322 = vst.msk [vmem:[#allocation3 + $0x62] sm:$0xff] %vm243, %v1290
      %1323 = vst.msk [vmem:[#allocation3 + $0x6a] sm:$0xff] %vm243, %v1291
      %1324 = vst.msk [vmem:[#allocation3 + $0x7a] sm:$0xff] %vm243, %v1292
      %1325 = vst.msk [vmem:[#allocation3 + $0x82] sm:$0xff] %vm243, %v1293
      %1326 = vst.msk [vmem:[#allocation3 + $0x92] sm:$0xff] %vm243, %v1294
      %1327 = vst.msk [vmem:[#allocation3 + $0x9a] sm:$0xff] %vm243, %v1295
      %1328 = vst.msk [vmem:[#allocation3 + $0xaa] sm:$0xff] %vm243, %v1296
      %1329 = vst.msk [vmem:[#allocation3 + $0xb2] sm:$0xff] %vm243, %v1297
      %1330 = vst.msk [vmem:[#allocation3 + $0xc2] sm:$0xff] %vm243, %v1298
      %1331 = vst.msk [vmem:[#allocation3 + $0xca] sm:$0xff] %vm243, %v1299
      %1332 = vst.msk [vmem:[#allocation3 + $0xda] sm:$0xff] %vm243, %v1300
      %1333 = vst.msk [vmem:[#allocation3 + $0xe2] sm:$0xff] %vm243, %v1301
      %1334 = vst.msk [vmem:[#allocation3 + $0xf2] sm:$0xff] %vm243, %v1302
      %1335 = vst.msk [vmem:[#allocation3 + $0xfa] sm:$0xff] %vm243, %v1303
      %1336 = vst.msk [vmem:[#allocation3 + $0x10a] sm:$0xff] %vm243, %v1304
      %1337 = vst.msk [vmem:[#allocation3 + $0x112] sm:$0xff] %vm243, %v1305
      %1338 = vst.msk [vmem:[#allocation3 + $0x122] sm:$0xff] %vm243, %v1306
      %1339 = vst.msk [vmem:[#allocation3 + $0x12a] sm:$0xff] %vm243, %v1307
      %1340 = vst.msk [vmem:[#allocation3 + $0x13a] sm:$0xff] %vm243, %v1308
      %1341 = vst.msk [vmem:[#allocation3 + $0x142] sm:$0xff] %vm243, %v1309
      %1342 = vst.msk [vmem:[#allocation3 + $0x152] sm:$0xff] %vm243, %v1310
      %1343 = vst.msk [vmem:[#allocation3 + $0x15a] sm:$0xff] %vm243, %v1311
      %1344 = vst.msk [vmem:[#allocation3 + $0x16a] sm:$0xff] %vm243, %v1312
      %1345 = vst.msk [vmem:[#allocation3 + $0x172] sm:$0xff] %vm243, %v1313
      %v1346 = vld [vmem:[#allocation3] sm:$0xff]
      %v1347 = vld [vmem:[#allocation3 + $0x8] sm:$0xff]
      %v1348 = vld [vmem:[#allocation3 + $0x18] sm:$0xff]
      %v1349 = vld [vmem:[#allocation3 + $0x20] sm:$0xff]
      %v1350 = vld [vmem:[#allocation3 + $0x30] sm:$0xff]
      %v1351 = vld [vmem:[#allocation3 + $0x38] sm:$0xff]
      %v1352 = vld [vmem:[#allocation3 + $0x48] sm:$0xff]
      %v1353 = vld [vmem:[#allocation3 + $0x50] sm:$0xff]
      %v1354 = vld [vmem:[#allocation3 + $0x60] sm:$0xff]
      %v1355 = vld [vmem:[#allocation3 + $0x68] sm:$0xff]
      %v1356 = vld [vmem:[#allocation3 + $0x78] sm:$0xff]
      %v1357 = vld [vmem:[#allocation3 + $0x80] sm:$0xff]
      %v1358 = vld [vmem:[#allocation3 + $0x90] sm:$0xff]
      %v1359 = vld [vmem:[#allocation3 + $0x98] sm:$0xff]
      %v1360 = vld [vmem:[#allocation3 + $0xa8] sm:$0xff]
      %v1361 = vld [vmem:[#allocation3 + $0xb0] sm:$0xff]
      %v1362 = vld [vmem:[#allocation3 + $0xc0] sm:$0xff]
      %v1363 = vld [vmem:[#allocation3 + $0xc8] sm:$0xff]
      %v1364 = vld [vmem:[#allocation3 + $0xd8] sm:$0xff]
      %v1365 = vld [vmem:[#allocation3 + $0xe0] sm:$0xff]
      %v1366 = vld [vmem:[#allocation3 + $0xf0] sm:$0xff]
      %v1367 = vld [vmem:[#allocation3 + $0xf8] sm:$0xff]
      %v1368 = vld [vmem:[#allocation3 + $0x108] sm:$0xff]
      %v1369 = vld [vmem:[#allocation3 + $0x110] sm:$0xff]
      %v1370 = vld [vmem:[#allocation3 + $0x120] sm:$0xff]
      %v1371 = vld [vmem:[#allocation3 + $0x128] sm:$0xff]
      %v1372 = vld [vmem:[#allocation3 + $0x138] sm:$0xff]
      %v1373 = vld [vmem:[#allocation3 + $0x140] sm:$0xff]
      %v1374 = vld [vmem:[#allocation3 + $0x150] sm:$0xff]
      %v1375 = vld [vmem:[#allocation3 + $0x158] sm:$0xff]
      %v1376 = vld [vmem:[#allocation3 + $0x168] sm:$0xff]
      %v1377 = vld [vmem:[#allocation3 + $0x170] sm:$0xff]
      %v1378 = vld [vmem:[#allocation3 + $0x1] sm:$0xff]
      %v1379 = vld [vmem:[#allocation3 + $0x9] sm:$0xff]
      %v1380 = vld [vmem:[#allocation3 + $0x19] sm:$0xff]
      %v1381 = vld [vmem:[#allocation3 + $0x21] sm:$0xff]
      %v1382 = vld [vmem:[#allocation3 + $0x31] sm:$0xff]
      %v1383 = vld [vmem:[#allocation3 + $0x39] sm:$0xff]
      %v1384 = vld [vmem:[#allocation3 + $0x49] sm:$0xff]
      %v1385 = vld [vmem:[#allocation3 + $0x51] sm:$0xff]
      %v1386 = vld [vmem:[#allocation3 + $0x61] sm:$0xff]
      %v1387 = vld [vmem:[#allocation3 + $0x69] sm:$0xff]
      %v1388 = vld [vmem:[#allocation3 + $0x79] sm:$0xff]
      %v1389 = vld [vmem:[#allocation3 + $0x81] sm:$0xff]
      %v1390 = vld [vmem:[#allocation3 + $0x91] sm:$0xff]
      %v1391 = vld [vmem:[#allocation3 + $0x99] sm:$0xff]
      %v1392 = vld [vmem:[#allocation3 + $0xa9] sm:$0xff]
      %v1393 = vld [vmem:[#allocation3 + $0xb1] sm:$0xff]
      %v1394 = vld [vmem:[#allocation3 + $0xc1] sm:$0xff]
      %v1395 = vld [vmem:[#allocation3 + $0xc9] sm:$0xff]
      %v1396 = vld [vmem:[#allocation3 + $0xd9] sm:$0xff]
      %v1397 = vld [vmem:[#allocation3 + $0xe1] sm:$0xff]
      %v1398 = vld [vmem:[#allocation3 + $0xf1] sm:$0xff]
      %v1399 = vld [vmem:[#allocation3 + $0xf9] sm:$0xff]
      %v1400 = vld [vmem:[#allocation3 + $0x109] sm:$0xff]
      %v1401 = vld [vmem:[#allocation3 + $0x111] sm:$0xff]
      %v1402 = vld [vmem:[#allocation3 + $0x121] sm:$0xff]
      %v1403 = vld [vmem:[#allocation3 + $0x129] sm:$0xff]
      %v1404 = vld [vmem:[#allocation3 + $0x139] sm:$0xff]
      %v1405 = vld [vmem:[#allocation3 + $0x141] sm:$0xff]
      %v1406 = vld [vmem:[#allocation3 + $0x151] sm:$0xff]
      %v1407 = vld [vmem:[#allocation3 + $0x159] sm:$0xff]
      %v1408 = vld [vmem:[#allocation3 + $0x169] sm:$0xff]
      %v1409 = vld [vmem:[#allocation3 + $0x171] sm:$0xff]
      %v1410 = vmax.f32 %v1346, %v1378
      %v1411 = vmax.f32 %v1347, %v1379
      %v1412 = vmax.f32 %v1348, %v1380
      %v1413 = vmax.f32 %v1349, %v1381
      %v1414 = vmax.f32 %v1350, %v1382
      %v1415 = vmax.f32 %v1351, %v1383
      %v1416 = vmax.f32 %v1352, %v1384
      %v1417 = vmax.f32 %v1353, %v1385
      %v1418 = vmax.f32 %v1354, %v1386
      %v1419 = vmax.f32 %v1355, %v1387
      %v1420 = vmax.f32 %v1356, %v1388
      %v1421 = vmax.f32 %v1357, %v1389
      %v1422 = vmax.f32 %v1358, %v1390
      %v1423 = vmax.f32 %v1359, %v1391
      %v1424 = vmax.f32 %v1360, %v1392
      %v1425 = vmax.f32 %v1361, %v1393
      %v1426 = vmax.f32 %v1362, %v1394
      %v1427 = vmax.f32 %v1363, %v1395
      %v1428 = vmax.f32 %v1364, %v1396
      %v1429 = vmax.f32 %v1365, %v1397
      %v1430 = vmax.f32 %v1366, %v1398
      %v1431 = vmax.f32 %v1367, %v1399
      %v1432 = vmax.f32 %v1368, %v1400
      %v1433 = vmax.f32 %v1369, %v1401
      %v1434 = vmax.f32 %v1370, %v1402
      %v1435 = vmax.f32 %v1371, %v1403
      %v1436 = vmax.f32 %v1372, %v1404
      %v1437 = vmax.f32 %v1373, %v1405
      %v1438 = vmax.f32 %v1374, %v1406
      %v1439 = vmax.f32 %v1375, %v1407
      %v1440 = vmax.f32 %v1376, %v1408
      %v1441 = vmax.f32 %v1377, %v1409
      %v1442 = vld [vmem:[#allocation3 + $0x2] sm:$0xff]
      %v1443 = vld [vmem:[#allocation3 + $0xa] sm:$0xff]
      %v1444 = vld [vmem:[#allocation3 + $0x1a] sm:$0xff]
      %v1445 = vld [vmem:[#allocation3 + $0x22] sm:$0xff]
      %v1446 = vld [vmem:[#allocation3 + $0x32] sm:$0xff]
      %v1447 = vld [vmem:[#allocation3 + $0x3a] sm:$0xff]
      %v1448 = vld [vmem:[#allocation3 + $0x4a] sm:$0xff]
      %v1449 = vld [vmem:[#allocation3 + $0x52] sm:$0xff]
      %v1450 = vld [vmem:[#allocation3 + $0x62] sm:$0xff]
      %v1451 = vld [vmem:[#allocation3 + $0x6a] sm:$0xff]
      %v1452 = vld [vmem:[#allocation3 + $0x7a] sm:$0xff]
      %v1453 = vld [vmem:[#allocation3 + $0x82] sm:$0xff]
      %v1454 = vld [vmem:[#allocation3 + $0x92] sm:$0xff]
      %v1455 = vld [vmem:[#allocation3 + $0x9a] sm:$0xff]
      %v1456 = vld [vmem:[#allocation3 + $0xaa] sm:$0xff]
      %v1457 = vld [vmem:[#allocation3 + $0xb2] sm:$0xff]
      %v1458 = vld [vmem:[#allocation3 + $0xc2] sm:$0xff]
      %v1459 = vld [vmem:[#allocation3 + $0xca] sm:$0xff]
      %v1460 = vld [vmem:[#allocation3 + $0xda] sm:$0xff]
      %v1461 = vld [vmem:[#allocation3 + $0xe2] sm:$0xff]
      %v1462 = vld [vmem:[#allocation3 + $0xf2] sm:$0xff]
      %v1463 = vld [vmem:[#allocation3 + $0xfa] sm:$0xff]
      %v1464 = vld [vmem:[#allocation3 + $0x10a] sm:$0xff]
      %v1465 = vld [vmem:[#allocation3 + $0x112] sm:$0xff]
      %v1466 = vld [vmem:[#allocation3 + $0x122] sm:$0xff]
      %v1467 = vld [vmem:[#allocation3 + $0x12a] sm:$0xff]
      %v1468 = vld [vmem:[#allocation3 + $0x13a] sm:$0xff]
      %v1469 = vld [vmem:[#allocation3 + $0x142] sm:$0xff]
      %v1470 = vld [vmem:[#allocation3 + $0x152] sm:$0xff]
      %v1471 = vld [vmem:[#allocation3 + $0x15a] sm:$0xff]
      %v1472 = vld [vmem:[#allocation3 + $0x16a] sm:$0xff]
      %v1473 = vld [vmem:[#allocation3 + $0x172] sm:$0xff]
      %v1474 = vmax.f32 %v1410, %v1442
      %v1475 = vmax.f32 %v1411, %v1443
      %v1476 = vmax.f32 %v1412, %v1444
      %v1477 = vmax.f32 %v1413, %v1445
      %v1478 = vmax.f32 %v1414, %v1446
      %v1479 = vmax.f32 %v1415, %v1447
      %v1480 = vmax.f32 %v1416, %v1448
      %v1481 = vmax.f32 %v1417, %v1449
      %v1482 = vmax.f32 %v1418, %v1450
      %v1483 = vmax.f32 %v1419, %v1451
      %v1484 = vmax.f32 %v1420, %v1452
      %v1485 = vmax.f32 %v1421, %v1453
      %v1486 = vmax.f32 %v1422, %v1454
      %v1487 = vmax.f32 %v1423, %v1455
      %v1488 = vmax.f32 %v1424, %v1456
      %v1489 = vmax.f32 %v1425, %v1457
      %v1490 = vmax.f32 %v1426, %v1458
      %v1491 = vmax.f32 %v1427, %v1459
      %v1492 = vmax.f32 %v1428, %v1460
      %v1493 = vmax.f32 %v1429, %v1461
      %v1494 = vmax.f32 %v1430, %v1462
      %v1495 = vmax.f32 %v1431, %v1463
      %v1496 = vmax.f32 %v1432, %v1464
      %v1497 = vmax.f32 %v1433, %v1465
      %v1498 = vmax.f32 %v1434, %v1466
      %v1499 = vmax.f32 %v1435, %v1467
      %v1500 = vmax.f32 %v1436, %v1468
      %v1501 = vmax.f32 %v1437, %v1469
      %v1502 = vmax.f32 %v1438, %v1470
      %v1503 = vmax.f32 %v1439, %v1471
      %v1504 = vmax.f32 %v1440, %v1472
      %v1505 = vmax.f32 %v1441, %v1473
      %v1506 = vld [vmem:[#allocation3 + $0x3] sm:$0xff]
      %v1507 = vld [vmem:[#allocation3 + $0xb] sm:$0xff]
      %v1508 = vld [vmem:[#allocation3 + $0x1b] sm:$0xff]
      %v1509 = vld [vmem:[#allocation3 + $0x23] sm:$0xff]
      %v1510 = vld [vmem:[#allocation3 + $0x33] sm:$0xff]
      %v1511 = vld [vmem:[#allocation3 + $0x3b] sm:$0xff]
      %v1512 = vld [vmem:[#allocation3 + $0x4b] sm:$0xff]
      %v1513 = vld [vmem:[#allocation3 + $0x53] sm:$0xff]
      %v1514 = vld [vmem:[#allocation3 + $0x63] sm:$0xff]
      %v1515 = vld [vmem:[#allocation3 + $0x6b] sm:$0xff]
      %v1516 = vld [vmem:[#allocation3 + $0x7b] sm:$0xff]
      %v1517 = vld [vmem:[#allocation3 + $0x83] sm:$0xff]
      %v1518 = vld [vmem:[#allocation3 + $0x93] sm:$0xff]
      %v1519 = vld [vmem:[#allocation3 + $0x9b] sm:$0xff]
      %v1520 = vld [vmem:[#allocation3 + $0xab] sm:$0xff]
      %v1521 = vld [vmem:[#allocation3 + $0xb3] sm:$0xff]
      %v1522 = vld [vmem:[#allocation3 + $0xc3] sm:$0xff]
      %v1523 = vld [vmem:[#allocation3 + $0xcb] sm:$0xff]
      %v1524 = vld [vmem:[#allocation3 + $0xdb] sm:$0xff]
      %v1525 = vld [vmem:[#allocation3 + $0xe3] sm:$0xff]
      %v1526 = vld [vmem:[#allocation3 + $0xf3] sm:$0xff]
      %v1527 = vld [vmem:[#allocation3 + $0xfb] sm:$0xff]
      %v1528 = vld [vmem:[#allocation3 + $0x10b] sm:$0xff]
      %v1529 = vld [vmem:[#allocation3 + $0x113] sm:$0xff]
      %v1530 = vld [vmem:[#allocation3 + $0x123] sm:$0xff]
      %v1531 = vld [vmem:[#allocation3 + $0x12b] sm:$0xff]
      %v1532 = vld [vmem:[#allocation3 + $0x13b] sm:$0xff]
      %v1533 = vld [vmem:[#allocation3 + $0x143] sm:$0xff]
      %v1534 = vld [vmem:[#allocation3 + $0x153] sm:$0xff]
      %v1535 = vld [vmem:[#allocation3 + $0x15b] sm:$0xff]
      %v1536 = vld [vmem:[#allocation3 + $0x16b] sm:$0xff]
      %v1537 = vld [vmem:[#allocation3 + $0x173] sm:$0xff]
      %v1538 = vmax.f32 %v1474, %v1506
      %v1539 = vmax.f32 %v1475, %v1507
      %v1540 = vmax.f32 %v1476, %v1508
      %v1541 = vmax.f32 %v1477, %v1509
      %v1542 = vmax.f32 %v1478, %v1510
      %v1543 = vmax.f32 %v1479, %v1511
      %v1544 = vmax.f32 %v1480, %v1512
      %v1545 = vmax.f32 %v1481, %v1513
      %v1546 = vmax.f32 %v1482, %v1514
      %v1547 = vmax.f32 %v1483, %v1515
      %v1548 = vmax.f32 %v1484, %v1516
      %v1549 = vmax.f32 %v1485, %v1517
      %v1550 = vmax.f32 %v1486, %v1518
      %v1551 = vmax.f32 %v1487, %v1519
      %v1552 = vmax.f32 %v1488, %v1520
      %v1553 = vmax.f32 %v1489, %v1521
      %v1554 = vmax.f32 %v1490, %v1522
      %v1555 = vmax.f32 %v1491, %v1523
      %v1556 = vmax.f32 %v1492, %v1524
      %v1557 = vmax.f32 %v1493, %v1525
      %v1558 = vmax.f32 %v1494, %v1526
      %v1559 = vmax.f32 %v1495, %v1527
      %v1560 = vmax.f32 %v1496, %v1528
      %v1561 = vmax.f32 %v1497, %v1529
      %v1562 = vmax.f32 %v1498, %v1530
      %v1563 = vmax.f32 %v1499, %v1531
      %v1564 = vmax.f32 %v1500, %v1532
      %v1565 = vmax.f32 %v1501, %v1533
      %v1566 = vmax.f32 %v1502, %v1534
      %v1567 = vmax.f32 %v1503, %v1535
      %v1568 = vmax.f32 %v1504, %v1536
      %v1569 = vmax.f32 %v1505, %v1537
      %v1570 = vld [vmem:[#allocation3 + $0x4] sm:$0xff]
      %v1571 = vld [vmem:[#allocation3 + $0xc] sm:$0xff]
      %v1572 = vld [vmem:[#allocation3 + $0x1c] sm:$0xff]
      %v1573 = vld [vmem:[#allocation3 + $0x24] sm:$0xff]
      %v1574 = vld [vmem:[#allocation3 + $0x34] sm:$0xff]
      %v1575 = vld [vmem:[#allocation3 + $0x3c] sm:$0xff]
      %v1576 = vld [vmem:[#allocation3 + $0x4c] sm:$0xff]
      %v1577 = vld [vmem:[#allocation3 + $0x54] sm:$0xff]
      %v1578 = vld [vmem:[#allocation3 + $0x64] sm:$0xff]
      %v1579 = vld [vmem:[#allocation3 + $0x6c] sm:$0xff]
      %v1580 = vld [vmem:[#allocation3 + $0x7c] sm:$0xff]
      %v1581 = vld [vmem:[#allocation3 + $0x84] sm:$0xff]
      %v1582 = vld [vmem:[#allocation3 + $0x94] sm:$0xff]
      %v1583 = vld [vmem:[#allocation3 + $0x9c] sm:$0xff]
      %v1584 = vld [vmem:[#allocation3 + $0xac] sm:$0xff]
      %v1585 = vld [vmem:[#allocation3 + $0xb4] sm:$0xff]
      %v1586 = vld [vmem:[#allocation3 + $0xc4] sm:$0xff]
      %v1587 = vld [vmem:[#allocation3 + $0xcc] sm:$0xff]
      %v1588 = vld [vmem:[#allocation3 + $0xdc] sm:$0xff]
      %v1589 = vld [vmem:[#allocation3 + $0xe4] sm:$0xff]
      %v1590 = vld [vmem:[#allocation3 + $0xf4] sm:$0xff]
      %v1591 = vld [vmem:[#allocation3 + $0xfc] sm:$0xff]
      %v1592 = vld [vmem:[#allocation3 + $0x10c] sm:$0xff]
      %v1593 = vld [vmem:[#allocation3 + $0x114] sm:$0xff]
      %v1594 = vld [vmem:[#allocation3 + $0x124] sm:$0xff]
      %v1595 = vld [vmem:[#allocation3 + $0x12c] sm:$0xff]
      %v1596 = vld [vmem:[#allocation3 + $0x13c] sm:$0xff]
      %v1597 = vld [vmem:[#allocation3 + $0x144] sm:$0xff]
      %v1598 = vld [vmem:[#allocation3 + $0x154] sm:$0xff]
      %v1599 = vld [vmem:[#allocation3 + $0x15c] sm:$0xff]
      %v1600 = vld [vmem:[#allocation3 + $0x16c] sm:$0xff]
      %v1601 = vld [vmem:[#allocation3 + $0x174] sm:$0xff]
      %v1602 = vmax.f32 %v1538, %v1570
      %v1603 = vmax.f32 %v1539, %v1571
      %v1604 = vmax.f32 %v1540, %v1572
      %v1605 = vmax.f32 %v1541, %v1573
      %v1606 = vmax.f32 %v1542, %v1574
      %v1607 = vmax.f32 %v1543, %v1575
      %v1608 = vmax.f32 %v1544, %v1576
      %v1609 = vmax.f32 %v1545, %v1577
      %v1610 = vmax.f32 %v1546, %v1578
      %v1611 = vmax.f32 %v1547, %v1579
      %v1612 = vmax.f32 %v1548, %v1580
      %v1613 = vmax.f32 %v1549, %v1581
      %v1614 = vmax.f32 %v1550, %v1582
      %v1615 = vmax.f32 %v1551, %v1583
      %v1616 = vmax.f32 %v1552, %v1584
      %v1617 = vmax.f32 %v1553, %v1585
      %v1618 = vmax.f32 %v1554, %v1586
      %v1619 = vmax.f32 %v1555, %v1587
      %v1620 = vmax.f32 %v1556, %v1588
      %v1621 = vmax.f32 %v1557, %v1589
      %v1622 = vmax.f32 %v1558, %v1590
      %v1623 = vmax.f32 %v1559, %v1591
      %v1624 = vmax.f32 %v1560, %v1592
      %v1625 = vmax.f32 %v1561, %v1593
      %v1626 = vmax.f32 %v1562, %v1594
      %v1627 = vmax.f32 %v1563, %v1595
      %v1628 = vmax.f32 %v1564, %v1596
      %v1629 = vmax.f32 %v1565, %v1597
      %v1630 = vmax.f32 %v1566, %v1598
      %v1631 = vmax.f32 %v1567, %v1599
      %v1632 = vmax.f32 %v1568, %v1600
      %v1633 = vmax.f32 %v1569, %v1601
      %1634 = vst.msk [vmem:[%s234] sm:$0xff] %vm243, %v1602
      %1635 = vst.msk [vmem:[%s234 + $0x8] sm:$0xff] %vm243, %v1603
      %1636 = vst.msk [vmem:[%s234 + $0x10] sm:$0xff] %vm243, %v1604
      %1637 = vst.msk [vmem:[%s234 + $0x18] sm:$0xff] %vm243, %v1605
      %1638 = vst.msk [vmem:[%s234 + $0x20] sm:$0xff] %vm243, %v1606
      %1639 = vst.msk [vmem:[%s234 + $0x28] sm:$0xff] %vm243, %v1607
      %1640 = vst.msk [vmem:[%s234 + $0x30] sm:$0xff] %vm243, %v1608
      %1641 = vst.msk [vmem:[%s234 + $0x38] sm:$0xff] %vm243, %v1609
      %1642 = vst.msk [vmem:[%s234 + $0x40] sm:$0xff] %vm243, %v1610
      %1643 = vst.msk [vmem:[%s234 + $0x48] sm:$0xff] %vm243, %v1611
      %1644 = vst.msk [vmem:[%s234 + $0x50] sm:$0xff] %vm243, %v1612
      %1645 = vst.msk [vmem:[%s234 + $0x58] sm:$0xff] %vm243, %v1613
      %1646 = vst.msk [vmem:[%s234 + $0x60] sm:$0xff] %vm243, %v1614
      %1647 = vst.msk [vmem:[%s234 + $0x68] sm:$0xff] %vm243, %v1615
      %1648 = vst.msk [vmem:[%s234 + $0x70] sm:$0xff] %vm243, %v1616
      %1649 = vst.msk [vmem:[%s234 + $0x78] sm:$0xff] %vm243, %v1617
      %1650 = vst.msk [vmem:[%s234 + $0x80] sm:$0xff] %vm243, %v1618
      %1651 = vst.msk [vmem:[%s234 + $0x88] sm:$0xff] %vm243, %v1619
      %1652 = vst.msk [vmem:[%s234 + $0x90] sm:$0xff] %vm243, %v1620
      %1653 = vst.msk [vmem:[%s234 + $0x98] sm:$0xff] %vm243, %v1621
      %1654 = vst.msk [vmem:[%s234 + $0xa0] sm:$0xff] %vm243, %v1622
      %1655 = vst.msk [vmem:[%s234 + $0xa8] sm:$0xff] %vm243, %v1623
      %1656 = vst.msk [vmem:[%s234 + $0xb0] sm:$0xff] %vm243, %v1624
      %1657 = vst.msk [vmem:[%s234 + $0xb8] sm:$0xff] %vm243, %v1625
      %1658 = vst.msk [vmem:[%s234 + $0xc0] sm:$0xff] %vm243, %v1626
      %1659 = vst.msk [vmem:[%s234 + $0xc8] sm:$0xff] %vm243, %v1627
      %1660 = vst.msk [vmem:[%s234 + $0xd0] sm:$0xff] %vm243, %v1628
      %1661 = vst.msk [vmem:[%s234 + $0xd8] sm:$0xff] %vm243, %v1629
      %1662 = vst.msk [vmem:[%s234 + $0xe0] sm:$0xff] %vm243, %v1630
      %1663 = vst.msk [vmem:[%s234 + $0xe8] sm:$0xff] %vm243, %v1631
      %1664 = vst.msk [vmem:[%s234 + $0xf0] sm:$0xff] %vm243, %v1632
      %1665 = vst.msk [vmem:[%s234 + $0xf8] sm:$0xff] %vm243, %v1633
      %1666 = vst.msk [vmem:[%s318] sm:$0xff] %vm243, %v1602
      %1667 = vst.msk [vmem:[%s318 + $0x8] sm:$0xff] %vm243, %v1603
      %1668 = vst.msk [vmem:[%s318 + $0x10] sm:$0xff] %vm243, %v1604
      %1669 = vst.msk [vmem:[%s318 + $0x18] sm:$0xff] %vm243, %v1605
      %1670 = vst.msk [vmem:[%s318 + $0x20] sm:$0xff] %vm243, %v1606
      %1671 = vst.msk [vmem:[%s318 + $0x28] sm:$0xff] %vm243, %v1607
      %1672 = vst.msk [vmem:[%s318 + $0x30] sm:$0xff] %vm243, %v1608
      %1673 = vst.msk [vmem:[%s318 + $0x38] sm:$0xff] %vm243, %v1609
      %1674 = vst.msk [vmem:[%s318 + $0x40] sm:$0xff] %vm243, %v1610
      %1675 = vst.msk [vmem:[%s318 + $0x48] sm:$0xff] %vm243, %v1611
      %1676 = vst.msk [vmem:[%s318 + $0x50] sm:$0xff] %vm243, %v1612
      %1677 = vst.msk [vmem:[%s318 + $0x58] sm:$0xff] %vm243, %v1613
      %1678 = vst.msk [vmem:[%s318 + $0x60] sm:$0xff] %vm243, %v1614
      %1679 = vst.msk [vmem:[%s318 + $0x68] sm:$0xff] %vm243, %v1615
      %1680 = vst.msk [vmem:[%s318 + $0x70] sm:$0xff] %vm243, %v1616
      %1681 = vst.msk [vmem:[%s318 + $0x78] sm:$0xff] %vm243, %v1617
      %1682 = vst.msk [vmem:[%s318 + $0x80] sm:$0xff] %vm243, %v1618
      %1683 = vst.msk [vmem:[%s318 + $0x88] sm:$0xff] %vm243, %v1619
      %1684 = vst.msk [vmem:[%s318 + $0x90] sm:$0xff] %vm243, %v1620
      %1685 = vst.msk [vmem:[%s318 + $0x98] sm:$0xff] %vm243, %v1621
      %1686 = vst.msk [vmem:[%s318 + $0xa0] sm:$0xff] %vm243, %v1622
      %1687 = vst.msk [vmem:[%s318 + $0xa8] sm:$0xff] %vm243, %v1623
      %1688 = vst.msk [vmem:[%s318 + $0xb0] sm:$0xff] %vm243, %v1624
      %1689 = vst.msk [vmem:[%s318 + $0xb8] sm:$0xff] %vm243, %v1625
      %1690 = vst.msk [vmem:[%s318 + $0xc0] sm:$0xff] %vm243, %v1626
      %1691 = vst.msk [vmem:[%s318 + $0xc8] sm:$0xff] %vm243, %v1627
      %1692 = vst.msk [vmem:[%s318 + $0xd0] sm:$0xff] %vm243, %v1628
      %1693 = vst.msk [vmem:[%s318 + $0xd8] sm:$0xff] %vm243, %v1629
      %1694 = vst.msk [vmem:[%s318 + $0xe0] sm:$0xff] %vm243, %v1630
      %1695 = vst.msk [vmem:[%s318 + $0xe8] sm:$0xff] %vm243, %v1631
      %1696 = vst.msk [vmem:[%s318 + $0xf0] sm:$0xff] %vm243, %v1632
      %1697 = vst.msk [vmem:[%s318 + $0xf8] sm:$0xff] %vm243, %v1633
      %v1698 = vld [vmem:[#allocation2] sm:$0xff]
      %v1699 = vld [vmem:[#allocation2 + $0x8] sm:$0xff]
      %v1700 = vld [vmem:[#allocation2 + $0x10] sm:$0xff]
      %v1701 = vld [vmem:[#allocation2 + $0x18] sm:$0xff]
      %v1702 = vld [vmem:[#allocation2 + $0x20] sm:$0xff]
      %v1703 = vld [vmem:[#allocation2 + $0x28] sm:$0xff]
      %v1704 = vld [vmem:[#allocation2 + $0x30] sm:$0xff]
      %v1705 = vld [vmem:[#allocation2 + $0x38] sm:$0xff]
      %v1706 = vld [vmem:[#allocation2 + $0x40] sm:$0xff]
      %v1707 = vld [vmem:[#allocation2 + $0x48] sm:$0xff]
      %v1708 = vld [vmem:[#allocation2 + $0x50] sm:$0xff]
      %v1709 = vld [vmem:[#allocation2 + $0x58] sm:$0xff]
      %v1710 = vld [vmem:[#allocation2 + $0x60] sm:$0xff]
      %v1711 = vld [vmem:[#allocation2 + $0x68] sm:$0xff]
      %v1712 = vld [vmem:[#allocation2 + $0x70] sm:$0xff]
      %v1713 = vld [vmem:[#allocation2 + $0x78] sm:$0xff]
      %v1714 = vld [vmem:[#allocation2 + $0x80] sm:$0xff]
      %v1715 = vld [vmem:[#allocation2 + $0x88] sm:$0xff]
      %v1716 = vld [vmem:[#allocation2 + $0x90] sm:$0xff]
      %v1717 = vld [vmem:[#allocation2 + $0x98] sm:$0xff]
      %v1718 = vld [vmem:[#allocation2 + $0xa0] sm:$0xff]
      %v1719 = vld [vmem:[#allocation2 + $0xa8] sm:$0xff]
      %v1720 = vld [vmem:[#allocation2 + $0xb0] sm:$0xff]
      %v1721 = vld [vmem:[#allocation2 + $0xb8] sm:$0xff]
      %v1722 = vld [vmem:[#allocation2 + $0xc0] sm:$0xff]
      %v1723 = vld [vmem:[#allocation2 + $0xc8] sm:$0xff]
      %v1724 = vld [vmem:[#allocation2 + $0xd0] sm:$0xff]
      %v1725 = vld [vmem:[#allocation2 + $0xd8] sm:$0xff]
      %v1726 = vld [vmem:[#allocation2 + $0xe0] sm:$0xff]
      %v1727 = vld [vmem:[#allocation2 + $0xe8] sm:$0xff]
      %v1728 = vld [vmem:[#allocation2 + $0xf0] sm:$0xff]
      %v1729 = vld [vmem:[#allocation2 + $0xf8] sm:$0xff]
      %v1730 = vld [vmem:[%s383] sm:$0xff]
      %v1731 = vld [vmem:[%s383 + $0x8] sm:$0xff]
      %v1732 = vld [vmem:[%s383 + $0x10] sm:$0xff]
      %v1733 = vld [vmem:[%s383 + $0x18] sm:$0xff]
      %v1734 = vld [vmem:[%s383 + $0x20] sm:$0xff]
      %v1735 = vld [vmem:[%s383 + $0x28] sm:$0xff]
      %v1736 = vld [vmem:[%s383 + $0x30] sm:$0xff]
      %v1737 = vld [vmem:[%s383 + $0x38] sm:$0xff]
      %v1738 = vld [vmem:[%s383 + $0x40] sm:$0xff]
      %v1739 = vld [vmem:[%s383 + $0x48] sm:$0xff]
      %v1740 = vld [vmem:[%s383 + $0x50] sm:$0xff]
      %v1741 = vld [vmem:[%s383 + $0x58] sm:$0xff]
      %v1742 = vld [vmem:[%s383 + $0x60] sm:$0xff]
      %v1743 = vld [vmem:[%s383 + $0x68] sm:$0xff]
      %v1744 = vld [vmem:[%s383 + $0x70] sm:$0xff]
      %v1745 = vld [vmem:[%s383 + $0x78] sm:$0xff]
      %v1746 = vld [vmem:[%s383 + $0x80] sm:$0xff]
      %v1747 = vld [vmem:[%s383 + $0x88] sm:$0xff]
      %v1748 = vld [vmem:[%s383 + $0x90] sm:$0xff]
      %v1749 = vld [vmem:[%s383 + $0x98] sm:$0xff]
      %v1750 = vld [vmem:[%s383 + $0xa0] sm:$0xff]
      %v1751 = vld [vmem:[%s383 + $0xa8] sm:$0xff]
      %v1752 = vld [vmem:[%s383 + $0xb0] sm:$0xff]
      %v1753 = vld [vmem:[%s383 + $0xb8] sm:$0xff]
      %v1754 = vld [vmem:[%s383 + $0xc0] sm:$0xff]
      %v1755 = vld [vmem:[%s383 + $0xc8] sm:$0xff]
      %v1756 = vld [vmem:[%s383 + $0xd0] sm:$0xff]
      %v1757 = vld [vmem:[%s383 + $0xd8] sm:$0xff]
      %v1758 = vld [vmem:[%s383 + $0xe0] sm:$0xff]
      %v1759 = vld [vmem:[%s383 + $0xe8] sm:$0xff]
      %v1760 = vld [vmem:[%s383 + $0xf0] sm:$0xff]
      %v1761 = vld [vmem:[%s383 + $0xf8] sm:$0xff]
      %v1762 = vmax.f32 %v1698, %v1730
      %v1763 = vmax.f32 %v1699, %v1731
      %v1764 = vmax.f32 %v1700, %v1732
      %v1765 = vmax.f32 %v1701, %v1733
      %v1766 = vmax.f32 %v1702, %v1734
      %v1767 = vmax.f32 %v1703, %v1735
      %v1768 = vmax.f32 %v1704, %v1736
      %v1769 = vmax.f32 %v1705, %v1737
      %v1770 = vmax.f32 %v1706, %v1738
      %v1771 = vmax.f32 %v1707, %v1739
      %v1772 = vmax.f32 %v1708, %v1740
      %v1773 = vmax.f32 %v1709, %v1741
      %v1774 = vmax.f32 %v1710, %v1742
      %v1775 = vmax.f32 %v1711, %v1743
      %v1776 = vmax.f32 %v1712, %v1744
      %v1777 = vmax.f32 %v1713, %v1745
      %v1778 = vmax.f32 %v1714, %v1746
      %v1779 = vmax.f32 %v1715, %v1747
      %v1780 = vmax.f32 %v1716, %v1748
      %v1781 = vmax.f32 %v1717, %v1749
      %v1782 = vmax.f32 %v1718, %v1750
      %v1783 = vmax.f32 %v1719, %v1751
      %v1784 = vmax.f32 %v1720, %v1752
      %v1785 = vmax.f32 %v1721, %v1753
      %v1786 = vmax.f32 %v1722, %v1754
      %v1787 = vmax.f32 %v1723, %v1755
      %v1788 = vmax.f32 %v1724, %v1756
      %v1789 = vmax.f32 %v1725, %v1757
      %v1790 = vmax.f32 %v1726, %v1758
      %v1791 = vmax.f32 %v1727, %v1759
      %v1792 = vmax.f32 %v1728, %v1760
      %v1793 = vmax.f32 %v1729, %v1761
      %v1794 = vld [vmem:[%s318] sm:$0xff]
      %v1795 = vld [vmem:[%s318 + $0x8] sm:$0xff]
      %v1796 = vld [vmem:[%s318 + $0x10] sm:$0xff]
      %v1797 = vld [vmem:[%s318 + $0x18] sm:$0xff]
      %v1798 = vld [vmem:[%s318 + $0x20] sm:$0xff]
      %v1799 = vld [vmem:[%s318 + $0x28] sm:$0xff]
      %v1800 = vld [vmem:[%s318 + $0x30] sm:$0xff]
      %v1801 = vld [vmem:[%s318 + $0x38] sm:$0xff]
      %v1802 = vld [vmem:[%s318 + $0x40] sm:$0xff]
      %v1803 = vld [vmem:[%s318 + $0x48] sm:$0xff]
      %v1804 = vld [vmem:[%s318 + $0x50] sm:$0xff]
      %v1805 = vld [vmem:[%s318 + $0x58] sm:$0xff]
      %v1806 = vld [vmem:[%s318 + $0x60] sm:$0xff]
      %v1807 = vld [vmem:[%s318 + $0x68] sm:$0xff]
      %v1808 = vld [vmem:[%s318 + $0x70] sm:$0xff]
      %v1809 = vld [vmem:[%s318 + $0x78] sm:$0xff]
      %v1810 = vld [vmem:[%s318 + $0x80] sm:$0xff]
      %v1811 = vld [vmem:[%s318 + $0x88] sm:$0xff]
      %v1812 = vld [vmem:[%s318 + $0x90] sm:$0xff]
      %v1813 = vld [vmem:[%s318 + $0x98] sm:$0xff]
      %v1814 = vld [vmem:[%s318 + $0xa0] sm:$0xff]
      %v1815 = vld [vmem:[%s318 + $0xa8] sm:$0xff]
      %v1816 = vld [vmem:[%s318 + $0xb0] sm:$0xff]
      %v1817 = vld [vmem:[%s318 + $0xb8] sm:$0xff]
      %v1818 = vld [vmem:[%s318 + $0xc0] sm:$0xff]
      %v1819 = vld [vmem:[%s318 + $0xc8] sm:$0xff]
      %v1820 = vld [vmem:[%s318 + $0xd0] sm:$0xff]
      %v1821 = vld [vmem:[%s318 + $0xd8] sm:$0xff]
      %v1822 = vld [vmem:[%s318 + $0xe0] sm:$0xff]
      %v1823 = vld [vmem:[%s318 + $0xe8] sm:$0xff]
      %v1824 = vld [vmem:[%s318 + $0xf0] sm:$0xff]
      %v1825 = vld [vmem:[%s318 + $0xf8] sm:$0xff]
      %v1826 = vmax.f32 %v1762, %v1794
      %v1827 = vmax.f32 %v1763, %v1795
      %v1828 = vmax.f32 %v1764, %v1796
      %v1829 = vmax.f32 %v1765, %v1797
      %v1830 = vmax.f32 %v1766, %v1798
      %v1831 = vmax.f32 %v1767, %v1799
      %v1832 = vmax.f32 %v1768, %v1800
      %v1833 = vmax.f32 %v1769, %v1801
      %v1834 = vmax.f32 %v1770, %v1802
      %v1835 = vmax.f32 %v1771, %v1803
      %v1836 = vmax.f32 %v1772, %v1804
      %v1837 = vmax.f32 %v1773, %v1805
      %v1838 = vmax.f32 %v1774, %v1806
      %v1839 = vmax.f32 %v1775, %v1807
      %v1840 = vmax.f32 %v1776, %v1808
      %v1841 = vmax.f32 %v1777, %v1809
      %v1842 = vmax.f32 %v1778, %v1810
      %v1843 = vmax.f32 %v1779, %v1811
      %v1844 = vmax.f32 %v1780, %v1812
      %v1845 = vmax.f32 %v1781, %v1813
      %v1846 = vmax.f32 %v1782, %v1814
      %v1847 = vmax.f32 %v1783, %v1815
      %v1848 = vmax.f32 %v1784, %v1816
      %v1849 = vmax.f32 %v1785, %v1817
      %v1850 = vmax.f32 %v1786, %v1818
      %v1851 = vmax.f32 %v1787, %v1819
      %v1852 = vmax.f32 %v1788, %v1820
      %v1853 = vmax.f32 %v1789, %v1821
      %v1854 = vmax.f32 %v1790, %v1822
      %v1855 = vmax.f32 %v1791, %v1823
      %v1856 = vmax.f32 %v1792, %v1824
      %v1857 = vmax.f32 %v1793, %v1825
      %v1858 = vld [vmem:[%s512] sm:$0xff]
      %v1859 = vld [vmem:[%s512 + $0x8] sm:$0xff]
      %v1860 = vld [vmem:[%s512 + $0x10] sm:$0xff]
      %v1861 = vld [vmem:[%s512 + $0x18] sm:$0xff]
      %v1862 = vld [vmem:[%s512 + $0x20] sm:$0xff]
      %v1863 = vld [vmem:[%s512 + $0x28] sm:$0xff]
      %v1864 = vld [vmem:[%s512 + $0x30] sm:$0xff]
      %v1865 = vld [vmem:[%s512 + $0x38] sm:$0xff]
      %v1866 = vld [vmem:[%s512 + $0x40] sm:$0xff]
      %v1867 = vld [vmem:[%s512 + $0x48] sm:$0xff]
      %v1868 = vld [vmem:[%s512 + $0x50] sm:$0xff]
      %v1869 = vld [vmem:[%s512 + $0x58] sm:$0xff]
      %v1870 = vld [vmem:[%s512 + $0x60] sm:$0xff]
      %v1871 = vld [vmem:[%s512 + $0x68] sm:$0xff]
      %v1872 = vld [vmem:[%s512 + $0x70] sm:$0xff]
      %v1873 = vld [vmem:[%s512 + $0x78] sm:$0xff]
      %v1874 = vld [vmem:[%s512 + $0x80] sm:$0xff]
      %v1875 = vld [vmem:[%s512 + $0x88] sm:$0xff]
      %v1876 = vld [vmem:[%s512 + $0x90] sm:$0xff]
      %v1877 = vld [vmem:[%s512 + $0x98] sm:$0xff]
      %v1878 = vld [vmem:[%s512 + $0xa0] sm:$0xff]
      %v1879 = vld [vmem:[%s512 + $0xa8] sm:$0xff]
      %v1880 = vld [vmem:[%s512 + $0xb0] sm:$0xff]
      %v1881 = vld [vmem:[%s512 + $0xb8] sm:$0xff]
      %v1882 = vld [vmem:[%s512 + $0xc0] sm:$0xff]
      %v1883 = vld [vmem:[%s512 + $0xc8] sm:$0xff]
      %v1884 = vld [vmem:[%s512 + $0xd0] sm:$0xff]
      %v1885 = vld [vmem:[%s512 + $0xd8] sm:$0xff]
      %v1886 = vld [vmem:[%s512 + $0xe0] sm:$0xff]
      %v1887 = vld [vmem:[%s512 + $0xe8] sm:$0xff]
      %v1888 = vld [vmem:[%s512 + $0xf0] sm:$0xff]
      %v1889 = vld [vmem:[%s512 + $0xf8] sm:$0xff]
      %v1890 = vmax.f32 %v1826, %v1858
      %v1891 = vmax.f32 %v1827, %v1859
      %v1892 = vmax.f32 %v1828, %v1860
      %v1893 = vmax.f32 %v1829, %v1861
      %v1894 = vmax.f32 %v1830, %v1862
      %v1895 = vmax.f32 %v1831, %v1863
      %v1896 = vmax.f32 %v1832, %v1864
      %v1897 = vmax.f32 %v1833, %v1865
      %v1898 = vmax.f32 %v1834, %v1866
      %v1899 = vmax.f32 %v1835, %v1867
      %v1900 = vmax.f32 %v1836, %v1868
      %v1901 = vmax.f32 %v1837, %v1869
      %v1902 = vmax.f32 %v1838, %v1870
      %v1903 = vmax.f32 %v1839, %v1871
      %v1904 = vmax.f32 %v1840, %v1872
      %v1905 = vmax.f32 %v1841, %v1873
      %v1906 = vmax.f32 %v1842, %v1874
      %v1907 = vmax.f32 %v1843, %v1875
      %v1908 = vmax.f32 %v1844, %v1876
      %v1909 = vmax.f32 %v1845, %v1877
      %v1910 = vmax.f32 %v1846, %v1878
      %v1911 = vmax.f32 %v1847, %v1879
      %v1912 = vmax.f32 %v1848, %v1880
      %v1913 = vmax.f32 %v1849, %v1881
      %v1914 = vmax.f32 %v1850, %v1882
      %v1915 = vmax.f32 %v1851, %v1883
      %v1916 = vmax.f32 %v1852, %v1884
      %v1917 = vmax.f32 %v1853, %v1885
      %v1918 = vmax.f32 %v1854, %v1886
      %v1919 = vmax.f32 %v1855, %v1887
      %v1920 = vmax.f32 %v1856, %v1888
      %v1921 = vmax.f32 %v1857, %v1889
      %v1922 = vld [vmem:[%s577] sm:$0xff]
      %v1923 = vld [vmem:[%s577 + $0x8] sm:$0xff]
      %v1924 = vld [vmem:[%s577 + $0x10] sm:$0xff]
      %v1925 = vld [vmem:[%s577 + $0x18] sm:$0xff]
      %v1926 = vld [vmem:[%s577 + $0x20] sm:$0xff]
      %v1927 = vld [vmem:[%s577 + $0x28] sm:$0xff]
      %v1928 = vld [vmem:[%s577 + $0x30] sm:$0xff]
      %v1929 = vld [vmem:[%s577 + $0x38] sm:$0xff]
      %v1930 = vld [vmem:[%s577 + $0x40] sm:$0xff]
      %v1931 = vld [vmem:[%s577 + $0x48] sm:$0xff]
      %v1932 = vld [vmem:[%s577 + $0x50] sm:$0xff]
      %v1933 = vld [vmem:[%s577 + $0x58] sm:$0xff]
      %v1934 = vld [vmem:[%s577 + $0x60] sm:$0xff]
      %v1935 = vld [vmem:[%s577 + $0x68] sm:$0xff]
      %v1936 = vld [vmem:[%s577 + $0x70] sm:$0xff]
      %v1937 = vld [vmem:[%s577 + $0x78] sm:$0xff]
      %v1938 = vld [vmem:[%s577 + $0x80] sm:$0xff]
      %v1939 = vld [vmem:[%s577 + $0x88] sm:$0xff]
      %v1940 = vld [vmem:[%s577 + $0x90] sm:$0xff]
      %v1941 = vld [vmem:[%s577 + $0x98] sm:$0xff]
      %v1942 = vld [vmem:[%s577 + $0xa0] sm:$0xff]
      %v1943 = vld [vmem:[%s577 + $0xa8] sm:$0xff]
      %v1944 = vld [vmem:[%s577 + $0xb0] sm:$0xff]
      %v1945 = vld [vmem:[%s577 + $0xb8] sm:$0xff]
      %v1946 = vld [vmem:[%s577 + $0xc0] sm:$0xff]
      %v1947 = vld [vmem:[%s577 + $0xc8] sm:$0xff]
      %v1948 = vld [vmem:[%s577 + $0xd0] sm:$0xff]
      %v1949 = vld [vmem:[%s577 + $0xd8] sm:$0xff]
      %v1950 = vld [vmem:[%s577 + $0xe0] sm:$0xff]
      %v1951 = vld [vmem:[%s577 + $0xe8] sm:$0xff]
      %v1952 = vld [vmem:[%s577 + $0xf0] sm:$0xff]
      %v1953 = vld [vmem:[%s577 + $0xf8] sm:$0xff]
      %v1954 = vmax.f32 %v1890, %v1922
      %v1955 = vmax.f32 %v1891, %v1923
      %v1956 = vmax.f32 %v1892, %v1924
      %v1957 = vmax.f32 %v1893, %v1925
      %v1958 = vmax.f32 %v1894, %v1926
      %v1959 = vmax.f32 %v1895, %v1927
      %v1960 = vmax.f32 %v1896, %v1928
      %v1961 = vmax.f32 %v1897, %v1929
      %v1962 = vmax.f32 %v1898, %v1930
      %v1963 = vmax.f32 %v1899, %v1931
      %v1964 = vmax.f32 %v1900, %v1932
      %v1965 = vmax.f32 %v1901, %v1933
      %v1966 = vmax.f32 %v1902, %v1934
      %v1967 = vmax.f32 %v1903, %v1935
      %v1968 = vmax.f32 %v1904, %v1936
      %v1969 = vmax.f32 %v1905, %v1937
      %v1970 = vmax.f32 %v1906, %v1938
      %v1971 = vmax.f32 %v1907, %v1939
      %v1972 = vmax.f32 %v1908, %v1940
      %v1973 = vmax.f32 %v1909, %v1941
      %v1974 = vmax.f32 %v1910, %v1942
      %v1975 = vmax.f32 %v1911, %v1943
      %v1976 = vmax.f32 %v1912, %v1944
      %v1977 = vmax.f32 %v1913, %v1945
      %v1978 = vmax.f32 %v1914, %v1946
      %v1979 = vmax.f32 %v1915, %v1947
      %v1980 = vmax.f32 %v1916, %v1948
      %v1981 = vmax.f32 %v1917, %v1949
      %v1982 = vmax.f32 %v1918, %v1950
      %v1983 = vmax.f32 %v1919, %v1951
      %v1984 = vmax.f32 %v1920, %v1952
      %v1985 = vmax.f32 %v1921, %v1953
      %1986 = vst.msk [vmem:[#allocation3 + $0x2] sm:$0xff] %vm243, %v1954
      %1987 = vst.msk [vmem:[#allocation3 + $0xa] sm:$0xff] %vm243, %v1955
      %1988 = vst.msk [vmem:[#allocation3 + $0x1a] sm:$0xff] %vm243, %v1956
      %1989 = vst.msk [vmem:[#allocation3 + $0x22] sm:$0xff] %vm243, %v1957
      %1990 = vst.msk [vmem:[#allocation3 + $0x32] sm:$0xff] %vm243, %v1958
      %1991 = vst.msk [vmem:[#allocation3 + $0x3a] sm:$0xff] %vm243, %v1959
      %1992 = vst.msk [vmem:[#allocation3 + $0x4a] sm:$0xff] %vm243, %v1960
      %1993 = vst.msk [vmem:[#allocation3 + $0x52] sm:$0xff] %vm243, %v1961
      %1994 = vst.msk [vmem:[#allocation3 + $0x62] sm:$0xff] %vm243, %v1962
      %1995 = vst.msk [vmem:[#allocation3 + $0x6a] sm:$0xff] %vm243, %v1963
      %1996 = vst.msk [vmem:[#allocation3 + $0x7a] sm:$0xff] %vm243, %v1964
      %1997 = vst.msk [vmem:[#allocation3 + $0x82] sm:$0xff] %vm243, %v1965
      %1998 = vst.msk [vmem:[#allocation3 + $0x92] sm:$0xff] %vm243, %v1966
      %1999 = vst.msk [vmem:[#allocation3 + $0x9a] sm:$0xff] %vm243, %v1967
      %2000 = vst.msk [vmem:[#allocation3 + $0xaa] sm:$0xff] %vm243, %v1968
      %2001 = vst.msk [vmem:[#allocation3 + $0xb2] sm:$0xff] %vm243, %v1969
      %2002 = vst.msk [vmem:[#allocation3 + $0xc2] sm:$0xff] %vm243, %v1970
      %2003 = vst.msk [vmem:[#allocation3 + $0xca] sm:$0xff] %vm243, %v1971
      %2004 = vst.msk [vmem:[#allocation3 + $0xda] sm:$0xff] %vm243, %v1972
      %2005 = vst.msk [vmem:[#allocation3 + $0xe2] sm:$0xff] %vm243, %v1973
      %2006 = vst.msk [vmem:[#allocation3 + $0xf2] sm:$0xff] %vm243, %v1974
      %2007 = vst.msk [vmem:[#allocation3 + $0xfa] sm:$0xff] %vm243, %v1975
      %2008 = vst.msk [vmem:[#allocation3 + $0x10a] sm:$0xff] %vm243, %v1976
      %2009 = vst.msk [vmem:[#allocation3 + $0x112] sm:$0xff] %vm243, %v1977
      %2010 = vst.msk [vmem:[#allocation3 + $0x122] sm:$0xff] %vm243, %v1978
      %2011 = vst.msk [vmem:[#allocation3 + $0x12a] sm:$0xff] %vm243, %v1979
      %2012 = vst.msk [vmem:[#allocation3 + $0x13a] sm:$0xff] %vm243, %v1980
      %2013 = vst.msk [vmem:[#allocation3 + $0x142] sm:$0xff] %vm243, %v1981
      %2014 = vst.msk [vmem:[#allocation3 + $0x152] sm:$0xff] %vm243, %v1982
      %2015 = vst.msk [vmem:[#allocation3 + $0x15a] sm:$0xff] %vm243, %v1983
      %2016 = vst.msk [vmem:[#allocation3 + $0x16a] sm:$0xff] %vm243, %v1984
      %2017 = vst.msk [vmem:[#allocation3 + $0x172] sm:$0xff] %vm243, %v1985
      %v2018 = vld [vmem:[#allocation3] sm:$0xff]
      %v2019 = vld [vmem:[#allocation3 + $0x8] sm:$0xff]
      %v2020 = vld [vmem:[#allocation3 + $0x18] sm:$0xff]
      %v2021 = vld [vmem:[#allocation3 + $0x20] sm:$0xff]
      %v2022 = vld [vmem:[#allocation3 + $0x30] sm:$0xff]
      %v2023 = vld [vmem:[#allocation3 + $0x38] sm:$0xff]
      %v2024 = vld [vmem:[#allocation3 + $0x48] sm:$0xff]
      %v2025 = vld [vmem:[#allocation3 + $0x50] sm:$0xff]
      %v2026 = vld [vmem:[#allocation3 + $0x60] sm:$0xff]
      %v2027 = vld [vmem:[#allocation3 + $0x68] sm:$0xff]
      %v2028 = vld [vmem:[#allocation3 + $0x78] sm:$0xff]
      %v2029 = vld [vmem:[#allocation3 + $0x80] sm:$0xff]
      %v2030 = vld [vmem:[#allocation3 + $0x90] sm:$0xff]
      %v2031 = vld [vmem:[#allocation3 + $0x98] sm:$0xff]
      %v2032 = vld [vmem:[#allocation3 + $0xa8] sm:$0xff]
      %v2033 = vld [vmem:[#allocation3 + $0xb0] sm:$0xff]
      %v2034 = vld [vmem:[#allocation3 + $0xc0] sm:$0xff]
      %v2035 = vld [vmem:[#allocation3 + $0xc8] sm:$0xff]
      %v2036 = vld [vmem:[#allocation3 + $0xd8] sm:$0xff]
      %v2037 = vld [vmem:[#allocation3 + $0xe0] sm:$0xff]
      %v2038 = vld [vmem:[#allocation3 + $0xf0] sm:$0xff]
      %v2039 = vld [vmem:[#allocation3 + $0xf8] sm:$0xff]
      %v2040 = vld [vmem:[#allocation3 + $0x108] sm:$0xff]
      %v2041 = vld [vmem:[#allocation3 + $0x110] sm:$0xff]
      %v2042 = vld [vmem:[#allocation3 + $0x120] sm:$0xff]
      %v2043 = vld [vmem:[#allocation3 + $0x128] sm:$0xff]
      %v2044 = vld [vmem:[#allocation3 + $0x138] sm:$0xff]
      %v2045 = vld [vmem:[#allocation3 + $0x140] sm:$0xff]
      %v2046 = vld [vmem:[#allocation3 + $0x150] sm:$0xff]
      %v2047 = vld [vmem:[#allocation3 + $0x158] sm:$0xff]
      %v2048 = vld [vmem:[#allocation3 + $0x168] sm:$0xff]
      %v2049 = vld [vmem:[#allocation3 + $0x170] sm:$0xff]
      %v2050 = vld [vmem:[#allocation3 + $0x1] sm:$0xff]
      %v2051 = vld [vmem:[#allocation3 + $0x9] sm:$0xff]
      %v2052 = vld [vmem:[#allocation3 + $0x19] sm:$0xff]
      %v2053 = vld [vmem:[#allocation3 + $0x21] sm:$0xff]
      %v2054 = vld [vmem:[#allocation3 + $0x31] sm:$0xff]
      %v2055 = vld [vmem:[#allocation3 + $0x39] sm:$0xff]
      %v2056 = vld [vmem:[#allocation3 + $0x49] sm:$0xff]
      %v2057 = vld [vmem:[#allocation3 + $0x51] sm:$0xff]
      %v2058 = vld [vmem:[#allocation3 + $0x61] sm:$0xff]
      %v2059 = vld [vmem:[#allocation3 + $0x69] sm:$0xff]
      %v2060 = vld [vmem:[#allocation3 + $0x79] sm:$0xff]
      %v2061 = vld [vmem:[#allocation3 + $0x81] sm:$0xff]
      %v2062 = vld [vmem:[#allocation3 + $0x91] sm:$0xff]
      %v2063 = vld [vmem:[#allocation3 + $0x99] sm:$0xff]
      %v2064 = vld [vmem:[#allocation3 + $0xa9] sm:$0xff]
      %v2065 = vld [vmem:[#allocation3 + $0xb1] sm:$0xff]
      %v2066 = vld [vmem:[#allocation3 + $0xc1] sm:$0xff]
      %v2067 = vld [vmem:[#allocation3 + $0xc9] sm:$0xff]
      %v2068 = vld [vmem:[#allocation3 + $0xd9] sm:$0xff]
      %v2069 = vld [vmem:[#allocation3 + $0xe1] sm:$0xff]
      %v2070 = vld [vmem:[#allocation3 + $0xf1] sm:$0xff]
      %v2071 = vld [vmem:[#allocation3 + $0xf9] sm:$0xff]
      %v2072 = vld [vmem:[#allocation3 + $0x109] sm:$0xff]
      %v2073 = vld [vmem:[#allocation3 + $0x111] sm:$0xff]
      %v2074 = vld [vmem:[#allocation3 + $0x121] sm:$0xff]
      %v2075 = vld [vmem:[#allocation3 + $0x129] sm:$0xff]
      %v2076 = vld [vmem:[#allocation3 + $0x139] sm:$0xff]
      %v2077 = vld [vmem:[#allocation3 + $0x141] sm:$0xff]
      %v2078 = vld [vmem:[#allocation3 + $0x151] sm:$0xff]
      %v2079 = vld [vmem:[#allocation3 + $0x159] sm:$0xff]
      %v2080 = vld [vmem:[#allocation3 + $0x169] sm:$0xff]
      %v2081 = vld [vmem:[#allocation3 + $0x171] sm:$0xff]
      %v2082 = vmax.f32 %v2018, %v2050
      %v2083 = vmax.f32 %v2019, %v2051
      %v2084 = vmax.f32 %v2020, %v2052
      %v2085 = vmax.f32 %v2021, %v2053
      %v2086 = vmax.f32 %v2022, %v2054
      %v2087 = vmax.f32 %v2023, %v2055
      %v2088 = vmax.f32 %v2024, %v2056
      %v2089 = vmax.f32 %v2025, %v2057
      %v2090 = vmax.f32 %v2026, %v2058
      %v2091 = vmax.f32 %v2027, %v2059
      %v2092 = vmax.f32 %v2028, %v2060
      %v2093 = vmax.f32 %v2029, %v2061
      %v2094 = vmax.f32 %v2030, %v2062
      %v2095 = vmax.f32 %v2031, %v2063
      %v2096 = vmax.f32 %v2032, %v2064
      %v2097 = vmax.f32 %v2033, %v2065
      %v2098 = vmax.f32 %v2034, %v2066
      %v2099 = vmax.f32 %v2035, %v2067
      %v2100 = vmax.f32 %v2036, %v2068
      %v2101 = vmax.f32 %v2037, %v2069
      %v2102 = vmax.f32 %v2038, %v2070
      %v2103 = vmax.f32 %v2039, %v2071
      %v2104 = vmax.f32 %v2040, %v2072
      %v2105 = vmax.f32 %v2041, %v2073
      %v2106 = vmax.f32 %v2042, %v2074
      %v2107 = vmax.f32 %v2043, %v2075
      %v2108 = vmax.f32 %v2044, %v2076
      %v2109 = vmax.f32 %v2045, %v2077
      %v2110 = vmax.f32 %v2046, %v2078
      %v2111 = vmax.f32 %v2047, %v2079
      %v2112 = vmax.f32 %v2048, %v2080
      %v2113 = vmax.f32 %v2049, %v2081
      %v2114 = vld [vmem:[#allocation3 + $0x2] sm:$0xff]
      %v2115 = vld [vmem:[#allocation3 + $0xa] sm:$0xff]
      %v2116 = vld [vmem:[#allocation3 + $0x1a] sm:$0xff]
      %v2117 = vld [vmem:[#allocation3 + $0x22] sm:$0xff]
      %v2118 = vld [vmem:[#allocation3 + $0x32] sm:$0xff]
      %v2119 = vld [vmem:[#allocation3 + $0x3a] sm:$0xff]
      %v2120 = vld [vmem:[#allocation3 + $0x4a] sm:$0xff]
      %v2121 = vld [vmem:[#allocation3 + $0x52] sm:$0xff]
      %v2122 = vld [vmem:[#allocation3 + $0x62] sm:$0xff]
      %v2123 = vld [vmem:[#allocation3 + $0x6a] sm:$0xff]
      %v2124 = vld [vmem:[#allocation3 + $0x7a] sm:$0xff]
      %v2125 = vld [vmem:[#allocation3 + $0x82] sm:$0xff]
      %v2126 = vld [vmem:[#allocation3 + $0x92] sm:$0xff]
      %v2127 = vld [vmem:[#allocation3 + $0x9a] sm:$0xff]
      %v2128 = vld [vmem:[#allocation3 + $0xaa] sm:$0xff]
      %v2129 = vld [vmem:[#allocation3 + $0xb2] sm:$0xff]
      %v2130 = vld [vmem:[#allocation3 + $0xc2] sm:$0xff]
      %v2131 = vld [vmem:[#allocation3 + $0xca] sm:$0xff]
      %v2132 = vld [vmem:[#allocation3 + $0xda] sm:$0xff]
      %v2133 = vld [vmem:[#allocation3 + $0xe2] sm:$0xff]
      %v2134 = vld [vmem:[#allocation3 + $0xf2] sm:$0xff]
      %v2135 = vld [vmem:[#allocation3 + $0xfa] sm:$0xff]
      %v2136 = vld [vmem:[#allocation3 + $0x10a] sm:$0xff]
      %v2137 = vld [vmem:[#allocation3 + $0x112] sm:$0xff]
      %v2138 = vld [vmem:[#allocation3 + $0x122] sm:$0xff]
      %v2139 = vld [vmem:[#allocation3 + $0x12a] sm:$0xff]
      %v2140 = vld [vmem:[#allocation3 + $0x13a] sm:$0xff]
      %v2141 = vld [vmem:[#allocation3 + $0x142] sm:$0xff]
      %v2142 = vld [vmem:[#allocation3 + $0x152] sm:$0xff]
      %v2143 = vld [vmem:[#allocation3 + $0x15a] sm:$0xff]
      %v2144 = vld [vmem:[#allocation3 + $0x16a] sm:$0xff]
      %v2145 = vld [vmem:[#allocation3 + $0x172] sm:$0xff]
      %v2146 = vmax.f32 %v2082, %v2114
      %v2147 = vmax.f32 %v2083, %v2115
      %v2148 = vmax.f32 %v2084, %v2116
      %v2149 = vmax.f32 %v2085, %v2117
      %v2150 = vmax.f32 %v2086, %v2118
      %v2151 = vmax.f32 %v2087, %v2119
      %v2152 = vmax.f32 %v2088, %v2120
      %v2153 = vmax.f32 %v2089, %v2121
      %v2154 = vmax.f32 %v2090, %v2122
      %v2155 = vmax.f32 %v2091, %v2123
      %v2156 = vmax.f32 %v2092, %v2124
      %v2157 = vmax.f32 %v2093, %v2125
      %v2158 = vmax.f32 %v2094, %v2126
      %v2159 = vmax.f32 %v2095, %v2127
      %v2160 = vmax.f32 %v2096, %v2128
      %v2161 = vmax.f32 %v2097, %v2129
      %v2162 = vmax.f32 %v2098, %v2130
      %v2163 = vmax.f32 %v2099, %v2131
      %v2164 = vmax.f32 %v2100, %v2132
      %v2165 = vmax.f32 %v2101, %v2133
      %v2166 = vmax.f32 %v2102, %v2134
      %v2167 = vmax.f32 %v2103, %v2135
      %v2168 = vmax.f32 %v2104, %v2136
      %v2169 = vmax.f32 %v2105, %v2137
      %v2170 = vmax.f32 %v2106, %v2138
      %v2171 = vmax.f32 %v2107, %v2139
      %v2172 = vmax.f32 %v2108, %v2140
      %v2173 = vmax.f32 %v2109, %v2141
      %v2174 = vmax.f32 %v2110, %v2142
      %v2175 = vmax.f32 %v2111, %v2143
      %v2176 = vmax.f32 %v2112, %v2144
      %v2177 = vmax.f32 %v2113, %v2145
      %v2178 = vld [vmem:[#allocation3 + $0x3] sm:$0xff]
      %v2179 = vld [vmem:[#allocation3 + $0xb] sm:$0xff]
      %v2180 = vld [vmem:[#allocation3 + $0x1b] sm:$0xff]
      %v2181 = vld [vmem:[#allocation3 + $0x23] sm:$0xff]
      %v2182 = vld [vmem:[#allocation3 + $0x33] sm:$0xff]
      %v2183 = vld [vmem:[#allocation3 + $0x3b] sm:$0xff]
      %v2184 = vld [vmem:[#allocation3 + $0x4b] sm:$0xff]
      %v2185 = vld [vmem:[#allocation3 + $0x53] sm:$0xff]
      %v2186 = vld [vmem:[#allocation3 + $0x63] sm:$0xff]
      %v2187 = vld [vmem:[#allocation3 + $0x6b] sm:$0xff]
      %v2188 = vld [vmem:[#allocation3 + $0x7b] sm:$0xff]
      %v2189 = vld [vmem:[#allocation3 + $0x83] sm:$0xff]
      %v2190 = vld [vmem:[#allocation3 + $0x93] sm:$0xff]
      %v2191 = vld [vmem:[#allocation3 + $0x9b] sm:$0xff]
      %v2192 = vld [vmem:[#allocation3 + $0xab] sm:$0xff]
      %v2193 = vld [vmem:[#allocation3 + $0xb3] sm:$0xff]
      %v2194 = vld [vmem:[#allocation3 + $0xc3] sm:$0xff]
      %v2195 = vld [vmem:[#allocation3 + $0xcb] sm:$0xff]
      %v2196 = vld [vmem:[#allocation3 + $0xdb] sm:$0xff]
      %v2197 = vld [vmem:[#allocation3 + $0xe3] sm:$0xff]
      %v2198 = vld [vmem:[#allocation3 + $0xf3] sm:$0xff]
      %v2199 = vld [vmem:[#allocation3 + $0xfb] sm:$0xff]
      %v2200 = vld [vmem:[#allocation3 + $0x10b] sm:$0xff]
      %v2201 = vld [vmem:[#allocation3 + $0x113] sm:$0xff]
      %v2202 = vld [vmem:[#allocation3 + $0x123] sm:$0xff]
      %v2203 = vld [vmem:[#allocation3 + $0x12b] sm:$0xff]
      %v2204 = vld [vmem:[#allocation3 + $0x13b] sm:$0xff]
      %v2205 = vld [vmem:[#allocation3 + $0x143] sm:$0xff]
      %v2206 = vld [vmem:[#allocation3 + $0x153] sm:$0xff]
      %v2207 = vld [vmem:[#allocation3 + $0x15b] sm:$0xff]
      %v2208 = vld [vmem:[#allocation3 + $0x16b] sm:$0xff]
      %v2209 = vld [vmem:[#allocation3 + $0x173] sm:$0xff]
      %v2210 = vmax.f32 %v2146, %v2178
      %v2211 = vmax.f32 %v2147, %v2179
      %v2212 = vmax.f32 %v2148, %v2180
      %v2213 = vmax.f32 %v2149, %v2181
      %v2214 = vmax.f32 %v2150, %v2182
      %v2215 = vmax.f32 %v2151, %v2183
      %v2216 = vmax.f32 %v2152, %v2184
      %v2217 = vmax.f32 %v2153, %v2185
      %v2218 = vmax.f32 %v2154, %v2186
      %v2219 = vmax.f32 %v2155, %v2187
      %v2220 = vmax.f32 %v2156, %v2188
      %v2221 = vmax.f32 %v2157, %v2189
      %v2222 = vmax.f32 %v2158, %v2190
      %v2223 = vmax.f32 %v2159, %v2191
      %v2224 = vmax.f32 %v2160, %v2192
      %v2225 = vmax.f32 %v2161, %v2193
      %v2226 = vmax.f32 %v2162, %v2194
      %v2227 = vmax.f32 %v2163, %v2195
      %v2228 = vmax.f32 %v2164, %v2196
      %v2229 = vmax.f32 %v2165, %v2197
      %v2230 = vmax.f32 %v2166, %v2198
      %v2231 = vmax.f32 %v2167, %v2199
      %v2232 = vmax.f32 %v2168, %v2200
      %v2233 = vmax.f32 %v2169, %v2201
      %v2234 = vmax.f32 %v2170, %v2202
      %v2235 = vmax.f32 %v2171, %v2203
      %v2236 = vmax.f32 %v2172, %v2204
      %v2237 = vmax.f32 %v2173, %v2205
      %v2238 = vmax.f32 %v2174, %v2206
      %v2239 = vmax.f32 %v2175, %v2207
      %v2240 = vmax.f32 %v2176, %v2208
      %v2241 = vmax.f32 %v2177, %v2209
      %v2242 = vld [vmem:[#allocation3 + $0x4] sm:$0xff]
      %v2243 = vld [vmem:[#allocation3 + $0xc] sm:$0xff]
      %v2244 = vld [vmem:[#allocation3 + $0x1c] sm:$0xff]
      %v2245 = vld [vmem:[#allocation3 + $0x24] sm:$0xff]
      %v2246 = vld [vmem:[#allocation3 + $0x34] sm:$0xff]
      %v2247 = vld [vmem:[#allocation3 + $0x3c] sm:$0xff]
      %v2248 = vld [vmem:[#allocation3 + $0x4c] sm:$0xff]
      %v2249 = vld [vmem:[#allocation3 + $0x54] sm:$0xff]
      %v2250 = vld [vmem:[#allocation3 + $0x64] sm:$0xff]
      %v2251 = vld [vmem:[#allocation3 + $0x6c] sm:$0xff]
      %v2252 = vld [vmem:[#allocation3 + $0x7c] sm:$0xff]
      %v2253 = vld [vmem:[#allocation3 + $0x84] sm:$0xff]
      %v2254 = vld [vmem:[#allocation3 + $0x94] sm:$0xff]
      %v2255 = vld [vmem:[#allocation3 + $0x9c] sm:$0xff]
      %v2256 = vld [vmem:[#allocation3 + $0xac] sm:$0xff]
      %v2257 = vld [vmem:[#allocation3 + $0xb4] sm:$0xff]
      %v2258 = vld [vmem:[#allocation3 + $0xc4] sm:$0xff]
      %v2259 = vld [vmem:[#allocation3 + $0xcc] sm:$0xff]
      %v2260 = vld [vmem:[#allocation3 + $0xdc] sm:$0xff]
      %v2261 = vld [vmem:[#allocation3 + $0xe4] sm:$0xff]
      %v2262 = vld [vmem:[#allocation3 + $0xf4] sm:$0xff]
      %v2263 = vld [vmem:[#allocation3 + $0xfc] sm:$0xff]
      %v2264 = vld [vmem:[#allocation3 + $0x10c] sm:$0xff]
      %v2265 = vld [vmem:[#allocation3 + $0x114] sm:$0xff]
      %v2266 = vld [vmem:[#allocation3 + $0x124] sm:$0xff]
      %v2267 = vld [vmem:[#allocation3 + $0x12c] sm:$0xff]
      %v2268 = vld [vmem:[#allocation3 + $0x13c] sm:$0xff]
      %v2269 = vld [vmem:[#allocation3 + $0x144] sm:$0xff]
      %v2270 = vld [vmem:[#allocation3 + $0x154] sm:$0xff]
      %v2271 = vld [vmem:[#allocation3 + $0x15c] sm:$0xff]
      %v2272 = vld [vmem:[#allocation3 + $0x16c] sm:$0xff]
      %v2273 = vld [vmem:[#allocation3 + $0x174] sm:$0xff]
      %v2274 = vmax.f32 %v2210, %v2242
      %v2275 = vmax.f32 %v2211, %v2243
      %v2276 = vmax.f32 %v2212, %v2244
      %v2277 = vmax.f32 %v2213, %v2245
      %v2278 = vmax.f32 %v2214, %v2246
      %v2279 = vmax.f32 %v2215, %v2247
      %v2280 = vmax.f32 %v2216, %v2248
      %v2281 = vmax.f32 %v2217, %v2249
      %v2282 = vmax.f32 %v2218, %v2250
      %v2283 = vmax.f32 %v2219, %v2251
      %v2284 = vmax.f32 %v2220, %v2252
      %v2285 = vmax.f32 %v2221, %v2253
      %v2286 = vmax.f32 %v2222, %v2254
      %v2287 = vmax.f32 %v2223, %v2255
      %v2288 = vmax.f32 %v2224, %v2256
      %v2289 = vmax.f32 %v2225, %v2257
      %v2290 = vmax.f32 %v2226, %v2258
      %v2291 = vmax.f32 %v2227, %v2259
      %v2292 = vmax.f32 %v2228, %v2260
      %v2293 = vmax.f32 %v2229, %v2261
      %v2294 = vmax.f32 %v2230, %v2262
      %v2295 = vmax.f32 %v2231, %v2263
      %v2296 = vmax.f32 %v2232, %v2264
      %v2297 = vmax.f32 %v2233, %v2265
      %v2298 = vmax.f32 %v2234, %v2266
      %v2299 = vmax.f32 %v2235, %v2267
      %v2300 = vmax.f32 %v2236, %v2268
      %v2301 = vmax.f32 %v2237, %v2269
      %v2302 = vmax.f32 %v2238, %v2270
      %v2303 = vmax.f32 %v2239, %v2271
      %v2304 = vmax.f32 %v2240, %v2272
      %v2305 = vmax.f32 %v2241, %v2273
      %2306 = vst.msk [vmem:[%s242] sm:$0xff] %vm243, %v2274
      %2307 = vst.msk [vmem:[%s242 + $0x8] sm:$0xff] %vm243, %v2275
      %2308 = vst.msk [vmem:[%s242 + $0x10] sm:$0xff] %vm243, %v2276
      %2309 = vst.msk [vmem:[%s242 + $0x18] sm:$0xff] %vm243, %v2277
      %2310 = vst.msk [vmem:[%s242 + $0x20] sm:$0xff] %vm243, %v2278
      %2311 = vst.msk [vmem:[%s242 + $0x28] sm:$0xff] %vm243, %v2279
      %2312 = vst.msk [vmem:[%s242 + $0x30] sm:$0xff] %vm243, %v2280
      %2313 = vst.msk [vmem:[%s242 + $0x38] sm:$0xff] %vm243, %v2281
      %2314 = vst.msk [vmem:[%s242 + $0x40] sm:$0xff] %vm243, %v2282
      %2315 = vst.msk [vmem:[%s242 + $0x48] sm:$0xff] %vm243, %v2283
      %2316 = vst.msk [vmem:[%s242 + $0x50] sm:$0xff] %vm243, %v2284
      %2317 = vst.msk [vmem:[%s242 + $0x58] sm:$0xff] %vm243, %v2285
      %2318 = vst.msk [vmem:[%s242 + $0x60] sm:$0xff] %vm243, %v2286
      %2319 = vst.msk [vmem:[%s242 + $0x68] sm:$0xff] %vm243, %v2287
      %2320 = vst.msk [vmem:[%s242 + $0x70] sm:$0xff] %vm243, %v2288
      %2321 = vst.msk [vmem:[%s242 + $0x78] sm:$0xff] %vm243, %v2289
      %2322 = vst.msk [vmem:[%s242 + $0x80] sm:$0xff] %vm243, %v2290
      %2323 = vst.msk [vmem:[%s242 + $0x88] sm:$0xff] %vm243, %v2291
      %2324 = vst.msk [vmem:[%s242 + $0x90] sm:$0xff] %vm243, %v2292
      %2325 = vst.msk [vmem:[%s242 + $0x98] sm:$0xff] %vm243, %v2293
      %2326 = vst.msk [vmem:[%s242 + $0xa0] sm:$0xff] %vm243, %v2294
      %2327 = vst.msk [vmem:[%s242 + $0xa8] sm:$0xff] %vm243, %v2295
      %2328 = vst.msk [vmem:[%s242 + $0xb0] sm:$0xff] %vm243, %v2296
      %2329 = vst.msk [vmem:[%s242 + $0xb8] sm:$0xff] %vm243, %v2297
      %2330 = vst.msk [vmem:[%s242 + $0xc0] sm:$0xff] %vm243, %v2298
      %2331 = vst.msk [vmem:[%s242 + $0xc8] sm:$0xff] %vm243, %v2299
      %2332 = vst.msk [vmem:[%s242 + $0xd0] sm:$0xff] %vm243, %v2300
      %2333 = vst.msk [vmem:[%s242 + $0xd8] sm:$0xff] %vm243, %v2301
      %2334 = vst.msk [vmem:[%s242 + $0xe0] sm:$0xff] %vm243, %v2302
      %2335 = vst.msk [vmem:[%s242 + $0xe8] sm:$0xff] %vm243, %v2303
      %2336 = vst.msk [vmem:[%s242 + $0xf0] sm:$0xff] %vm243, %v2304
      %2337 = vst.msk [vmem:[%s242 + $0xf8] sm:$0xff] %vm243, %v2305
      %p2338 = scmp.lt.s32.totalorder %s19, 1
      %s2339 = scalar_select %p2338, %s19, 1
      %p2340 = scmp.lt.s32.totalorder %s20, 0
      %s2341 = scalar_select %p2340, %s20, 0
      %s2342 = smul.addr %s2339, 32
      %s2343 = sadd.s32 %s2341, %s2342
      %s2344 = smul.addr %s2343, 8
      %s2345 = scalar_lea.vmem %s1, %s2344
      %p2346 = scmp.lt.s32.totalorder %s19, 1
      %s2347 = scalar_select %p2346, %s19, 1
      %p2348 = scmp.lt.s32.totalorder %s20, 0
      %s2349 = scalar_select %p2348, %s20, 0
      %s2350 = smul.addr %s2347, 32
      %s2351 = sadd.s32 %s2349, %s2350
      %s2352 = smul.addr %s2351, 8
      %s2353 = scalar_lea.vmem %s2, %s2352
      %p2354 = scmp.lt.s32.totalorder %s19, 1
      %s2355 = scalar_select %p2354, %s19, 1
      %p2356 = scmp.lt.s32.totalorder %s20, 0
      %s2357 = scalar_select %p2356, %s20, 0
      %s2358 = smul.addr %s2355, 32
      %s2359 = sadd.s32 %s2357, %s2358
      %s2360 = smul.addr %s2359, 8
      %s2361 = scalar_lea.vmem %s3, %s2360
      // Predicated region
      $region25: #{spp.1} parent=23 // pred_check
        %p2362 = pneg %p75
      $region26: #{spp.1} parent=23 // pred_check_branch
        %2364 = sbr.rel (%p2362) target = $region28
      $region27: #{spp.1} parent=23 // pred_region
        _
      $region28: #{spp.1} parent=23 // pred_fallthru
        _
      // Predicated region
      $region29: #{spp.1} parent=23 // pred_check
        %p2365 = pneg %p103
      $region30: #{spp.1} parent=23 // pred_check_branch
        %2367 = sbr.rel (%p2365) target = $region32
      $region31: #{spp.1} parent=23 // pred_region
        _
      $region32: #{spp.1} parent=23 // pred_fallthru
        _
      // Predicated region
      $region33: #{spp.1} parent=23 // pred_check
        %p2368 = pneg %p131
      $region34: #{spp.1} parent=23 // pred_check_branch
        %2370 = sbr.rel (%p2368) target = $region36
      $region35: #{spp.1} parent=23 // pred_region
        _
      $region36: #{spp.1} parent=23 // pred_fallthru
        _
    $region24: #{spp.1} parent=5 // pred_fallthru
      _
    %p2371 = scmp.le.s32.totalorder 2, %s10
    // Predicated region
    $region37: #{spp.1} parent=5 // pred_check
      %p2372 = pneg %p2371
    $region38: #{spp.1} parent=5 // pred_check_branch
      %2374 = sbr.rel (%p2372) target = $region40
    $region39: #{spp.1} parent=5 // pred_region
      %s2375 = ssub.s32 %s10, 2
      // Predicated region
      $region41: #{spp.1} parent=39 // pred_check
        %p2376 = pneg %p81
      $region42: #{spp.1} parent=39 // pred_check_branch
        %2378 = sbr.rel (%p2376) target = $region44
      $region43: #{spp.1} parent=39 // pred_region
        %p2379 = scmp.lt.s32.totalorder %s21, 1
        %s2380 = scalar_select %p2379, %s21, 1
        %p2381 = scmp.lt.s32.totalorder %s22, 0
        %s2382 = scalar_select %p2381, %s22, 0
        %s2383 = smul.addr %s2380, 32
        %s2384 = sadd.s32 %s2382, %s2383
        %s2385 = smul.addr %s2384, 8
        %s2386 = scalar_lea.vmem %s1, %s2385
      $region44: #{spp.1} parent=39 // pred_fallthru
        _
      // Predicated region
      $region45: #{spp.1} parent=39 // pred_check
        %p2387 = pneg %p109
      $region46: #{spp.1} parent=39 // pred_check_branch
        %2389 = sbr.rel (%p2387) target = $region48
      $region47: #{spp.1} parent=39 // pred_region
        %p2390 = scmp.lt.s32.totalorder %s21, 1
        %s2391 = scalar_select %p2390, %s21, 1
        %p2392 = scmp.lt.s32.totalorder %s22, 0
        %s2393 = scalar_select %p2392, %s22, 0
        %s2394 = smul.addr %s2391, 32
        %s2395 = sadd.s32 %s2393, %s2394
        %s2396 = smul.addr %s2395, 8
        %s2397 = scalar_lea.vmem %s2, %s2396
      $region48: #{spp.1} parent=39 // pred_fallthru
        _
      // Predicated region
      $region49: #{spp.1} parent=39 // pred_check
        %p2398 = pneg %p137
      $region50: #{spp.1} parent=39 // pred_check_branch
        %2400 = sbr.rel (%p2398) target = $region52
      $region51: #{spp.1} parent=39 // pred_region
        %p2401 = scmp.lt.s32.totalorder %s21, 1
        %s2402 = scalar_select %p2401, %s21, 1
        %p2403 = scmp.lt.s32.totalorder %s22, 0
        %s2404 = scalar_select %p2403, %s22, 0
        %s2405 = smul.addr %s2402, 32
        %s2406 = sadd.s32 %s2404, %s2405
        %s2407 = smul.addr %s2406, 8
        %s2408 = scalar_lea.vmem %s3, %s2407
      $region52: #{spp.1} parent=39 // pred_fallthru
        _
    $region40: #{spp.1} parent=5 // pred_fallthru
      _
  $region6: #{spp.1} parent=0 // loop_footer
    %s14 = sadd.s32 1, %s10
  $region7: #{spp.1} parent=0 // loop_footer_branch
    %9 = sbr.rel target = $region3
  $region8: #{spp.1} parent=0 // loop_exit
    _

</llo_original>
